<compile_context>
chip_gen: v6e
topology: v6e:2x2x1
jax: 0.10.0
libtpu: 0.0.40
codegen_flags: <defaults>
</compile_context>

<pallas_src>
import functools

import jax
import jax.numpy as jnp
from jax.experimental import pallas as pl
from jax.experimental.pallas import tpu as pltpu

LANE = 128
SUBLANE = 8
_VMEM_LIMIT = 48 * 1024 * 1024  # > v5e's 16 MiB scoped default, <= v7x physical


def _round_up(x, m):
    return ((x + m - 1) // m) * m


def _divisor_tile(dim, max_tile, quantum):
    """Largest tile <= max_tile that divides dim and is a multiple of quantum."""
    if dim <= max_tile:
        return dim
    t = (max_tile // quantum) * quantum
    while t >= quantum:
        if dim % t == 0:
            return t
        t -= quantum
    return dim


def _sigmoid(x):
    # sigmoid(x) == 0.5 * (tanh(0.5 x) + 1): one EUP (tanh) + cheap VPU ops.
    return 0.5 * jnp.tanh(0.5 * x) + 0.5


# ----------------------------------------------------------------------------
# Tiled dense kernel:  (M, K) @ (K, N) + b  ->  (M, N).  Used only for the
# final vocabulary projection (the LSTM input projections are fused).
# ----------------------------------------------------------------------------
def _dense_kernel(x_ref, w_ref, b_ref, o_ref):
    o_ref[...] = (jnp.dot(x_ref[...], w_ref[...],
                          preferred_element_type=jnp.float32)
                  + b_ref[...]).astype(o_ref.dtype)


def dense(x2d, w, b, out_dtype=jnp.float32, max_tile_m=512, max_tile_n=512):
    M, K = x2d.shape
    _, N = w.shape
    tm = _divisor_tile(M, max_tile_m, SUBLANE)
    tn = _divisor_tile(N, max_tile_n, LANE)
    grid = (M // tm, N // tn)
    return pl.pallas_call(
        _dense_kernel,
        out_shape=jax.ShapeDtypeStruct((M, N), out_dtype),
        grid_spec=pltpu.PrefetchScalarGridSpec(
            num_scalar_prefetch=0,
            grid=grid,
            in_specs=[
                pl.BlockSpec((tm, K), lambda i, j: (i, 0)),   # activations
                pl.BlockSpec((K, tn), lambda i, j: (0, j)),   # weights
                pl.BlockSpec((1, tn), lambda i, j: (0, j)),   # bias
            ],
            out_specs=pl.BlockSpec((tm, tn), lambda i, j: (i, j)),
        ),
        compiler_params=pltpu.CompilerParams(
            dimension_semantics=("parallel", "parallel"),
            vmem_limit_bytes=_VMEM_LIMIT),
    )(x2d, w, b.reshape(1, N))


# ----------------------------------------------------------------------------
# Fused LSTM layer kernel.  Grid = (batch_blocks, time_chunks).
# Per grid step:
#   1) gx = x_chunk @ W_ih^T + (b_ih + b_hh)  (one MXU-filling matmul, VMEM)
#   2) serial recurrence over `chunk` timesteps: h @ W_hh^T + gates.
# h carried in bf16, c in f32; h_last / c_last written on the final chunk.
# ----------------------------------------------------------------------------
def _lstm_fused_kernel(x_ref, wih_ref, b_ref, whh_ref, h0_ref, c0_ref,
                       out_ref, hlast_ref, clast_ref,
                       gx_sc, h_sc, c_sc, *,
                       hidden_pad, chunk, seq_len, needs_mask):
    s = pl.program_id(1)
    Hp = hidden_pad
    Bb = x_ref.shape[1]
    in_p = x_ref.shape[2]

    @pl.when(s == 0)
    def _():
        h_sc[...] = h0_ref[...].astype(h_sc.dtype)
        c_sc[...] = c0_ref[...]

    # Fused input projection for the whole chunk (bias folded in).
    x2 = x_ref[...].reshape(chunk * Bb, in_p)
    gx = (jnp.dot(x2, wih_ref[...], preferred_element_type=jnp.float32)
          + b_ref[...])
    gx_sc[...] = gx.reshape(chunk, Bb, 4 * Hp)

    whh = whh_ref[...]                        # (Hp, 4Hp) bf16, resident

    def body(t, carry):
        h_prev, c_prev = carry                # bf16 (Bb,Hp), f32 (Bb,Hp)
        gates = gx_sc[t] + jnp.dot(h_prev, whh,
                                   preferred_element_type=jnp.float32)
        i_g = _sigmoid(gates[:, 0 * Hp:1 * Hp])
        f_g = _sigmoid(gates[:, 1 * Hp:2 * Hp])
        g_g = jnp.tanh(gates[:, 2 * Hp:3 * Hp])
        o_g = _sigmoid(gates[:, 3 * Hp:4 * Hp])
        c_new = f_g * c_prev + i_g * g_g
        h_new = (o_g * jnp.tanh(c_new)).astype(jnp.bfloat16)
        if needs_mask:
            valid = (s * chunk + t) < seq_len
            c_new = jnp.where(valid, c_new, c_prev)
            h_new = jnp.where(valid, h_new, h_prev)
        out_ref[t] = h_new
        return h_new, c_new

    h_fin, c_fin = jax.lax.fori_loop(0, chunk, body,
                                     (h_sc[...], c_sc[...]),
                                     unroll=min(chunk, 8))
    h_sc[...] = h_fin
    c_sc[...] = c_fin

    @pl.when(s == pl.num_programs(1) - 1)
    def _():
        hlast_ref[...] = h_fin.astype(jnp.float32)
        clast_ref[...] = c_fin


def lstm_layer_fused(x_seq, wih_t, bias, whh_t, h0, c0, *, chunk, seq_len):
    """x_seq: (T_pad, Bp, in_p) bf16.  Returns (out_seq bf16, h_last, c_last)."""
    T_pad, Bp, in_p = x_seq.shape
    Hp = whh_t.shape[0]
    G4 = 4 * Hp
    n_chunks = T_pad // chunk

    # 2-way batch split -> both TensorCores on v7x (harmless elsewhere).
    nb = 2 if (Bp >= 16 and Bp % 16 == 0) else 1
    Bb = Bp // nb
    needs_mask = (T_pad != seq_len)

    kernel = functools.partial(_lstm_fused_kernel, hidden_pad=Hp, chunk=chunk,
                               seq_len=seq_len, needs_mask=needs_mask)

    grid_spec = pltpu.PrefetchScalarGridSpec(
        num_scalar_prefetch=0,
        grid=(nb, n_chunks),
        in_specs=[
            pl.BlockSpec((chunk, Bb, in_p), lambda b, s: (s, b, 0)),  # x chunk
            pl.BlockSpec((in_p, G4), lambda b, s: (0, 0)),            # W_ih^T
            pl.BlockSpec((1, G4), lambda b, s: (0, 0)),               # bias
            pl.BlockSpec((Hp, G4), lambda b, s: (0, 0)),              # W_hh^T
            pl.BlockSpec((Bb, Hp), lambda b, s: (b, 0)),              # h0
            pl.BlockSpec((Bb, Hp), lambda b, s: (b, 0)),              # c0
        ],
        out_specs=[
            pl.BlockSpec((chunk, Bb, Hp), lambda b, s: (s, b, 0)),    # out chunk
            pl.BlockSpec((Bb, Hp), lambda b, s: (b, 0)),              # h_last
            pl.BlockSpec((Bb, Hp), lambda b, s: (b, 0)),              # c_last
        ],
        scratch_shapes=[
            pltpu.VMEM((chunk, Bb, G4), jnp.float32),   # gx for the chunk
            pltpu.VMEM((Bb, Hp), jnp.bfloat16),         # h carry
            pltpu.VMEM((Bb, Hp), jnp.float32),          # c carry
        ],
    )

    return pl.pallas_call(
        kernel,
        out_shape=(jax.ShapeDtypeStruct((T_pad, Bp, Hp), jnp.bfloat16),
                   jax.ShapeDtypeStruct((Bp, Hp), jnp.float32),
                   jax.ShapeDtypeStruct((Bp, Hp), jnp.float32)),
        grid_spec=grid_spec,
        compiler_params=pltpu.CompilerParams(
            dimension_semantics=("parallel", "arbitrary"),
            vmem_limit_bytes=_VMEM_LIMIT),
    )(x_seq, wih_t, bias, whh_t, h0, c0)


# ----------------------------------------------------------------------------
# Parameter init (mirrors the PyTorch module), padded + pre-transposed.
# ----------------------------------------------------------------------------
def _pad_gates_2d(w, H, Hp, in_dim, in_p):
    """(4H, in) -> (4Hp, in_p): per-gate zero padding, gate order [i,f,g,o]."""
    blocks = []
    for g in range(4):
        blk = w[g * H:(g + 1) * H]
        blocks.append(jnp.pad(blk, ((0, Hp - H), (0, in_p - in_dim))))
    return jnp.concatenate(blocks, axis=0)


def _pad_gates_1d(b, H, Hp):
    blocks = [jnp.pad(b[g * H:(g + 1) * H], (0, Hp - H)) for g in range(4)]
    return jnp.concatenate(blocks, axis=0)


def init_params(key, vocab_size, embedding_dim, hidden_dim, num_layers):
    Ep = _round_up(embedding_dim, LANE)
    Hp = _round_up(hidden_dim, LANE)
    Vp = _round_up(vocab_size, LANE)

    keys = jax.random.split(key, 2 + 4 * num_layers + 2)
    k_iter = iter(keys)

    emb = jax.random.normal(next(k_iter), (vocab_size, embedding_dim),
                            jnp.float32)
    emb_p = jnp.pad(emb, ((0, 0), (0, Ep - embedding_dim))).astype(jnp.bfloat16)

    bound = hidden_dim ** -0.5
    layers = []
    in_dim, in_p = embedding_dim, Ep
    for _ in range(num_layers):
        w_ih = jax.random.uniform(next(k_iter), (4 * hidden_dim, in_dim),
                                  jnp.float32, -bound, bound)
        w_hh = jax.random.uniform(next(k_iter), (4 * hidden_dim, hidden_dim),
                                  jnp.float32, -bound, bound)
        b_ih = jax.random.uniform(next(k_iter), (4 * hidden_dim,),
                                  jnp.float32, -bound, bound)
        b_hh = jax.random.uniform(next(k_iter), (4 * hidden_dim,),
                                  jnp.float32, -bound, bound)
        wih_p = _pad_gates_2d(w_ih, hidden_dim, Hp, in_dim, in_p)    # (4Hp, in_p)
        whh_p = _pad_gates_2d(w_hh, hidden_dim, Hp, hidden_dim, Hp)  # (4Hp, Hp)
        bias_p = _pad_gates_1d(b_ih + b_hh, hidden_dim, Hp)          # (4Hp,)
        layers.append({
            "wih_t": wih_p.T.astype(jnp.bfloat16),        # (in_p, 4Hp) bf16
            "whh_t": whh_p.T.astype(jnp.bfloat16),        # (Hp, 4Hp) bf16
            "bias": bias_p.reshape(1, 4 * Hp),            # (1, 4Hp) f32
        })
        in_dim, in_p = hidden_dim, Hp

    fb = hidden_dim ** -0.5
    fc_w = jax.random.uniform(next(k_iter), (vocab_size, hidden_dim),
                              jnp.float32, -fb, fb)
    fc_b = jax.random.uniform(next(k_iter), (vocab_size,),
                              jnp.float32, -fb, fb)
    fc_w_p = jnp.pad(fc_w, ((0, Vp - vocab_size), (0, Hp - hidden_dim)))

    return {
        "emb": emb_p,                                     # (V, Ep) bf16
        "layers": layers,
        "fc_w_t": fc_w_p.T.astype(jnp.bfloat16),          # (Hp, Vp) bf16
        "fc_b": jnp.pad(fc_b, (0, Vp - vocab_size)),      # (Vp,) f32
        "dims": dict(V=vocab_size, E=embedding_dim, H=hidden_dim,
                     L=num_layers, Ep=Ep, Hp=Hp, Vp=Vp),
    }


# ----------------------------------------------------------------------------
# Forward pass: matches MusicRNN.forward(x, hidden=None)
# ----------------------------------------------------------------------------
def music_rnn_forward(params, x_tokens, hidden=None, max_chunk=32):
    d = params["dims"]
    V, H, L = d["V"], d["H"], d["L"]
    Hp, Vp = d["Hp"], d["Vp"]
    B, T = x_tokens.shape
    Bp = max(SUBLANE, _round_up(B, SUBLANE))
    chunk = min(T, max_chunk)
    T_pad = _round_up(T, chunk)

    # Time-major embedding gather (plain-JAX glue).  Padded batch rows /
    # timesteps use token 0; they are masked in-kernel and sliced away.
    tok_tb = jnp.pad(jnp.transpose(x_tokens), ((0, T_pad - T), (0, Bp - B)))
    x_seq = params["emb"][tok_tb]                          # (T_pad, Bp, Ep) bf16

    if hidden is None:
        h0 = jnp.zeros((L, Bp, Hp), jnp.float32)
        c0 = jnp.zeros((L, Bp, Hp), jnp.float32)
    else:
        h_in, c_in = hidden                                # (L, B, H)
        padspec = ((0, 0), (0, Bp - B), (0, Hp - H))
        h0 = jnp.pad(h_in.astype(jnp.float32), padspec)
        c0 = jnp.pad(c_in.astype(jnp.float32), padspec)

    h_lasts, c_lasts = [], []
    for l, lp in enumerate(params["layers"]):
        x_seq, h_l, c_l = lstm_layer_fused(
            x_seq, lp["wih_t"], lp["bias"], lp["whh_t"], h0[l], c0[l],
            chunk=chunk, seq_len=T)
        h_lasts.append(h_l)
        c_lasts.append(c_l)

    # Output projection, lane-dense (Vp multiple of 128), time-major.
    logits2d = dense(x_seq.reshape(T_pad * Bp, Hp), params["fc_w_t"],
                     params["fc_b"], out_dtype=jnp.float32)  # (T_pad*Bp, Vp)
    logits = logits2d.reshape(T_pad, Bp, Vp)[:T, :B, :V]
    logits = jnp.transpose(logits, (1, 0, 2))                # (B, T, V)

    h_n = jnp.stack(h_lasts)[:, :B, :H]                      # (L, B, H)
    c_n = jnp.stack(c_lasts)[:, :B, :H]
    return logits, (h_n, c_n)


if __name__ == "__main__":
    vocab_size, embedding_dim, hidden_dim, num_layers = 32, 16, 32, 2
    batch, seq = 2, 8

    key = jax.random.PRNGKey(0)
    k_params, k_tokens = jax.random.split(key)

    params = init_params(k_params, vocab_size, embedding_dim,
                         hidden_dim, num_layers)
    x_tokens = jax.random.randint(k_tokens, (batch, seq), 0, vocab_size,
                                  dtype=jnp.int32)

    fwd = jax.jit(functools.partial(music_rnn_forward, params))
    logits, (h_n, c_n) = fwd(x_tokens)
    jax.block_until_ready((logits, h_n, c_n))

    assert logits.shape == (batch, seq, vocab_size)
    assert h_n.shape == (num_layers, batch, hidden_dim)
    assert c_n.shape == (num_layers, batch, hidden_dim)
    assert bool(jnp.all(jnp.isfinite(logits)))
    assert bool(jnp.all(jnp.isfinite(h_n))) and bool(jnp.all(jnp.isfinite(c_n)))
    print("KERNEL_OK")
</pallas_src>

<mosaic_0001>
module attributes {stable_mosaic.version = 11 : i64} {
  func.func @_dense_kernel(%arg0: i32, %arg1: i32, %arg2: memref<64x128xbf16, #tpu.memory_space<vmem>>, %arg3: memref<128x128xbf16, #tpu.memory_space<vmem>>, %arg4: memref<1x128xf32, #tpu.memory_space<vmem>>, %arg5: memref<64x128xf32, #tpu.memory_space<vmem>>) attributes {dimension_semantics = [#tpu.dimension_semantics<parallel>, #tpu.dimension_semantics<parallel>], iteration_bounds = array<i64: 1, 1>, scalar_prefetch = 0 : i64, scratch_operands = 0 : i64, tpu.core_type = #tpu.core_type<tc>, window_params = [{transform_indices = @transform_0, window_bounds = array<i64: 64, 128>}, {transform_indices = @transform_1, window_bounds = array<i64: 128, 128>}, {transform_indices = @transform_2, window_bounds = array<i64: 1, 128>}, {transform_indices = @transform_3, window_bounds = array<i64: 64, 128>}]} {
    %c0 = arith.constant 0 : index
    %c0_0 = arith.constant 0 : index
    %0 = vector.load %arg2[%c0, %c0_0] : memref<64x128xbf16, #tpu.memory_space<vmem>>, vector<64x128xbf16>
    %c0_1 = arith.constant 0 : index
    %c0_2 = arith.constant 0 : index
    %1 = vector.load %arg3[%c0_1, %c0_2] : memref<128x128xbf16, #tpu.memory_space<vmem>>, vector<128x128xbf16>
    %cst = arith.constant dense<0.000000e+00> : vector<64x128xf32>
    %2 = tpu.matmul %0, %1, %cst {dimension_numbers = #tpu.dot_dimension_numbers<[1], [0], [0], [1], [0, 0, 1, 1], [], []>} : vector<64x128xbf16>, vector<128x128xbf16>, vector<64x128xf32> -> vector<64x128xf32>
    %c0_3 = arith.constant 0 : index
    %c0_4 = arith.constant 0 : index
    %3 = vector.load %arg4[%c0_3, %c0_4] : memref<1x128xf32, #tpu.memory_space<vmem>>, vector<1x128xf32>
    %4 = vector.broadcast %3 : vector<1x128xf32> to vector<64x128xf32>
    %5 = arith.addf %2, %4 : vector<64x128xf32>
    %c0_5 = arith.constant 0 : index
    %c0_6 = arith.constant 0 : index
    %6 = vector.load %arg5[%c0_5, %c0_6] : memref<64x128xf32, #tpu.memory_space<vmem>>, vector<64x128xf32>
    tpu.vector_store %arg5[%c0_5, %c0_6], %5 {strides = array<i32>} : memref<64x128xf32, #tpu.memory_space<vmem>>, vector<64x128xf32>,
    return
  }
  func.func @transform_0(%arg0: i32, %arg1: i32) -> (i32, i32) {
    %c0_i32 = arith.constant 0 : i32
    %c0_i32_0 = arith.constant 0 : i32
    return %arg0, %c0_i32 : i32, i32
  }
  func.func @transform_1(%arg0: i32, %arg1: i32) -> (i32, i32) {
    %c0_i32 = arith.constant 0 : i32
    %c0_i32_0 = arith.constant 0 : i32
    return %c0_i32, %arg1 : i32, i32
  }
  func.func @transform_2(%arg0: i32, %arg1: i32) -> (i32, i32) {
    %c0_i32 = arith.constant 0 : i32
    %c0_i32_0 = arith.constant 0 : i32
    return %c0_i32, %arg1 : i32, i32
  }
  func.func @transform_3(%arg0: i32, %arg1: i32) -> (i32, i32) {
    %c0_i32 = arith.constant 0 : i32
    return %arg0, %arg1 : i32, i32
  }
}

module attributes {stable_mosaic.version = 11 : i64} {
  func.func @_lstm_fused_kernel(%arg0: i32, %arg1: i32, %arg2: memref<8x8x128xbf16, #tpu.memory_space<vmem>>, %arg3: memref<128x512xbf16, #tpu.memory_space<vmem>>, %arg4: memref<1x512xf32, #tpu.memory_space<vmem>>, %arg5: memref<128x512xbf16, #tpu.memory_space<vmem>>, %arg6: memref<8x128xf32, #tpu.memory_space<vmem>>, %arg7: memref<8x128xf32, #tpu.memory_space<vmem>>, %arg8: memref<8x8x128xbf16, #tpu.memory_space<vmem>>, %arg9: memref<8x128xf32, #tpu.memory_space<vmem>>, %arg10: memref<8x128xf32, #tpu.memory_space<vmem>>, %arg11: memref<8x8x512xf32, #tpu.memory_space<vmem>>, %arg12: memref<8x128xbf16, #tpu.memory_space<vmem>>, %arg13: memref<8x128xf32, #tpu.memory_space<vmem>>) attributes {dimension_semantics = [#tpu.dimension_semantics<parallel>, #tpu.dimension_semantics<arbitrary>], iteration_bounds = array<i64: 1, 1>, scalar_prefetch = 0 : i64, scratch_operands = 3 : i64, tpu.core_type = #tpu.core_type<tc>, window_params = [{transform_indices = @transform_0, window_bounds = array<i64: 8, 8, 128>}, {pipeline_mode = #tpu.pipeline_mode<synchronous>, transform_indices = @transform_1, window_bounds = array<i64: 128, 512>}, {pipeline_mode = #tpu.pipeline_mode<synchronous>, transform_indices = @transform_2, window_bounds = array<i64: 1, 512>}, {pipeline_mode = #tpu.pipeline_mode<synchronous>, transform_indices = @transform_3, window_bounds = array<i64: 128, 512>}, {transform_indices = @transform_4, window_bounds = array<i64: 8, 128>}, {transform_indices = @transform_5, window_bounds = array<i64: 8, 128>}, {transform_indices = @transform_6, window_bounds = array<i64: 8, 8, 128>}, {transform_indices = @transform_7, window_bounds = array<i64: 8, 128>}, {transform_indices = @transform_8, window_bounds = array<i64: 8, 128>}]} {
    %c0_i32 = arith.constant 0 : i32
    %0 = arith.cmpi eq, %arg1, %c0_i32 : i32
    %1 = arith.extui %0 : i1 to i32
    %c0_i32_0 = arith.constant 0 : i32
    %2 = arith.cmpi ne, %1, %c0_i32_0 : i32
    scf.if %2 {
      %c0_135 = arith.constant 0 : index
      %c0_136 = arith.constant 0 : index
      %348 = vector.load %arg6[%c0_135, %c0_136] : memref<8x128xf32, #tpu.memory_space<vmem>>, vector<8x128xf32>
      %349 = arith.truncf %348 : vector<8x128xf32> to vector<8x128xbf16>
      %c0_137 = arith.constant 0 : index
      %c0_138 = arith.constant 0 : index
      %350 = vector.load %arg12[%c0_137, %c0_138] : memref<8x128xbf16, #tpu.memory_space<vmem>>, vector<8x128xbf16>
      tpu.vector_store %arg12[%c0_137, %c0_138], %349 {strides = array<i32>} : memref<8x128xbf16, #tpu.memory_space<vmem>>, vector<8x128xbf16>,
      %c0_139 = arith.constant 0 : index
      %c0_140 = arith.constant 0 : index
      %351 = vector.load %arg7[%c0_139, %c0_140] : memref<8x128xf32, #tpu.memory_space<vmem>>, vector<8x128xf32>
      %c0_141 = arith.constant 0 : index
      %c0_142 = arith.constant 0 : index
      %352 = vector.load %arg13[%c0_141, %c0_142] : memref<8x128xf32, #tpu.memory_space<vmem>>, vector<8x128xf32>
      tpu.vector_store %arg13[%c0_141, %c0_142], %351 {strides = array<i32>} : memref<8x128xf32, #tpu.memory_space<vmem>>, vector<8x128xf32>,
    } else {
    }
    %c0 = arith.constant 0 : index
    %c0_1 = arith.constant 0 : index
    %c0_2 = arith.constant 0 : index
    %3 = vector.load %arg2[%c0, %c0_1, %c0_2] : memref<8x8x128xbf16, #tpu.memory_space<vmem>>, vector<8x8x128xbf16>
    %4 = vector.shape_cast %3 : vector<8x8x128xbf16> to vector<64x128xbf16>
    %c0_3 = arith.constant 0 : index
    %c0_4 = arith.constant 0 : index
    %5 = vector.load %arg3[%c0_3, %c0_4] : memref<128x512xbf16, #tpu.memory_space<vmem>>, vector<128x512xbf16>
    %cst = arith.constant dense<0.000000e+00> : vector<64x512xf32>
    %6 = tpu.matmul %4, %5, %cst {dimension_numbers = #tpu.dot_dimension_numbers<[1], [0], [0], [1], [0, 0, 1, 1], [], []>} : vector<64x128xbf16>, vector<128x512xbf16>, vector<64x512xf32> -> vector<64x512xf32>
    %c0_5 = arith.constant 0 : index
    %c0_6 = arith.constant 0 : index
    %7 = vector.load %arg4[%c0_5, %c0_6] : memref<1x512xf32, #tpu.memory_space<vmem>>, vector<1x512xf32>
    %8 = vector.broadcast %7 : vector<1x512xf32> to vector<64x512xf32>
    %9 = arith.addf %6, %8 : vector<64x512xf32>
    %10 = vector.shape_cast %9 : vector<64x512xf32> to vector<8x8x512xf32>
    %c0_7 = arith.constant 0 : index
    %c0_8 = arith.constant 0 : index
    %c0_9 = arith.constant 0 : index
    %11 = vector.load %arg11[%c0_7, %c0_8, %c0_9] : memref<8x8x512xf32, #tpu.memory_space<vmem>>, vector<8x8x512xf32>
    tpu.vector_store %arg11[%c0_7, %c0_8, %c0_9], %10 {strides = array<i32>} : memref<8x8x512xf32, #tpu.memory_space<vmem>>, vector<8x8x512xf32>,
    %c0_10 = arith.constant 0 : index
    %c0_11 = arith.constant 0 : index
    %12 = vector.load %arg5[%c0_10, %c0_11] : memref<128x512xbf16, #tpu.memory_space<vmem>>, vector<128x512xbf16>
    %c0_12 = arith.constant 0 : index
    %c0_13 = arith.constant 0 : index
    %13 = vector.load %arg12[%c0_12, %c0_13] : memref<8x128xbf16, #tpu.memory_space<vmem>>, vector<8x128xbf16>
    %c0_14 = arith.constant 0 : index
    %c0_15 = arith.constant 0 : index
    %14 = vector.load %arg13[%c0_14, %c0_15] : memref<8x128xf32, #tpu.memory_space<vmem>>, vector<8x128xf32>
    %c0_i32_16 = arith.constant 0 : i32
    %15 = arith.index_cast %c0_i32_16 : i32 to index
    %c0_17 = arith.constant 0 : index
    %c0_18 = arith.constant 0 : index
    %16 = vector.load %arg11[%15, %c0_17, %c0_18] : memref<8x8x512xf32, #tpu.memory_space<vmem>>, vector<1x8x512xf32>
    %17 = vector.shape_cast %16 : vector<1x8x512xf32> to vector<8x512xf32>
    %cst_19 = arith.constant dense<0.000000e+00> : vector<8x512xf32>
    %18 = tpu.matmul %13, %12, %cst_19 {dimension_numbers = #tpu.dot_dimension_numbers<[1], [0], [0], [1], [0, 0, 1, 1], [], []>} : vector<8x128xbf16>, vector<128x512xbf16>, vector<8x512xf32> -> vector<8x512xf32>
    %19 = arith.addf %17, %18 : vector<8x512xf32>
    %20 = vector.extract_strided_slice %19 {offsets = [0, 0], sizes = [8, 128], strides = [1, 1]} : vector<8x512xf32> to vector<8x128xf32>
    %cst_20 = arith.constant 5.000000e-01 : f32
    %21 = vector.broadcast %cst_20 : f32 to vector<8x128xf32>
    %22 = arith.mulf %21, %20 : vector<8x128xf32>
    %23 = math.tanh %22 : vector<8x128xf32>
    %cst_21 = arith.constant 5.000000e-01 : f32
    %24 = vector.broadcast %cst_21 : f32 to vector<8x128xf32>
    %25 = arith.mulf %24, %23 : vector<8x128xf32>
    %cst_22 = arith.constant 5.000000e-01 : f32
    %26 = vector.broadcast %cst_22 : f32 to vector<8x128xf32>
    %27 = arith.addf %25, %26 : vector<8x128xf32>
    %28 = vector.extract_strided_slice %19 {offsets = [0, 128], sizes = [8, 128], strides = [1, 1]} : vector<8x512xf32> to vector<8x128xf32>
    %cst_23 = arith.constant 5.000000e-01 : f32
    %29 = vector.broadcast %cst_23 : f32 to vector<8x128xf32>
    %30 = arith.mulf %29, %28 : vector<8x128xf32>
    %31 = math.tanh %30 : vector<8x128xf32>
    %cst_24 = arith.constant 5.000000e-01 : f32
    %32 = vector.broadcast %cst_24 : f32 to vector<8x128xf32>
    %33 = arith.mulf %32, %31 : vector<8x128xf32>
    %cst_25 = arith.constant 5.000000e-01 : f32
    %34 = vector.broadcast %cst_25 : f32 to vector<8x128xf32>
    %35 = arith.addf %33, %34 : vector<8x128xf32>
    %36 = vector.extract_strided_slice %19 {offsets = [0, 256], sizes = [8, 128], strides = [1, 1]} : vector<8x512xf32> to vector<8x128xf32>
    %37 = math.tanh %36 : vector<8x128xf32>
    %38 = vector.extract_strided_slice %19 {offsets = [0, 384], sizes = [8, 128], strides = [1, 1]} : vector<8x512xf32> to vector<8x128xf32>
    %cst_26 = arith.constant 5.000000e-01 : f32
    %39 = vector.broadcast %cst_26 : f32 to vector<8x128xf32>
    %40 = arith.mulf %39, %38 : vector<8x128xf32>
    %41 = math.tanh %40 : vector<8x128xf32>
    %cst_27 = arith.constant 5.000000e-01 : f32
    %42 = vector.broadcast %cst_27 : f32 to vector<8x128xf32>
    %43 = arith.mulf %42, %41 : vector<8x128xf32>
    %cst_28 = arith.constant 5.000000e-01 : f32
    %44 = vector.broadcast %cst_28 : f32 to vector<8x128xf32>
    %45 = arith.addf %43, %44 : vector<8x128xf32>
    %46 = arith.mulf %35, %14 : vector<8x128xf32>
    %47 = arith.mulf %27, %37 : vector<8x128xf32>
    %48 = arith.addf %46, %47 : vector<8x128xf32>
    %49 = math.tanh %48 : vector<8x128xf32>
    %50 = arith.mulf %45, %49 : vector<8x128xf32>
    %51 = arith.truncf %50 : vector<8x128xf32> to vector<8x128xbf16>
    %52 = arith.index_cast %c0_i32_16 : i32 to index
    %c0_29 = arith.constant 0 : index
    %c0_30 = arith.constant 0 : index
    %53 = vector.load %arg8[%52, %c0_29, %c0_30] : memref<8x8x128xbf16, #tpu.memory_space<vmem>>, vector<1x8x128xbf16>
    %54 = vector.shape_cast %53 : vector<1x8x128xbf16> to vector<8x128xbf16>
    %55 = vector.shape_cast %51 : vector<8x128xbf16> to vector<1x8x128xbf16>
    tpu.vector_store %arg8[%52, %c0_29, %c0_30], %55 {strides = array<i32>} : memref<8x8x128xbf16, #tpu.memory_space<vmem>>, vector<1x8x128xbf16>,
    %c1_i32 = arith.constant 1 : i32
    %56 = arith.index_cast %c1_i32 : i32 to index
    %c0_31 = arith.constant 0 : index
    %c0_32 = arith.constant 0 : index
    %57 = vector.load %arg11[%56, %c0_31, %c0_32] : memref<8x8x512xf32, #tpu.memory_space<vmem>>, vector<1x8x512xf32>
    %58 = vector.shape_cast %57 : vector<1x8x512xf32> to vector<8x512xf32>
    %cst_33 = arith.constant dense<0.000000e+00> : vector<8x512xf32>
    %59 = tpu.matmul %51, %12, %cst_33 {dimension_numbers = #tpu.dot_dimension_numbers<[1], [0], [0], [1], [0, 0, 1, 1], [], []>} : vector<8x128xbf16>, vector<128x512xbf16>, vector<8x512xf32> -> vector<8x512xf32>
    %60 = arith.addf %58, %59 : vector<8x512xf32>
    %61 = vector.extract_strided_slice %60 {offsets = [0, 0], sizes = [8, 128], strides = [1, 1]} : vector<8x512xf32> to vector<8x128xf32>
    %cst_34 = arith.constant 5.000000e-01 : f32
    %62 = vector.broadcast %cst_34 : f32 to vector<8x128xf32>
    %63 = arith.mulf %62, %61 : vector<8x128xf32>
    %64 = math.tanh %63 : vector<8x128xf32>
    %cst_35 = arith.constant 5.000000e-01 : f32
    %65 = vector.broadcast %cst_35 : f32 to vector<8x128xf32>
    %66 = arith.mulf %65, %64 : vector<8x128xf32>
    %cst_36 = arith.constant 5.000000e-01 : f32
    %67 = vector.broadcast %cst_36 : f32 to vector<8x128xf32>
    %68 = arith.addf %66, %67 : vector<8x128xf32>
    %69 = vector.extract_strided_slice %60 {offsets = [0, 128], sizes = [8, 128], strides = [1, 1]} : vector<8x512xf32> to vector<8x128xf32>
    %cst_37 = arith.constant 5.000000e-01 : f32
    %70 = vector.broadcast %cst_37 : f32 to vector<8x128xf32>
    %71 = arith.mulf %70, %69 : vector<8x128xf32>
    %72 = math.tanh %71 : vector<8x128xf32>
    %cst_38 = arith.constant 5.000000e-01 : f32
    %73 = vector.broadcast %cst_38 : f32 to vector<8x128xf32>
    %74 = arith.mulf %73, %72 : vector<8x128xf32>
    %cst_39 = arith.constant 5.000000e-01 : f32
    %75 = vector.broadcast %cst_39 : f32 to vector<8x128xf32>
    %76 = arith.addf %74, %75 : vector<8x128xf32>
    %77 = vector.extract_strided_slice %60 {offsets = [0, 256], sizes = [8, 128], strides = [1, 1]} : vector<8x512xf32> to vector<8x128xf32>
    %78 = math.tanh %77 : vector<8x128xf32>
    %79 = vector.extract_strided_slice %60 {offsets = [0, 384], sizes = [8, 128], strides = [1, 1]} : vector<8x512xf32> to vector<8x128xf32>
    %cst_40 = arith.constant 5.000000e-01 : f32
    %80 = vector.broadcast %cst_40 : f32 to vector<8x128xf32>
    %81 = arith.mulf %80, %79 : vector<8x128xf32>
    %82 = math.tanh %81 : vector<8x128xf32>
    %cst_41 = arith.constant 5.000000e-01 : f32
    %83 = vector.broadcast %cst_41 : f32 to vector<8x128xf32>
    %84 = arith.mulf %83, %82 : vector<8x128xf32>
    %cst_42 = arith.constant 5.000000e-01 : f32
    %85 = vector.broadcast %cst_42 : f32 to vector<8x128xf32>
    %86 = arith.addf %84, %85 : vector<8x128xf32>
    %87 = arith.mulf %76, %48 : vector<8x128xf32>
    %88 = arith.mulf %68, %78 : vector<8x128xf32>
    %89 = arith.addf %87, %88 : vector<8x128xf32>
    %90 = math.tanh %89 : vector<8x128xf32>
    %91 = arith.mulf %86, %90 : vector<8x128xf32>
    %92 = arith.truncf %91 : vector<8x128xf32> to vector<8x128xbf16>
    %93 = arith.index_cast %c1_i32 : i32 to index
    %c0_43 = arith.constant 0 : index
    %c0_44 = arith.constant 0 : index
    %94 = vector.load %arg8[%93, %c0_43, %c0_44] : memref<8x8x128xbf16, #tpu.memory_space<vmem>>, vector<1x8x128xbf16>
    %95 = vector.shape_cast %94 : vector<1x8x128xbf16> to vector<8x128xbf16>
    %96 = vector.shape_cast %92 : vector<8x128xbf16> to vector<1x8x128xbf16>
    tpu.vector_store %arg8[%93, %c0_43, %c0_44], %96 {strides = array<i32>} : memref<8x8x128xbf16, #tpu.memory_space<vmem>>, vector<1x8x128xbf16>,
    %c2_i32 = arith.constant 2 : i32
    %97 = arith.index_cast %c2_i32 : i32 to index
    %c0_45 = arith.constant 0 : index
    %c0_46 = arith.constant 0 : index
    %98 = vector.load %arg11[%97, %c0_45, %c0_46] : memref<8x8x512xf32, #tpu.memory_space<vmem>>, vector<1x8x512xf32>
    %99 = vector.shape_cast %98 : vector<1x8x512xf32> to vector<8x512xf32>
    %cst_47 = arith.constant dense<0.000000e+00> : vector<8x512xf32>
    %100 = tpu.matmul %92, %12, %cst_47 {dimension_numbers = #tpu.dot_dimension_numbers<[1], [0], [0], [1], [0, 0, 1, 1], [], []>} : vector<8x128xbf16>, vector<128x512xbf16>, vector<8x512xf32> -> vector<8x512xf32>
    %101 = arith.addf %99, %100 : vector<8x512xf32>
    %102 = vector.extract_strided_slice %101 {offsets = [0, 0], sizes = [8, 128], strides = [1, 1]} : vector<8x512xf32> to vector<8x128xf32>
    %cst_48 = arith.constant 5.000000e-01 : f32
    %103 = vector.broadcast %cst_48 : f32 to vector<8x128xf32>
    %104 = arith.mulf %103, %102 : vector<8x128xf32>
    %105 = math.tanh %104 : vector<8x128xf32>
    %cst_49 = arith.constant 5.000000e-01 : f32
    %106 = vector.broadcast %cst_49 : f32 to vector<8x128xf32>
    %107 = arith.mulf %106, %105 : vector<8x128xf32>
    %cst_50 = arith.constant 5.000000e-01 : f32
    %108 = vector.broadcast %cst_50 : f32 to vector<8x128xf32>
    %109 = arith.addf %107, %108 : vector<8x128xf32>
    %110 = vector.extract_strided_slice %101 {offsets = [0, 128], sizes = [8, 128], strides = [1, 1]} : vector<8x512xf32> to vector<8x128xf32>
    %cst_51 = arith.constant 5.000000e-01 : f32
    %111 = vector.broadcast %cst_51 : f32 to vector<8x128xf32>
    %112 = arith.mulf %111, %110 : vector<8x128xf32>
    %113 = math.tanh %112 : vector<8x128xf32>
    %cst_52 = arith.constant 5.000000e-01 : f32
    %114 = vector.broadcast %cst_52 : f32 to vector<8x128xf32>
    %115 = arith.mulf %114, %113 : vector<8x128xf32>
    %cst_53 = arith.constant 5.000000e-01 : f32
    %116 = vector.broadcast %cst_53 : f32 to vector<8x128xf32>
    %117 = arith.addf %115, %116 : vector<8x128xf32>
    %118 = vector.extract_strided_slice %101 {offsets = [0, 256], sizes = [8, 128], strides = [1, 1]} : vector<8x512xf32> to vector<8x128xf32>
    %119 = math.tanh %118 : vector<8x128xf32>
    %120 = vector.extract_strided_slice %101 {offsets = [0, 384], sizes = [8, 128], strides = [1, 1]} : vector<8x512xf32> to vector<8x128xf32>
    %cst_54 = arith.constant 5.000000e-01 : f32
    %121 = vector.broadcast %cst_54 : f32 to vector<8x128xf32>
    %122 = arith.mulf %121, %120 : vector<8x128xf32>
    %123 = math.tanh %122 : vector<8x128xf32>
    %cst_55 = arith.constant 5.000000e-01 : f32
    %124 = vector.broadcast %cst_55 : f32 to vector<8x128xf32>
    %125 = arith.mulf %124, %123 : vector<8x128xf32>
    %cst_56 = arith.constant 5.000000e-01 : f32
    %126 = vector.broadcast %cst_56 : f32 to vector<8x128xf32>
    %127 = arith.addf %125, %126 : vector<8x128xf32>
    %128 = arith.mulf %117, %89 : vector<8x128xf32>
    %129 = arith.mulf %109, %119 : vector<8x128xf32>
    %130 = arith.addf %128, %129 : vector<8x128xf32>
    %131 = math.tanh %130 : vector<8x128xf32>
    %132 = arith.mulf %127, %131 : vector<8x128xf32>
    %133 = arith.truncf %132 : vector<8x128xf32> to vector<8x128xbf16>
    %134 = arith.index_cast %c2_i32 : i32 to index
    %c0_57 = arith.constant 0 : index
    %c0_58 = arith.constant 0 : index
    %135 = vector.load %arg8[%134, %c0_57, %c0_58] : memref<8x8x128xbf16, #tpu.memory_space<vmem>>, vector<1x8x128xbf16>
    %136 = vector.shape_cast %135 : vector<1x8x128xbf16> to vector<8x128xbf16>
    %137 = vector.shape_cast %133 : vector<8x128xbf16> to vector<1x8x128xbf16>
    tpu.vector_store %arg8[%134, %c0_57, %c0_58], %137 {strides = array<i32>} : memref<8x8x128xbf16, #tpu.memory_space<vmem>>, vector<1x8x128xbf16>,
    %c3_i32 = arith.constant 3 : i32
    %138 = arith.index_cast %c3_i32 : i32 to index
    %c0_59 = arith.constant 0 : index
    %c0_60 = arith.constant 0 : index
    %139 = vector.load %arg11[%138, %c0_59, %c0_60] : memref<8x8x512xf32, #tpu.memory_space<vmem>>, vector<1x8x512xf32>
    %140 = vector.shape_cast %139 : vector<1x8x512xf32> to vector<8x512xf32>
    %cst_61 = arith.constant dense<0.000000e+00> : vector<8x512xf32>
    %141 = tpu.matmul %133, %12, %cst_61 {dimension_numbers = #tpu.dot_dimension_numbers<[1], [0], [0], [1], [0, 0, 1, 1], [], []>} : vector<8x128xbf16>, vector<128x512xbf16>, vector<8x512xf32> -> vector<8x512xf32>
    %142 = arith.addf %140, %141 : vector<8x512xf32>
    %143 = vector.extract_strided_slice %142 {offsets = [0, 0], sizes = [8, 128], strides = [1, 1]} : vector<8x512xf32> to vector<8x128xf32>
    %cst_62 = arith.constant 5.000000e-01 : f32
    %144 = vector.broadcast %cst_62 : f32 to vector<8x128xf32>
    %145 = arith.mulf %144, %143 : vector<8x128xf32>
    %146 = math.tanh %145 : vector<8x128xf32>
    %cst_63 = arith.constant 5.000000e-01 : f32
    %147 = vector.broadcast %cst_63 : f32 to vector<8x128xf32>
    %148 = arith.mulf %147, %146 : vector<8x128xf32>
    %cst_64 = arith.constant 5.000000e-01 : f32
    %149 = vector.broadcast %cst_64 : f32 to vector<8x128xf32>
    %150 = arith.addf %148, %149 : vector<8x128xf32>
    %151 = vector.extract_strided_slice %142 {offsets = [0, 128], sizes = [8, 128], strides = [1, 1]} : vector<8x512xf32> to vector<8x128xf32>
    %cst_65 = arith.constant 5.000000e-01 : f32
    %152 = vector.broadcast %cst_65 : f32 to vector<8x128xf32>
    %153 = arith.mulf %152, %151 : vector<8x128xf32>
    %154 = math.tanh %153 : vector<8x128xf32>
    %cst_66 = arith.constant 5.000000e-01 : f32
    %155 = vector.broadcast %cst_66 : f32 to vector<8x128xf32>
    %156 = arith.mulf %155, %154 : vector<8x128xf32>
    %cst_67 = arith.constant 5.000000e-01 : f32
    %157 = vector.broadcast %cst_67 : f32 to vector<8x128xf32>
    %158 = arith.addf %156, %157 : vector<8x128xf32>
    %159 = vector.extract_strided_slice %142 {offsets = [0, 256], sizes = [8, 128], strides = [1, 1]} : vector<8x512xf32> to vector<8x128xf32>
    %160 = math.tanh %159 : vector<8x128xf32>
    %161 = vector.extract_strided_slice %142 {offsets = [0, 384], sizes = [8, 128], strides = [1, 1]} : vector<8x512xf32> to vector<8x128xf32>
    %cst_68 = arith.constant 5.000000e-01 : f32
    %162 = vector.broadcast %cst_68 : f32 to vector<8x128xf32>
    %163 = arith.mulf %162, %161 : vector<8x128xf32>
    %164 = math.tanh %163 : vector<8x128xf32>
    %cst_69 = arith.constant 5.000000e-01 : f32
    %165 = vector.broadcast %cst_69 : f32 to vector<8x128xf32>
    %166 = arith.mulf %165, %164 : vector<8x128xf32>
    %cst_70 = arith.constant 5.000000e-01 : f32
    %167 = vector.broadcast %cst_70 : f32 to vector<8x128xf32>
    %168 = arith.addf %166, %167 : vector<8x128xf32>
    %169 = arith.mulf %158, %130 : vector<8x128xf32>
    %170 = arith.mulf %150, %160 : vector<8x128xf32>
    %171 = arith.addf %169, %170 : vector<8x128xf32>
    %172 = math.tanh %171 : vector<8x128xf32>
    %173 = arith.mulf %168, %172 : vector<8x128xf32>
    %174 = arith.truncf %173 : vector<8x128xf32> to vector<8x128xbf16>
    %175 = arith.index_cast %c3_i32 : i32 to index
    %c0_71 = arith.constant 0 : index
    %c0_72 = arith.constant 0 : index
    %176 = vector.load %arg8[%175, %c0_71, %c0_72] : memref<8x8x128xbf16, #tpu.memory_space<vmem>>, vector<1x8x128xbf16>
    %177 = vector.shape_cast %176 : vector<1x8x128xbf16> to vector<8x128xbf16>
    %178 = vector.shape_cast %174 : vector<8x128xbf16> to vector<1x8x128xbf16>
    tpu.vector_store %arg8[%175, %c0_71, %c0_72], %178 {strides = array<i32>} : memref<8x8x128xbf16, #tpu.memory_space<vmem>>, vector<1x8x128xbf16>,
    %c4_i32 = arith.constant 4 : i32
    %179 = arith.index_cast %c4_i32 : i32 to index
    %c0_73 = arith.constant 0 : index
    %c0_74 = arith.constant 0 : index
    %180 = vector.load %arg11[%179, %c0_73, %c0_74] : memref<8x8x512xf32, #tpu.memory_space<vmem>>, vector<1x8x512xf32>
    %181 = vector.shape_cast %180 : vector<1x8x512xf32> to vector<8x512xf32>
    %cst_75 = arith.constant dense<0.000000e+00> : vector<8x512xf32>
    %182 = tpu.matmul %174, %12, %cst_75 {dimension_numbers = #tpu.dot_dimension_numbers<[1], [0], [0], [1], [0, 0, 1, 1], [], []>} : vector<8x128xbf16>, vector<128x512xbf16>, vector<8x512xf32> -> vector<8x512xf32>
    %183 = arith.addf %181, %182 : vector<8x512xf32>
    %184 = vector.extract_strided_slice %183 {offsets = [0, 0], sizes = [8, 128], strides = [1, 1]} : vector<8x512xf32> to vector<8x128xf32>
    %cst_76 = arith.constant 5.000000e-01 : f32
    %185 = vector.broadcast %cst_76 : f32 to vector<8x128xf32>
    %186 = arith.mulf %185, %184 : vector<8x128xf32>
    %187 = math.tanh %186 : vector<8x128xf32>
    %cst_77 = arith.constant 5.000000e-01 : f32
    %188 = vector.broadcast %cst_77 : f32 to vector<8x128xf32>
    %189 = arith.mulf %188, %187 : vector<8x128xf32>
    %cst_78 = arith.constant 5.000000e-01 : f32
    %190 = vector.broadcast %cst_78 : f32 to vector<8x128xf32>
    %191 = arith.addf %189, %190 : vector<8x128xf32>
    %192 = vector.extract_strided_slice %183 {offsets = [0, 128], sizes = [8, 128], strides = [1, 1]} : vector<8x512xf32> to vector<8x128xf32>
    %cst_79 = arith.constant 5.000000e-01 : f32
    %193 = vector.broadcast %cst_79 : f32 to vector<8x128xf32>
    %194 = arith.mulf %193, %192 : vector<8x128xf32>
    %195 = math.tanh %194 : vector<8x128xf32>
    %cst_80 = arith.constant 5.000000e-01 : f32
    %196 = vector.broadcast %cst_80 : f32 to vector<8x128xf32>
    %197 = arith.mulf %196, %195 : vector<8x128xf32>
    %cst_81 = arith.constant 5.000000e-01 : f32
    %198 = vector.broadcast %cst_81 : f32 to vector<8x128xf32>
    %199 = arith.addf %197, %198 : vector<8x128xf32>
    %200 = vector.extract_strided_slice %183 {offsets = [0, 256], sizes = [8, 128], strides = [1, 1]} : vector<8x512xf32> to vector<8x128xf32>
    %201 = math.tanh %200 : vector<8x128xf32>
    %202 = vector.extract_strided_slice %183 {offsets = [0, 384], sizes = [8, 128], strides = [1, 1]} : vector<8x512xf32> to vector<8x128xf32>
    %cst_82 = arith.constant 5.000000e-01 : f32
    %203 = vector.broadcast %cst_82 : f32 to vector<8x128xf32>
    %204 = arith.mulf %203, %202 : vector<8x128xf32>
    %205 = math.tanh %204 : vector<8x128xf32>
    %cst_83 = arith.constant 5.000000e-01 : f32
    %206 = vector.broadcast %cst_83 : f32 to vector<8x128xf32>
    %207 = arith.mulf %206, %205 : vector<8x128xf32>
    %cst_84 = arith.constant 5.000000e-01 : f32
    %208 = vector.broadcast %cst_84 : f32 to vector<8x128xf32>
    %209 = arith.addf %207, %208 : vector<8x128xf32>
    %210 = arith.mulf %199, %171 : vector<8x128xf32>
    %211 = arith.mulf %191, %201 : vector<8x128xf32>
    %212 = arith.addf %210, %211 : vector<8x128xf32>
    %213 = math.tanh %212 : vector<8x128xf32>
    %214 = arith.mulf %209, %213 : vector<8x128xf32>
    %215 = arith.truncf %214 : vector<8x128xf32> to vector<8x128xbf16>
    %216 = arith.index_cast %c4_i32 : i32 to index
    %c0_85 = arith.constant 0 : index
    %c0_86 = arith.constant 0 : index
    %217 = vector.load %arg8[%216, %c0_85, %c0_86] : memref<8x8x128xbf16, #tpu.memory_space<vmem>>, vector<1x8x128xbf16>
    %218 = vector.shape_cast %217 : vector<1x8x128xbf16> to vector<8x128xbf16>
    %219 = vector.shape_cast %215 : vector<8x128xbf16> to vector<1x8x128xbf16>
    tpu.vector_store %arg8[%216, %c0_85, %c0_86], %219 {strides = array<i32>} : memref<8x8x128xbf16, #tpu.memory_space<vmem>>, vector<1x8x128xbf16>,
    %c5_i32 = arith.constant 5 : i32
    %220 = arith.index_cast %c5_i32 : i32 to index
    %c0_87 = arith.constant 0 : index
    %c0_88 = arith.constant 0 : index
    %221 = vector.load %arg11[%220, %c0_87, %c0_88] : memref<8x8x512xf32, #tpu.memory_space<vmem>>, vector<1x8x512xf32>
    %222 = vector.shape_cast %221 : vector<1x8x512xf32> to vector<8x512xf32>
    %cst_89 = arith.constant dense<0.000000e+00> : vector<8x512xf32>
    %223 = tpu.matmul %215, %12, %cst_89 {dimension_numbers = #tpu.dot_dimension_numbers<[1], [0], [0], [1], [0, 0, 1, 1], [], []>} : vector<8x128xbf16>, vector<128x512xbf16>, vector<8x512xf32> -> vector<8x512xf32>
    %224 = arith.addf %222, %223 : vector<8x512xf32>
    %225 = vector.extract_strided_slice %224 {offsets = [0, 0], sizes = [8, 128], strides = [1, 1]} : vector<8x512xf32> to vector<8x128xf32>
    %cst_90 = arith.constant 5.000000e-01 : f32
    %226 = vector.broadcast %cst_90 : f32 to vector<8x128xf32>
    %227 = arith.mulf %226, %225 : vector<8x128xf32>
    %228 = math.tanh %227 : vector<8x128xf32>
    %cst_91 = arith.constant 5.000000e-01 : f32
    %229 = vector.broadcast %cst_91 : f32 to vector<8x128xf32>
    %230 = arith.mulf %229, %228 : vector<8x128xf32>
    %cst_92 = arith.constant 5.000000e-01 : f32
    %231 = vector.broadcast %cst_92 : f32 to vector<8x128xf32>
    %232 = arith.addf %230, %231 : vector<8x128xf32>
    %233 = vector.extract_strided_slice %224 {offsets = [0, 128], sizes = [8, 128], strides = [1, 1]} : vector<8x512xf32> to vector<8x128xf32>
    %cst_93 = arith.constant 5.000000e-01 : f32
    %234 = vector.broadcast %cst_93 : f32 to vector<8x128xf32>
    %235 = arith.mulf %234, %233 : vector<8x128xf32>
    %236 = math.tanh %235 : vector<8x128xf32>
    %cst_94 = arith.constant 5.000000e-01 : f32
    %237 = vector.broadcast %cst_94 : f32 to vector<8x128xf32>
    %238 = arith.mulf %237, %236 : vector<8x128xf32>
    %cst_95 = arith.constant 5.000000e-01 : f32
    %239 = vector.broadcast %cst_95 : f32 to vector<8x128xf32>
    %240 = arith.addf %238, %239 : vector<8x128xf32>
    %241 = vector.extract_strided_slice %224 {offsets = [0, 256], sizes = [8, 128], strides = [1, 1]} : vector<8x512xf32> to vector<8x128xf32>
    %242 = math.tanh %241 : vector<8x128xf32>
    %243 = vector.extract_strided_slice %224 {offsets = [0, 384], sizes = [8, 128], strides = [1, 1]} : vector<8x512xf32> to vector<8x128xf32>
    %cst_96 = arith.constant 5.000000e-01 : f32
    %244 = vector.broadcast %cst_96 : f32 to vector<8x128xf32>
    %245 = arith.mulf %244, %243 : vector<8x128xf32>
    %246 = math.tanh %245 : vector<8x128xf32>
    %cst_97 = arith.constant 5.000000e-01 : f32
    %247 = vector.broadcast %cst_97 : f32 to vector<8x128xf32>
    %248 = arith.mulf %247, %246 : vector<8x128xf32>
    %cst_98 = arith.constant 5.000000e-01 : f32
    %249 = vector.broadcast %cst_98 : f32 to vector<8x128xf32>
    %250 = arith.addf %248, %249 : vector<8x128xf32>
    %251 = arith.mulf %240, %212 : vector<8x128xf32>
    %252 = arith.mulf %232, %242 : vector<8x128xf32>
    %253 = arith.addf %251, %252 : vector<8x128xf32>
    %254 = math.tanh %253 : vector<8x128xf32>
    %255 = arith.mulf %250, %254 : vector<8x128xf32>
    %256 = arith.truncf %255 : vector<8x128xf32> to vector<8x128xbf16>
    %257 = arith.index_cast %c5_i32 : i32 to index
    %c0_99 = arith.constant 0 : index
    %c0_100 = arith.constant 0 : index
    %258 = vector.load %arg8[%257, %c0_99, %c0_100] : memref<8x8x128xbf16, #tpu.memory_space<vmem>>, vector<1x8x128xbf16>
    %259 = vector.shape_cast %258 : vector<1x8x128xbf16> to vector<8x128xbf16>
    %260 = vector.shape_cast %256 : vector<8x128xbf16> to vector<1x8x128xbf16>
    tpu.vector_store %arg8[%257, %c0_99, %c0_100], %260 {strides = array<i32>} : memref<8x8x128xbf16, #tpu.memory_space<vmem>>, vector<1x8x128xbf16>,
    %c6_i32 = arith.constant 6 : i32
    %261 = arith.index_cast %c6_i32 : i32 to index
    %c0_101 = arith.constant 0 : index
    %c0_102 = arith.constant 0 : index
    %262 = vector.load %arg11[%261, %c0_101, %c0_102] : memref<8x8x512xf32, #tpu.memory_space<vmem>>, vector<1x8x512xf32>
    %263 = vector.shape_cast %262 : vector<1x8x512xf32> to vector<8x512xf32>
    %cst_103 = arith.constant dense<0.000000e+00> : vector<8x512xf32>
    %264 = tpu.matmul %256, %12, %cst_103 {dimension_numbers = #tpu.dot_dimension_numbers<[1], [0], [0], [1], [0, 0, 1, 1], [], []>} : vector<8x128xbf16>, vector<128x512xbf16>, vector<8x512xf32> -> vector<8x512xf32>
    %265 = arith.addf %263, %264 : vector<8x512xf32>
    %266 = vector.extract_strided_slice %265 {offsets = [0, 0], sizes = [8, 128], strides = [1, 1]} : vector<8x512xf32> to vector<8x128xf32>
    %cst_104 = arith.constant 5.000000e-01 : f32
    %267 = vector.broadcast %cst_104 : f32 to vector<8x128xf32>
    %268 = arith.mulf %267, %266 : vector<8x128xf32>
    %269 = math.tanh %268 : vector<8x128xf32>
    %cst_105 = arith.constant 5.000000e-01 : f32
    %270 = vector.broadcast %cst_105 : f32 to vector<8x128xf32>
    %271 = arith.mulf %270, %269 : vector<8x128xf32>
    %cst_106 = arith.constant 5.000000e-01 : f32
    %272 = vector.broadcast %cst_106 : f32 to vector<8x128xf32>
    %273 = arith.addf %271, %272 : vector<8x128xf32>
    %274 = vector.extract_strided_slice %265 {offsets = [0, 128], sizes = [8, 128], strides = [1, 1]} : vector<8x512xf32> to vector<8x128xf32>
    %cst_107 = arith.constant 5.000000e-01 : f32
    %275 = vector.broadcast %cst_107 : f32 to vector<8x128xf32>
    %276 = arith.mulf %275, %274 : vector<8x128xf32>
    %277 = math.tanh %276 : vector<8x128xf32>
    %cst_108 = arith.constant 5.000000e-01 : f32
    %278 = vector.broadcast %cst_108 : f32 to vector<8x128xf32>
    %279 = arith.mulf %278, %277 : vector<8x128xf32>
    %cst_109 = arith.constant 5.000000e-01 : f32
    %280 = vector.broadcast %cst_109 : f32 to vector<8x128xf32>
    %281 = arith.addf %279, %280 : vector<8x128xf32>
    %282 = vector.extract_strided_slice %265 {offsets = [0, 256], sizes = [8, 128], strides = [1, 1]} : vector<8x512xf32> to vector<8x128xf32>
    %283 = math.tanh %282 : vector<8x128xf32>
    %284 = vector.extract_strided_slice %265 {offsets = [0, 384], sizes = [8, 128], strides = [1, 1]} : vector<8x512xf32> to vector<8x128xf32>
    %cst_110 = arith.constant 5.000000e-01 : f32
    %285 = vector.broadcast %cst_110 : f32 to vector<8x128xf32>
    %286 = arith.mulf %285, %284 : vector<8x128xf32>
    %287 = math.tanh %286 : vector<8x128xf32>
    %cst_111 = arith.constant 5.000000e-01 : f32
    %288 = vector.broadcast %cst_111 : f32 to vector<8x128xf32>
    %289 = arith.mulf %288, %287 : vector<8x128xf32>
    %cst_112 = arith.constant 5.000000e-01 : f32
    %290 = vector.broadcast %cst_112 : f32 to vector<8x128xf32>
    %291 = arith.addf %289, %290 : vector<8x128xf32>
    %292 = arith.mulf %281, %253 : vector<8x128xf32>
    %293 = arith.mulf %273, %283 : vector<8x128xf32>
    %294 = arith.addf %292, %293 : vector<8x128xf32>
    %295 = math.tanh %294 : vector<8x128xf32>
    %296 = arith.mulf %291, %295 : vector<8x128xf32>
    %297 = arith.truncf %296 : vector<8x128xf32> to vector<8x128xbf16>
    %298 = arith.index_cast %c6_i32 : i32 to index
    %c0_113 = arith.constant 0 : index
    %c0_114 = arith.constant 0 : index
    %299 = vector.load %arg8[%298, %c0_113, %c0_114] : memref<8x8x128xbf16, #tpu.memory_space<vmem>>, vector<1x8x128xbf16>
    %300 = vector.shape_cast %299 : vector<1x8x128xbf16> to vector<8x128xbf16>
    %301 = vector.shape_cast %297 : vector<8x128xbf16> to vector<1x8x128xbf16>
    tpu.vector_store %arg8[%298, %c0_113, %c0_114], %301 {strides = array<i32>} : memref<8x8x128xbf16, #tpu.memory_space<vmem>>, vector<1x8x128xbf16>,
    %c7_i32 = arith.constant 7 : i32
    %302 = arith.index_cast %c7_i32 : i32 to index
    %c0_115 = arith.constant 0 : index
    %c0_116 = arith.constant 0 : index
    %303 = vector.load %arg11[%302, %c0_115, %c0_116] : memref<8x8x512xf32, #tpu.memory_space<vmem>>, vector<1x8x512xf32>
    %304 = vector.shape_cast %303 : vector<1x8x512xf32> to vector<8x512xf32>
    %cst_117 = arith.constant dense<0.000000e+00> : vector<8x512xf32>
    %305 = tpu.matmul %297, %12, %cst_117 {dimension_numbers = #tpu.dot_dimension_numbers<[1], [0], [0], [1], [0, 0, 1, 1], [], []>} : vector<8x128xbf16>, vector<128x512xbf16>, vector<8x512xf32> -> vector<8x512xf32>
    %306 = arith.addf %304, %305 : vector<8x512xf32>
    %307 = vector.extract_strided_slice %306 {offsets = [0, 0], sizes = [8, 128], strides = [1, 1]} : vector<8x512xf32> to vector<8x128xf32>
    %cst_118 = arith.constant 5.000000e-01 : f32
    %308 = vector.broadcast %cst_118 : f32 to vector<8x128xf32>
    %309 = arith.mulf %308, %307 : vector<8x128xf32>
    %310 = math.tanh %309 : vector<8x128xf32>
    %cst_119 = arith.constant 5.000000e-01 : f32
    %311 = vector.broadcast %cst_119 : f32 to vector<8x128xf32>
    %312 = arith.mulf %311, %310 : vector<8x128xf32>
    %cst_120 = arith.constant 5.000000e-01 : f32
    %313 = vector.broadcast %cst_120 : f32 to vector<8x128xf32>
    %314 = arith.addf %312, %313 : vector<8x128xf32>
    %315 = vector.extract_strided_slice %306 {offsets = [0, 128], sizes = [8, 128], strides = [1, 1]} : vector<8x512xf32> to vector<8x128xf32>
    %cst_121 = arith.constant 5.000000e-01 : f32
    %316 = vector.broadcast %cst_121 : f32 to vector<8x128xf32>
    %317 = arith.mulf %316, %315 : vector<8x128xf32>
    %318 = math.tanh %317 : vector<8x128xf32>
    %cst_122 = arith.constant 5.000000e-01 : f32
    %319 = vector.broadcast %cst_122 : f32 to vector<8x128xf32>
    %320 = arith.mulf %319, %318 : vector<8x128xf32>
    %cst_123 = arith.constant 5.000000e-01 : f32
    %321 = vector.broadcast %cst_123 : f32 to vector<8x128xf32>
    %322 = arith.addf %320, %321 : vector<8x128xf32>
    %323 = vector.extract_strided_slice %306 {offsets = [0, 256], sizes = [8, 128], strides = [1, 1]} : vector<8x512xf32> to vector<8x128xf32>
    %324 = math.tanh %323 : vector<8x128xf32>
    %325 = vector.extract_strided_slice %306 {offsets = [0, 384], sizes = [8, 128], strides = [1, 1]} : vector<8x512xf32> to vector<8x128xf32>
    %cst_124 = arith.constant 5.000000e-01 : f32
    %326 = vector.broadcast %cst_124 : f32 to vector<8x128xf32>
    %327 = arith.mulf %326, %325 : vector<8x128xf32>
    %328 = math.tanh %327 : vector<8x128xf32>
    %cst_125 = arith.constant 5.000000e-01 : f32
    %329 = vector.broadcast %cst_125 : f32 to vector<8x128xf32>
    %330 = arith.mulf %329, %328 : vector<8x128xf32>
    %cst_126 = arith.constant 5.000000e-01 : f32
    %331 = vector.broadcast %cst_126 : f32 to vector<8x128xf32>
    %332 = arith.addf %330, %331 : vector<8x128xf32>
    %333 = arith.mulf %322, %294 : vector<8x128xf32>
    %334 = arith.mulf %314, %324 : vector<8x128xf32>
    %335 = arith.addf %333, %334 : vector<8x128xf32>
    %336 = math.tanh %335 : vector<8x128xf32>
    %337 = arith.mulf %332, %336 : vector<8x128xf32>
    %338 = arith.truncf %337 : vector<8x128xf32> to vector<8x128xbf16>
    %339 = arith.index_cast %c7_i32 : i32 to index
    %c0_127 = arith.constant 0 : index
    %c0_128 = arith.constant 0 : index
    %340 = vector.load %arg8[%339, %c0_127, %c0_128] : memref<8x8x128xbf16, #tpu.memory_space<vmem>>, vector<1x8x128xbf16>
    %341 = vector.shape_cast %340 : vector<1x8x128xbf16> to vector<8x128xbf16>
    %342 = vector.shape_cast %338 : vector<8x128xbf16> to vector<1x8x128xbf16>
    tpu.vector_store %arg8[%339, %c0_127, %c0_128], %342 {strides = array<i32>} : memref<8x8x128xbf16, #tpu.memory_space<vmem>>, vector<1x8x128xbf16>,
    %c8_i32 = arith.constant 8 : i32
    %c0_129 = arith.constant 0 : index
    %c0_130 = arith.constant 0 : index
    %343 = vector.load %arg12[%c0_129, %c0_130] : memref<8x128xbf16, #tpu.memory_space<vmem>>, vector<8x128xbf16>
    tpu.vector_store %arg12[%c0_129, %c0_130], %338 {strides = array<i32>} : memref<8x128xbf16, #tpu.memory_space<vmem>>, vector<8x128xbf16>,
    %c0_131 = arith.constant 0 : index
    %c0_132 = arith.constant 0 : index
    %344 = vector.load %arg13[%c0_131, %c0_132] : memref<8x128xf32, #tpu.memory_space<vmem>>, vector<8x128xf32>
    tpu.vector_store %arg13[%c0_131, %c0_132], %335 {strides = array<i32>} : memref<8x128xf32, #tpu.memory_space<vmem>>, vector<8x128xf32>,
    %c0_i32_133 = arith.constant 0 : i32
    %345 = arith.cmpi eq, %arg1, %c0_i32_133 : i32
    %346 = arith.extui %345 : i1 to i32
    %c0_i32_134 = arith.constant 0 : i32
    %347 = arith.cmpi ne, %346, %c0_i32_134 : i32
    scf.if %347 {
      %348 = arith.extf %338 : vector<8x128xbf16> to vector<8x128xf32>
      %c0_135 = arith.constant 0 : index
      %c0_136 = arith.constant 0 : index
      %349 = vector.load %arg9[%c0_135, %c0_136] : memref<8x128xf32, #tpu.memory_space<vmem>>, vector<8x128xf32>
      tpu.vector_store %arg9[%c0_135, %c0_136], %348 {strides = array<i32>} : memref<8x128xf32, #tpu.memory_space<vmem>>, vector<8x128xf32>,
      %c0_137 = arith.constant 0 : index
      %c0_138 = arith.constant 0 : index
      %350 = vector.load %arg10[%c0_137, %c0_138] : memref<8x128xf32, #tpu.memory_space<vmem>>, vector<8x128xf32>
      tpu.vector_store %arg10[%c0_137, %c0_138], %335 {strides = array<i32>} : memref<8x128xf32, #tpu.memory_space<vmem>>, vector<8x128xf32>,
    } else {
    }
    return
  }
  func.func @transform_0(%arg0: i32, %arg1: i32) -> (i32, i32, i32) {
    %c0_i32 = arith.constant 0 : i32
    %c0_i32_0 = arith.constant 0 : i32
    return %arg1, %arg0, %c0_i32 : i32, i32, i32
  }
  func.func @transform_1(%arg0: i32, %arg1: i32) -> (i32, i32) {
    %c0_i32 = arith.constant 0 : i32
    %c0_i32_0 = arith.constant 0 : i32
    %c0_i32_1 = arith.constant 0 : i32
    return %c0_i32, %c0_i32_0 : i32, i32
  }
  func.func @transform_2(%arg0: i32, %arg1: i32) -> (i32, i32) {
    %c0_i32 = arith.constant 0 : i32
    %c0_i32_0 = arith.constant 0 : i32
    %c0_i32_1 = arith.constant 0 : i32
    return %c0_i32, %c0_i32_0 : i32, i32
  }
  func.func @transform_3(%arg0: i32, %arg1: i32) -> (i32, i32) {
    %c0_i32 = arith.constant 0 : i32
    %c0_i32_0 = arith.constant 0 : i32
    %c0_i32_1 = arith.constant 0 : i32
    return %c0_i32, %c0_i32_0 : i32, i32
  }
  func.func @transform_4(%arg0: i32, %arg1: i32) -> (i32, i32) {
    %c0_i32 = arith.constant 0 : i32
    %c0_i32_0 = arith.constant 0 : i32
    return %arg0, %c0_i32 : i32, i32
  }
  func.func @transform_5(%arg0: i32, %arg1: i32) -> (i32, i32) {
    %c0_i32 = arith.constant 0 : i32
    %c0_i32_0 = arith.constant 0 : i32
    return %arg0, %c0_i32 : i32, i32
  }
  func.func @transform_6(%arg0: i32, %arg1: i32) -> (i32, i32, i32) {
    %c0_i32 = arith.constant 0 : i32
    %c0_i32_0 = arith.constant 0 : i32
    return %arg1, %arg0, %c0_i32 : i32, i32, i32
  }
  func.func @transform_7(%arg0: i32, %arg1: i32) -> (i32, i32) {
    %c0_i32 = arith.constant 0 : i32
    %c0_i32_0 = arith.constant 0 : i32
    return %arg0, %c0_i32 : i32, i32
  }
  func.func @transform_8(%arg0: i32, %arg1: i32) -> (i32, i32) {
    %c0_i32 = arith.constant 0 : i32
    %c0_i32_0 = arith.constant 0 : i32
    return %arg0, %c0_i32 : i32, i32
  }
}

module attributes {stable_mosaic.version = 11 : i64} {
  func.func @_lstm_fused_kernel(%arg0: i32, %arg1: i32, %arg2: memref<8x8x128xbf16, #tpu.memory_space<vmem>>, %arg3: memref<128x512xbf16, #tpu.memory_space<vmem>>, %arg4: memref<1x512xf32, #tpu.memory_space<vmem>>, %arg5: memref<128x512xbf16, #tpu.memory_space<vmem>>, %arg6: memref<8x128xf32, #tpu.memory_space<vmem>>, %arg7: memref<8x128xf32, #tpu.memory_space<vmem>>, %arg8: memref<8x8x128xbf16, #tpu.memory_space<vmem>>, %arg9: memref<8x128xf32, #tpu.memory_space<vmem>>, %arg10: memref<8x128xf32, #tpu.memory_space<vmem>>, %arg11: memref<8x8x512xf32, #tpu.memory_space<vmem>>, %arg12: memref<8x128xbf16, #tpu.memory_space<vmem>>, %arg13: memref<8x128xf32, #tpu.memory_space<vmem>>) attributes {dimension_semantics = [#tpu.dimension_semantics<parallel>, #tpu.dimension_semantics<arbitrary>], iteration_bounds = array<i64: 1, 1>, scalar_prefetch = 0 : i64, scratch_operands = 3 : i64, tpu.core_type = #tpu.core_type<tc>, window_params = [{transform_indices = @transform_0, window_bounds = array<i64: 8, 8, 128>}, {pipeline_mode = #tpu.pipeline_mode<synchronous>, transform_indices = @transform_1, window_bounds = array<i64: 128, 512>}, {pipeline_mode = #tpu.pipeline_mode<synchronous>, transform_indices = @transform_2, window_bounds = array<i64: 1, 512>}, {pipeline_mode = #tpu.pipeline_mode<synchronous>, transform_indices = @transform_3, window_bounds = array<i64: 128, 512>}, {transform_indices = @transform_4, window_bounds = array<i64: 8, 128>}, {transform_indices = @transform_5, window_bounds = array<i64: 8, 128>}, {transform_indices = @transform_6, window_bounds = array<i64: 8, 8, 128>}, {transform_indices = @transform_7, window_bounds = array<i64: 8, 128>}, {transform_indices = @transform_8, window_bounds = array<i64: 8, 128>}]} {
    %c0_i32 = arith.constant 0 : i32
    %0 = arith.cmpi eq, %arg1, %c0_i32 : i32
    %1 = arith.extui %0 : i1 to i32
    %c0_i32_0 = arith.constant 0 : i32
    %2 = arith.cmpi ne, %1, %c0_i32_0 : i32
    scf.if %2 {
      %c0_135 = arith.constant 0 : index
      %c0_136 = arith.constant 0 : index
      %348 = vector.load %arg6[%c0_135, %c0_136] : memref<8x128xf32, #tpu.memory_space<vmem>>, vector<8x128xf32>
      %349 = arith.truncf %348 : vector<8x128xf32> to vector<8x128xbf16>
      %c0_137 = arith.constant 0 : index
      %c0_138 = arith.constant 0 : index
      %350 = vector.load %arg12[%c0_137, %c0_138] : memref<8x128xbf16, #tpu.memory_space<vmem>>, vector<8x128xbf16>
      tpu.vector_store %arg12[%c0_137, %c0_138], %349 {strides = array<i32>} : memref<8x128xbf16, #tpu.memory_space<vmem>>, vector<8x128xbf16>,
      %c0_139 = arith.constant 0 : index
      %c0_140 = arith.constant 0 : index
      %351 = vector.load %arg7[%c0_139, %c0_140] : memref<8x128xf32, #tpu.memory_space<vmem>>, vector<8x128xf32>
      %c0_141 = arith.constant 0 : index
      %c0_142 = arith.constant 0 : index
      %352 = vector.load %arg13[%c0_141, %c0_142] : memref<8x128xf32, #tpu.memory_space<vmem>>, vector<8x128xf32>
      tpu.vector_store %arg13[%c0_141, %c0_142], %351 {strides = array<i32>} : memref<8x128xf32, #tpu.memory_space<vmem>>, vector<8x128xf32>,
    } else {
    }
    %c0 = arith.constant 0 : index
    %c0_1 = arith.constant 0 : index
    %c0_2 = arith.constant 0 : index
    %3 = vector.load %arg2[%c0, %c0_1, %c0_2] : memref<8x8x128xbf16, #tpu.memory_space<vmem>>, vector<8x8x128xbf16>
    %4 = vector.shape_cast %3 : vector<8x8x128xbf16> to vector<64x128xbf16>
    %c0_3 = arith.constant 0 : index
    %c0_4 = arith.constant 0 : index
    %5 = vector.load %arg3[%c0_3, %c0_4] : memref<128x512xbf16, #tpu.memory_space<vmem>>, vector<128x512xbf16>
    %cst = arith.constant dense<0.000000e+00> : vector<64x512xf32>
    %6 = tpu.matmul %4, %5, %cst {dimension_numbers = #tpu.dot_dimension_numbers<[1], [0], [0], [1], [0, 0, 1, 1], [], []>} : vector<64x128xbf16>, vector<128x512xbf16>, vector<64x512xf32> -> vector<64x512xf32>
    %c0_5 = arith.constant 0 : index
    %c0_6 = arith.constant 0 : index
    %7 = vector.load %arg4[%c0_5, %c0_6] : memref<1x512xf32, #tpu.memory_space<vmem>>, vector<1x512xf32>
    %8 = vector.broadcast %7 : vector<1x512xf32> to vector<64x512xf32>
    %9 = arith.addf %6, %8 : vector<64x512xf32>
    %10 = vector.shape_cast %9 : vector<64x512xf32> to vector<8x8x512xf32>
    %c0_7 = arith.constant 0 : index
    %c0_8 = arith.constant 0 : index
    %c0_9 = arith.constant 0 : index
    %11 = vector.load %arg11[%c0_7, %c0_8, %c0_9] : memref<8x8x512xf32, #tpu.memory_space<vmem>>, vector<8x8x512xf32>
    tpu.vector_store %arg11[%c0_7, %c0_8, %c0_9], %10 {strides = array<i32>} : memref<8x8x512xf32, #tpu.memory_space<vmem>>, vector<8x8x512xf32>,
    %c0_10 = arith.constant 0 : index
    %c0_11 = arith.constant 0 : index
    %12 = vector.load %arg5[%c0_10, %c0_11] : memref<128x512xbf16, #tpu.memory_space<vmem>>, vector<128x512xbf16>
    %c0_12 = arith.constant 0 : index
    %c0_13 = arith.constant 0 : index
    %13 = vector.load %arg12[%c0_12, %c0_13] : memref<8x128xbf16, #tpu.memory_space<vmem>>, vector<8x128xbf16>
    %c0_14 = arith.constant 0 : index
    %c0_15 = arith.constant 0 : index
    %14 = vector.load %arg13[%c0_14, %c0_15] : memref<8x128xf32, #tpu.memory_space<vmem>>, vector<8x128xf32>
    %c0_i32_16 = arith.constant 0 : i32
    %15 = arith.index_cast %c0_i32_16 : i32 to index
    %c0_17 = arith.constant 0 : index
    %c0_18 = arith.constant 0 : index
    %16 = vector.load %arg11[%15, %c0_17, %c0_18] : memref<8x8x512xf32, #tpu.memory_space<vmem>>, vector<1x8x512xf32>
    %17 = vector.shape_cast %16 : vector<1x8x512xf32> to vector<8x512xf32>
    %cst_19 = arith.constant dense<0.000000e+00> : vector<8x512xf32>
    %18 = tpu.matmul %13, %12, %cst_19 {dimension_numbers = #tpu.dot_dimension_numbers<[1], [0], [0], [1], [0, 0, 1, 1], [], []>} : vector<8x128xbf16>, vector<128x512xbf16>, vector<8x512xf32> -> vector<8x512xf32>
    %19 = arith.addf %17, %18 : vector<8x512xf32>
    %20 = vector.extract_strided_slice %19 {offsets = [0, 0], sizes = [8, 128], strides = [1, 1]} : vector<8x512xf32> to vector<8x128xf32>
    %cst_20 = arith.constant 5.000000e-01 : f32
    %21 = vector.broadcast %cst_20 : f32 to vector<8x128xf32>
    %22 = arith.mulf %21, %20 : vector<8x128xf32>
    %23 = math.tanh %22 : vector<8x128xf32>
    %cst_21 = arith.constant 5.000000e-01 : f32
    %24 = vector.broadcast %cst_21 : f32 to vector<8x128xf32>
    %25 = arith.mulf %24, %23 : vector<8x128xf32>
    %cst_22 = arith.constant 5.000000e-01 : f32
    %26 = vector.broadcast %cst_22 : f32 to vector<8x128xf32>
    %27 = arith.addf %25, %26 : vector<8x128xf32>
    %28 = vector.extract_strided_slice %19 {offsets = [0, 128], sizes = [8, 128], strides = [1, 1]} : vector<8x512xf32> to vector<8x128xf32>
    %cst_23 = arith.constant 5.000000e-01 : f32
    %29 = vector.broadcast %cst_23 : f32 to vector<8x128xf32>
    %30 = arith.mulf %29, %28 : vector<8x128xf32>
    %31 = math.tanh %30 : vector<8x128xf32>
    %cst_24 = arith.constant 5.000000e-01 : f32
    %32 = vector.broadcast %cst_24 : f32 to vector<8x128xf32>
    %33 = arith.mulf %32, %31 : vector<8x128xf32>
    %cst_25 = arith.constant 5.000000e-01 : f32
    %34 = vector.broadcast %cst_25 : f32 to vector<8x128xf32>
    %35 = arith.addf %33, %34 : vector<8x128xf32>
    %36 = vector.extract_strided_slice %19 {offsets = [0, 256], sizes = [8, 128], strides = [1, 1]} : vector<8x512xf32> to vector<8x128xf32>
    %37 = math.tanh %36 : vector<8x128xf32>
    %38 = vector.extract_strided_slice %19 {offsets = [0, 384], sizes = [8, 128], strides = [1, 1]} : vector<8x512xf32> to vector<8x128xf32>
    %cst_26 = arith.constant 5.000000e-01 : f32
    %39 = vector.broadcast %cst_26 : f32 to vector<8x128xf32>
    %40 = arith.mulf %39, %38 : vector<8x128xf32>
    %41 = math.tanh %40 : vector<8x128xf32>
    %cst_27 = arith.constant 5.000000e-01 : f32
    %42 = vector.broadcast %cst_27 : f32 to vector<8x128xf32>
    %43 = arith.mulf %42, %41 : vector<8x128xf32>
    %cst_28 = arith.constant 5.000000e-01 : f32
    %44 = vector.broadcast %cst_28 : f32 to vector<8x128xf32>
    %45 = arith.addf %43, %44 : vector<8x128xf32>
    %46 = arith.mulf %35, %14 : vector<8x128xf32>
    %47 = arith.mulf %27, %37 : vector<8x128xf32>
    %48 = arith.addf %46, %47 : vector<8x128xf32>
    %49 = math.tanh %48 : vector<8x128xf32>
    %50 = arith.mulf %45, %49 : vector<8x128xf32>
    %51 = arith.truncf %50 : vector<8x128xf32> to vector<8x128xbf16>
    %52 = arith.index_cast %c0_i32_16 : i32 to index
    %c0_29 = arith.constant 0 : index
    %c0_30 = arith.constant 0 : index
    %53 = vector.load %arg8[%52, %c0_29, %c0_30] : memref<8x8x128xbf16, #tpu.memory_space<vmem>>, vector<1x8x128xbf16>
    %54 = vector.shape_cast %53 : vector<1x8x128xbf16> to vector<8x128xbf16>
    %55 = vector.shape_cast %51 : vector<8x128xbf16> to vector<1x8x128xbf16>
    tpu.vector_store %arg8[%52, %c0_29, %c0_30], %55 {strides = array<i32>} : memref<8x8x128xbf16, #tpu.memory_space<vmem>>, vector<1x8x128xbf16>,
    %c1_i32 = arith.constant 1 : i32
    %56 = arith.index_cast %c1_i32 : i32 to index
    %c0_31 = arith.constant 0 : index
    %c0_32 = arith.constant 0 : index
    %57 = vector.load %arg11[%56, %c0_31, %c0_32] : memref<8x8x512xf32, #tpu.memory_space<vmem>>, vector<1x8x512xf32>
    %58 = vector.shape_cast %57 : vector<1x8x512xf32> to vector<8x512xf32>
    %cst_33 = arith.constant dense<0.000000e+00> : vector<8x512xf32>
    %59 = tpu.matmul %51, %12, %cst_33 {dimension_numbers = #tpu.dot_dimension_numbers<[1], [0], [0], [1], [0, 0, 1, 1], [], []>} : vector<8x128xbf16>, vector<128x512xbf16>, vector<8x512xf32> -> vector<8x512xf32>
    %60 = arith.addf %58, %59 : vector<8x512xf32>
    %61 = vector.extract_strided_slice %60 {offsets = [0, 0], sizes = [8, 128], strides = [1, 1]} : vector<8x512xf32> to vector<8x128xf32>
    %cst_34 = arith.constant 5.000000e-01 : f32
    %62 = vector.broadcast %cst_34 : f32 to vector<8x128xf32>
    %63 = arith.mulf %62, %61 : vector<8x128xf32>
    %64 = math.tanh %63 : vector<8x128xf32>
    %cst_35 = arith.constant 5.000000e-01 : f32
    %65 = vector.broadcast %cst_35 : f32 to vector<8x128xf32>
    %66 = arith.mulf %65, %64 : vector<8x128xf32>
    %cst_36 = arith.constant 5.000000e-01 : f32
    %67 = vector.broadcast %cst_36 : f32 to vector<8x128xf32>
    %68 = arith.addf %66, %67 : vector<8x128xf32>
    %69 = vector.extract_strided_slice %60 {offsets = [0, 128], sizes = [8, 128], strides = [1, 1]} : vector<8x512xf32> to vector<8x128xf32>
    %cst_37 = arith.constant 5.000000e-01 : f32
    %70 = vector.broadcast %cst_37 : f32 to vector<8x128xf32>
    %71 = arith.mulf %70, %69 : vector<8x128xf32>
    %72 = math.tanh %71 : vector<8x128xf32>
    %cst_38 = arith.constant 5.000000e-01 : f32
    %73 = vector.broadcast %cst_38 : f32 to vector<8x128xf32>
    %74 = arith.mulf %73, %72 : vector<8x128xf32>
    %cst_39 = arith.constant 5.000000e-01 : f32
    %75 = vector.broadcast %cst_39 : f32 to vector<8x128xf32>
    %76 = arith.addf %74, %75 : vector<8x128xf32>
    %77 = vector.extract_strided_slice %60 {offsets = [0, 256], sizes = [8, 128], strides = [1, 1]} : vector<8x512xf32> to vector<8x128xf32>
    %78 = math.tanh %77 : vector<8x128xf32>
    %79 = vector.extract_strided_slice %60 {offsets = [0, 384], sizes = [8, 128], strides = [1, 1]} : vector<8x512xf32> to vector<8x128xf32>
    %cst_40 = arith.constant 5.000000e-01 : f32
    %80 = vector.broadcast %cst_40 : f32 to vector<8x128xf32>
    %81 = arith.mulf %80, %79 : vector<8x128xf32>
    %82 = math.tanh %81 : vector<8x128xf32>
    %cst_41 = arith.constant 5.000000e-01 : f32
    %83 = vector.broadcast %cst_41 : f32 to vector<8x128xf32>
    %84 = arith.mulf %83, %82 : vector<8x128xf32>
    %cst_42 = arith.constant 5.000000e-01 : f32
    %85 = vector.broadcast %cst_42 : f32 to vector<8x128xf32>
    %86 = arith.addf %84, %85 : vector<8x128xf32>
    %87 = arith.mulf %76, %48 : vector<8x128xf32>
    %88 = arith.mulf %68, %78 : vector<8x128xf32>
    %89 = arith.addf %87, %88 : vector<8x128xf32>
    %90 = math.tanh %89 : vector<8x128xf32>
    %91 = arith.mulf %86, %90 : vector<8x128xf32>
    %92 = arith.truncf %91 : vector<8x128xf32> to vector<8x128xbf16>
    %93 = arith.index_cast %c1_i32 : i32 to index
    %c0_43 = arith.constant 0 : index
    %c0_44 = arith.constant 0 : index
    %94 = vector.load %arg8[%93, %c0_43, %c0_44] : memref<8x8x128xbf16, #tpu.memory_space<vmem>>, vector<1x8x128xbf16>
    %95 = vector.shape_cast %94 : vector<1x8x128xbf16> to vector<8x128xbf16>
    %96 = vector.shape_cast %92 : vector<8x128xbf16> to vector<1x8x128xbf16>
    tpu.vector_store %arg8[%93, %c0_43, %c0_44], %96 {strides = array<i32>} : memref<8x8x128xbf16, #tpu.memory_space<vmem>>, vector<1x8x128xbf16>,
    %c2_i32 = arith.constant 2 : i32
    %97 = arith.index_cast %c2_i32 : i32 to index
    %c0_45 = arith.constant 0 : index
    %c0_46 = arith.constant 0 : index
    %98 = vector.load %arg11[%97, %c0_45, %c0_46] : memref<8x8x512xf32, #tpu.memory_space<vmem>>, vector<1x8x512xf32>
    %99 = vector.shape_cast %98 : vector<1x8x512xf32> to vector<8x512xf32>
    %cst_47 = arith.constant dense<0.000000e+00> : vector<8x512xf32>
    %100 = tpu.matmul %92, %12, %cst_47 {dimension_numbers = #tpu.dot_dimension_numbers<[1], [0], [0], [1], [0, 0, 1, 1], [], []>} : vector<8x128xbf16>, vector<128x512xbf16>, vector<8x512xf32> -> vector<8x512xf32>
    %101 = arith.addf %99, %100 : vector<8x512xf32>
    %102 = vector.extract_strided_slice %101 {offsets = [0, 0], sizes = [8, 128], strides = [1, 1]} : vector<8x512xf32> to vector<8x128xf32>
    %cst_48 = arith.constant 5.000000e-01 : f32
    %103 = vector.broadcast %cst_48 : f32 to vector<8x128xf32>
    %104 = arith.mulf %103, %102 : vector<8x128xf32>
    %105 = math.tanh %104 : vector<8x128xf32>
    %cst_49 = arith.constant 5.000000e-01 : f32
    %106 = vector.broadcast %cst_49 : f32 to vector<8x128xf32>
    %107 = arith.mulf %106, %105 : vector<8x128xf32>
    %cst_50 = arith.constant 5.000000e-01 : f32
    %108 = vector.broadcast %cst_50 : f32 to vector<8x128xf32>
    %109 = arith.addf %107, %108 : vector<8x128xf32>
    %110 = vector.extract_strided_slice %101 {offsets = [0, 128], sizes = [8, 128], strides = [1, 1]} : vector<8x512xf32> to vector<8x128xf32>
    %cst_51 = arith.constant 5.000000e-01 : f32
    %111 = vector.broadcast %cst_51 : f32 to vector<8x128xf32>
    %112 = arith.mulf %111, %110 : vector<8x128xf32>
    %113 = math.tanh %112 : vector<8x128xf32>
    %cst_52 = arith.constant 5.000000e-01 : f32
    %114 = vector.broadcast %cst_52 : f32 to vector<8x128xf32>
    %115 = arith.mulf %114, %113 : vector<8x128xf32>
    %cst_53 = arith.constant 5.000000e-01 : f32
    %116 = vector.broadcast %cst_53 : f32 to vector<8x128xf32>
    %117 = arith.addf %115, %116 : vector<8x128xf32>
    %118 = vector.extract_strided_slice %101 {offsets = [0, 256], sizes = [8, 128], strides = [1, 1]} : vector<8x512xf32> to vector<8x128xf32>
    %119 = math.tanh %118 : vector<8x128xf32>
    %120 = vector.extract_strided_slice %101 {offsets = [0, 384], sizes = [8, 128], strides = [1, 1]} : vector<8x512xf32> to vector<8x128xf32>
    %cst_54 = arith.constant 5.000000e-01 : f32
    %121 = vector.broadcast %cst_54 : f32 to vector<8x128xf32>
    %122 = arith.mulf %121, %120 : vector<8x128xf32>
    %123 = math.tanh %122 : vector<8x128xf32>
    %cst_55 = arith.constant 5.000000e-01 : f32
    %124 = vector.broadcast %cst_55 : f32 to vector<8x128xf32>
    %125 = arith.mulf %124, %123 : vector<8x128xf32>
    %cst_56 = arith.constant 5.000000e-01 : f32
    %126 = vector.broadcast %cst_56 : f32 to vector<8x128xf32>
    %127 = arith.addf %125, %126 : vector<8x128xf32>
    %128 = arith.mulf %117, %89 : vector<8x128xf32>
    %129 = arith.mulf %109, %119 : vector<8x128xf32>
    %130 = arith.addf %128, %129 : vector<8x128xf32>
    %131 = math.tanh %130 : vector<8x128xf32>
    %132 = arith.mulf %127, %131 : vector<8x128xf32>
    %133 = arith.truncf %132 : vector<8x128xf32> to vector<8x128xbf16>
    %134 = arith.index_cast %c2_i32 : i32 to index
    %c0_57 = arith.constant 0 : index
    %c0_58 = arith.constant 0 : index
    %135 = vector.load %arg8[%134, %c0_57, %c0_58] : memref<8x8x128xbf16, #tpu.memory_space<vmem>>, vector<1x8x128xbf16>
    %136 = vector.shape_cast %135 : vector<1x8x128xbf16> to vector<8x128xbf16>
    %137 = vector.shape_cast %133 : vector<8x128xbf16> to vector<1x8x128xbf16>
    tpu.vector_store %arg8[%134, %c0_57, %c0_58], %137 {strides = array<i32>} : memref<8x8x128xbf16, #tpu.memory_space<vmem>>, vector<1x8x128xbf16>,
    %c3_i32 = arith.constant 3 : i32
    %138 = arith.index_cast %c3_i32 : i32 to index
    %c0_59 = arith.constant 0 : index
    %c0_60 = arith.constant 0 : index
    %139 = vector.load %arg11[%138, %c0_59, %c0_60] : memref<8x8x512xf32, #tpu.memory_space<vmem>>, vector<1x8x512xf32>
    %140 = vector.shape_cast %139 : vector<1x8x512xf32> to vector<8x512xf32>
    %cst_61 = arith.constant dense<0.000000e+00> : vector<8x512xf32>
    %141 = tpu.matmul %133, %12, %cst_61 {dimension_numbers = #tpu.dot_dimension_numbers<[1], [0], [0], [1], [0, 0, 1, 1], [], []>} : vector<8x128xbf16>, vector<128x512xbf16>, vector<8x512xf32> -> vector<8x512xf32>
    %142 = arith.addf %140, %141 : vector<8x512xf32>
    %143 = vector.extract_strided_slice %142 {offsets = [0, 0], sizes = [8, 128], strides = [1, 1]} : vector<8x512xf32> to vector<8x128xf32>
    %cst_62 = arith.constant 5.000000e-01 : f32
    %144 = vector.broadcast %cst_62 : f32 to vector<8x128xf32>
    %145 = arith.mulf %144, %143 : vector<8x128xf32>
    %146 = math.tanh %145 : vector<8x128xf32>
    %cst_63 = arith.constant 5.000000e-01 : f32
    %147 = vector.broadcast %cst_63 : f32 to vector<8x128xf32>
    %148 = arith.mulf %147, %146 : vector<8x128xf32>
    %cst_64 = arith.constant 5.000000e-01 : f32
    %149 = vector.broadcast %cst_64 : f32 to vector<8x128xf32>
    %150 = arith.addf %148, %149 : vector<8x128xf32>
    %151 = vector.extract_strided_slice %142 {offsets = [0, 128], sizes = [8, 128], strides = [1, 1]} : vector<8x512xf32> to vector<8x128xf32>
    %cst_65 = arith.constant 5.000000e-01 : f32
    %152 = vector.broadcast %cst_65 : f32 to vector<8x128xf32>
    %153 = arith.mulf %152, %151 : vector<8x128xf32>
    %154 = math.tanh %153 : vector<8x128xf32>
    %cst_66 = arith.constant 5.000000e-01 : f32
    %155 = vector.broadcast %cst_66 : f32 to vector<8x128xf32>
    %156 = arith.mulf %155, %154 : vector<8x128xf32>
    %cst_67 = arith.constant 5.000000e-01 : f32
    %157 = vector.broadcast %cst_67 : f32 to vector<8x128xf32>
    %158 = arith.addf %156, %157 : vector<8x128xf32>
    %159 = vector.extract_strided_slice %142 {offsets = [0, 256], sizes = [8, 128], strides = [1, 1]} : vector<8x512xf32> to vector<8x128xf32>
    %160 = math.tanh %159 : vector<8x128xf32>
    %161 = vector.extract_strided_slice %142 {offsets = [0, 384], sizes = [8, 128], strides = [1, 1]} : vector<8x512xf32> to vector<8x128xf32>
    %cst_68 = arith.constant 5.000000e-01 : f32
    %162 = vector.broadcast %cst_68 : f32 to vector<8x128xf32>
    %163 = arith.mulf %162, %161 : vector<8x128xf32>
    %164 = math.tanh %163 : vector<8x128xf32>
    %cst_69 = arith.constant 5.000000e-01 : f32
    %165 = vector.broadcast %cst_69 : f32 to vector<8x128xf32>
    %166 = arith.mulf %165, %164 : vector<8x128xf32>
    %cst_70 = arith.constant 5.000000e-01 : f32
    %167 = vector.broadcast %cst_70 : f32 to vector<8x128xf32>
    %168 = arith.addf %166, %167 : vector<8x128xf32>
    %169 = arith.mulf %158, %130 : vector<8x128xf32>
    %170 = arith.mulf %150, %160 : vector<8x128xf32>
    %171 = arith.addf %169, %170 : vector<8x128xf32>
    %172 = math.tanh %171 : vector<8x128xf32>
    %173 = arith.mulf %168, %172 : vector<8x128xf32>
    %174 = arith.truncf %173 : vector<8x128xf32> to vector<8x128xbf16>
    %175 = arith.index_cast %c3_i32 : i32 to index
    %c0_71 = arith.constant 0 : index
    %c0_72 = arith.constant 0 : index
    %176 = vector.load %arg8[%175, %c0_71, %c0_72] : memref<8x8x128xbf16, #tpu.memory_space<vmem>>, vector<1x8x128xbf16>
    %177 = vector.shape_cast %176 : vector<1x8x128xbf16> to vector<8x128xbf16>
    %178 = vector.shape_cast %174 : vector<8x128xbf16> to vector<1x8x128xbf16>
    tpu.vector_store %arg8[%175, %c0_71, %c0_72], %178 {strides = array<i32>} : memref<8x8x128xbf16, #tpu.memory_space<vmem>>, vector<1x8x128xbf16>,
    %c4_i32 = arith.constant 4 : i32
    %179 = arith.index_cast %c4_i32 : i32 to index
    %c0_73 = arith.constant 0 : index
    %c0_74 = arith.constant 0 : index
    %180 = vector.load %arg11[%179, %c0_73, %c0_74] : memref<8x8x512xf32, #tpu.memory_space<vmem>>, vector<1x8x512xf32>
    %181 = vector.shape_cast %180 : vector<1x8x512xf32> to vector<8x512xf32>
    %cst_75 = arith.constant dense<0.000000e+00> : vector<8x512xf32>
    %182 = tpu.matmul %174, %12, %cst_75 {dimension_numbers = #tpu.dot_dimension_numbers<[1], [0], [0], [1], [0, 0, 1, 1], [], []>} : vector<8x128xbf16>, vector<128x512xbf16>, vector<8x512xf32> -> vector<8x512xf32>
    %183 = arith.addf %181, %182 : vector<8x512xf32>
    %184 = vector.extract_strided_slice %183 {offsets = [0, 0], sizes = [8, 128], strides = [1, 1]} : vector<8x512xf32> to vector<8x128xf32>
    %cst_76 = arith.constant 5.000000e-01 : f32
    %185 = vector.broadcast %cst_76 : f32 to vector<8x128xf32>
    %186 = arith.mulf %185, %184 : vector<8x128xf32>
    %187 = math.tanh %186 : vector<8x128xf32>
    %cst_77 = arith.constant 5.000000e-01 : f32
    %188 = vector.broadcast %cst_77 : f32 to vector<8x128xf32>
    %189 = arith.mulf %188, %187 : vector<8x128xf32>
    %cst_78 = arith.constant 5.000000e-01 : f32
    %190 = vector.broadcast %cst_78 : f32 to vector<8x128xf32>
    %191 = arith.addf %189, %190 : vector<8x128xf32>
    %192 = vector.extract_strided_slice %183 {offsets = [0, 128], sizes = [8, 128], strides = [1, 1]} : vector<8x512xf32> to vector<8x128xf32>
    %cst_79 = arith.constant 5.000000e-01 : f32
    %193 = vector.broadcast %cst_79 : f32 to vector<8x128xf32>
    %194 = arith.mulf %193, %192 : vector<8x128xf32>
    %195 = math.tanh %194 : vector<8x128xf32>
    %cst_80 = arith.constant 5.000000e-01 : f32
    %196 = vector.broadcast %cst_80 : f32 to vector<8x128xf32>
    %197 = arith.mulf %196, %195 : vector<8x128xf32>
    %cst_81 = arith.constant 5.000000e-01 : f32
    %198 = vector.broadcast %cst_81 : f32 to vector<8x128xf32>
    %199 = arith.addf %197, %198 : vector<8x128xf32>
    %200 = vector.extract_strided_slice %183 {offsets = [0, 256], sizes = [8, 128], strides = [1, 1]} : vector<8x512xf32> to vector<8x128xf32>
    %201 = math.tanh %200 : vector<8x128xf32>
    %202 = vector.extract_strided_slice %183 {offsets = [0, 384], sizes = [8, 128], strides = [1, 1]} : vector<8x512xf32> to vector<8x128xf32>
    %cst_82 = arith.constant 5.000000e-01 : f32
    %203 = vector.broadcast %cst_82 : f32 to vector<8x128xf32>
    %204 = arith.mulf %203, %202 : vector<8x128xf32>
    %205 = math.tanh %204 : vector<8x128xf32>
    %cst_83 = arith.constant 5.000000e-01 : f32
    %206 = vector.broadcast %cst_83 : f32 to vector<8x128xf32>
    %207 = arith.mulf %206, %205 : vector<8x128xf32>
    %cst_84 = arith.constant 5.000000e-01 : f32
    %208 = vector.broadcast %cst_84 : f32 to vector<8x128xf32>
    %209 = arith.addf %207, %208 : vector<8x128xf32>
    %210 = arith.mulf %199, %171 : vector<8x128xf32>
    %211 = arith.mulf %191, %201 : vector<8x128xf32>
    %212 = arith.addf %210, %211 : vector<8x128xf32>
    %213 = math.tanh %212 : vector<8x128xf32>
    %214 = arith.mulf %209, %213 : vector<8x128xf32>
    %215 = arith.truncf %214 : vector<8x128xf32> to vector<8x128xbf16>
    %216 = arith.index_cast %c4_i32 : i32 to index
    %c0_85 = arith.constant 0 : index
    %c0_86 = arith.constant 0 : index
    %217 = vector.load %arg8[%216, %c0_85, %c0_86] : memref<8x8x128xbf16, #tpu.memory_space<vmem>>, vector<1x8x128xbf16>
    %218 = vector.shape_cast %217 : vector<1x8x128xbf16> to vector<8x128xbf16>
    %219 = vector.shape_cast %215 : vector<8x128xbf16> to vector<1x8x128xbf16>
    tpu.vector_store %arg8[%216, %c0_85, %c0_86], %219 {strides = array<i32>} : memref<8x8x128xbf16, #tpu.memory_space<vmem>>, vector<1x8x128xbf16>,
    %c5_i32 = arith.constant 5 : i32
    %220 = arith.index_cast %c5_i32 : i32 to index
    %c0_87 = arith.constant 0 : index
    %c0_88 = arith.constant 0 : index
    %221 = vector.load %arg11[%220, %c0_87, %c0_88] : memref<8x8x512xf32, #tpu.memory_space<vmem>>, vector<1x8x512xf32>
    %222 = vector.shape_cast %221 : vector<1x8x512xf32> to vector<8x512xf32>
    %cst_89 = arith.constant dense<0.000000e+00> : vector<8x512xf32>
    %223 = tpu.matmul %215, %12, %cst_89 {dimension_numbers = #tpu.dot_dimension_numbers<[1], [0], [0], [1], [0, 0, 1, 1], [], []>} : vector<8x128xbf16>, vector<128x512xbf16>, vector<8x512xf32> -> vector<8x512xf32>
    %224 = arith.addf %222, %223 : vector<8x512xf32>
    %225 = vector.extract_strided_slice %224 {offsets = [0, 0], sizes = [8, 128], strides = [1, 1]} : vector<8x512xf32> to vector<8x128xf32>
    %cst_90 = arith.constant 5.000000e-01 : f32
    %226 = vector.broadcast %cst_90 : f32 to vector<8x128xf32>
    %227 = arith.mulf %226, %225 : vector<8x128xf32>
    %228 = math.tanh %227 : vector<8x128xf32>
    %cst_91 = arith.constant 5.000000e-01 : f32
    %229 = vector.broadcast %cst_91 : f32 to vector<8x128xf32>
    %230 = arith.mulf %229, %228 : vector<8x128xf32>
    %cst_92 = arith.constant 5.000000e-01 : f32
    %231 = vector.broadcast %cst_92 : f32 to vector<8x128xf32>
    %232 = arith.addf %230, %231 : vector<8x128xf32>
    %233 = vector.extract_strided_slice %224 {offsets = [0, 128], sizes = [8, 128], strides = [1, 1]} : vector<8x512xf32> to vector<8x128xf32>
    %cst_93 = arith.constant 5.000000e-01 : f32
    %234 = vector.broadcast %cst_93 : f32 to vector<8x128xf32>
    %235 = arith.mulf %234, %233 : vector<8x128xf32>
    %236 = math.tanh %235 : vector<8x128xf32>
    %cst_94 = arith.constant 5.000000e-01 : f32
    %237 = vector.broadcast %cst_94 : f32 to vector<8x128xf32>
    %238 = arith.mulf %237, %236 : vector<8x128xf32>
    %cst_95 = arith.constant 5.000000e-01 : f32
    %239 = vector.broadcast %cst_95 : f32 to vector<8x128xf32>
    %240 = arith.addf %238, %239 : vector<8x128xf32>
    %241 = vector.extract_strided_slice %224 {offsets = [0, 256], sizes = [8, 128], strides = [1, 1]} : vector<8x512xf32> to vector<8x128xf32>
    %242 = math.tanh %241 : vector<8x128xf32>
    %243 = vector.extract_strided_slice %224 {offsets = [0, 384], sizes = [8, 128], strides = [1, 1]} : vector<8x512xf32> to vector<8x128xf32>
    %cst_96 = arith.constant 5.000000e-01 : f32
    %244 = vector.broadcast %cst_96 : f32 to vector<8x128xf32>
    %245 = arith.mulf %244, %243 : vector<8x128xf32>
    %246 = math.tanh %245 : vector<8x128xf32>
    %cst_97 = arith.constant 5.000000e-01 : f32
    %247 = vector.broadcast %cst_97 : f32 to vector<8x128xf32>
    %248 = arith.mulf %247, %246 : vector<8x128xf32>
    %cst_98 = arith.constant 5.000000e-01 : f32
    %249 = vector.broadcast %cst_98 : f32 to vector<8x128xf32>
    %250 = arith.addf %248, %249 : vector<8x128xf32>
    %251 = arith.mulf %240, %212 : vector<8x128xf32>
    %252 = arith.mulf %232, %242 : vector<8x128xf32>
    %253 = arith.addf %251, %252 : vector<8x128xf32>
    %254 = math.tanh %253 : vector<8x128xf32>
    %255 = arith.mulf %250, %254 : vector<8x128xf32>
    %256 = arith.truncf %255 : vector<8x128xf32> to vector<8x128xbf16>
    %257 = arith.index_cast %c5_i32 : i32 to index
    %c0_99 = arith.constant 0 : index
    %c0_100 = arith.constant 0 : index
    %258 = vector.load %arg8[%257, %c0_99, %c0_100] : memref<8x8x128xbf16, #tpu.memory_space<vmem>>, vector<1x8x128xbf16>
    %259 = vector.shape_cast %258 : vector<1x8x128xbf16> to vector<8x128xbf16>
    %260 = vector.shape_cast %256 : vector<8x128xbf16> to vector<1x8x128xbf16>
    tpu.vector_store %arg8[%257, %c0_99, %c0_100], %260 {strides = array<i32>} : memref<8x8x128xbf16, #tpu.memory_space<vmem>>, vector<1x8x128xbf16>,
    %c6_i32 = arith.constant 6 : i32
    %261 = arith.index_cast %c6_i32 : i32 to index
    %c0_101 = arith.constant 0 : index
    %c0_102 = arith.constant 0 : index
    %262 = vector.load %arg11[%261, %c0_101, %c0_102] : memref<8x8x512xf32, #tpu.memory_space<vmem>>, vector<1x8x512xf32>
    %263 = vector.shape_cast %262 : vector<1x8x512xf32> to vector<8x512xf32>
    %cst_103 = arith.constant dense<0.000000e+00> : vector<8x512xf32>
    %264 = tpu.matmul %256, %12, %cst_103 {dimension_numbers = #tpu.dot_dimension_numbers<[1], [0], [0], [1], [0, 0, 1, 1], [], []>} : vector<8x128xbf16>, vector<128x512xbf16>, vector<8x512xf32> -> vector<8x512xf32>
    %265 = arith.addf %263, %264 : vector<8x512xf32>
    %266 = vector.extract_strided_slice %265 {offsets = [0, 0], sizes = [8, 128], strides = [1, 1]} : vector<8x512xf32> to vector<8x128xf32>
    %cst_104 = arith.constant 5.000000e-01 : f32
    %267 = vector.broadcast %cst_104 : f32 to vector<8x128xf32>
    %268 = arith.mulf %267, %266 : vector<8x128xf32>
    %269 = math.tanh %268 : vector<8x128xf32>
    %cst_105 = arith.constant 5.000000e-01 : f32
    %270 = vector.broadcast %cst_105 : f32 to vector<8x128xf32>
    %271 = arith.mulf %270, %269 : vector<8x128xf32>
    %cst_106 = arith.constant 5.000000e-01 : f32
    %272 = vector.broadcast %cst_106 : f32 to vector<8x128xf32>
    %273 = arith.addf %271, %272 : vector<8x128xf32>
    %274 = vector.extract_strided_slice %265 {offsets = [0, 128], sizes = [8, 128], strides = [1, 1]} : vector<8x512xf32> to vector<8x128xf32>
    %cst_107 = arith.constant 5.000000e-01 : f32
    %275 = vector.broadcast %cst_107 : f32 to vector<8x128xf32>
    %276 = arith.mulf %275, %274 : vector<8x128xf32>
    %277 = math.tanh %276 : vector<8x128xf32>
    %cst_108 = arith.constant 5.000000e-01 : f32
    %278 = vector.broadcast %cst_108 : f32 to vector<8x128xf32>
    %279 = arith.mulf %278, %277 : vector<8x128xf32>
    %cst_109 = arith.constant 5.000000e-01 : f32
    %280 = vector.broadcast %cst_109 : f32 to vector<8x128xf32>
    %281 = arith.addf %279, %280 : vector<8x128xf32>
    %282 = vector.extract_strided_slice %265 {offsets = [0, 256], sizes = [8, 128], strides = [1, 1]} : vector<8x512xf32> to vector<8x128xf32>
    %283 = math.tanh %282 : vector<8x128xf32>
    %284 = vector.extract_strided_slice %265 {offsets = [0, 384], sizes = [8, 128], strides = [1, 1]} : vector<8x512xf32> to vector<8x128xf32>
    %cst_110 = arith.constant 5.000000e-01 : f32
    %285 = vector.broadcast %cst_110 : f32 to vector<8x128xf32>
    %286 = arith.mulf %285, %284 : vector<8x128xf32>
    %287 = math.tanh %286 : vector<8x128xf32>
    %cst_111 = arith.constant 5.000000e-01 : f32
    %288 = vector.broadcast %cst_111 : f32 to vector<8x128xf32>
    %289 = arith.mulf %288, %287 : vector<8x128xf32>
    %cst_112 = arith.constant 5.000000e-01 : f32
    %290 = vector.broadcast %cst_112 : f32 to vector<8x128xf32>
    %291 = arith.addf %289, %290 : vector<8x128xf32>
    %292 = arith.mulf %281, %253 : vector<8x128xf32>
    %293 = arith.mulf %273, %283 : vector<8x128xf32>
    %294 = arith.addf %292, %293 : vector<8x128xf32>
    %295 = math.tanh %294 : vector<8x128xf32>
    %296 = arith.mulf %291, %295 : vector<8x128xf32>
    %297 = arith.truncf %296 : vector<8x128xf32> to vector<8x128xbf16>
    %298 = arith.index_cast %c6_i32 : i32 to index
    %c0_113 = arith.constant 0 : index
    %c0_114 = arith.constant 0 : index
    %299 = vector.load %arg8[%298, %c0_113, %c0_114] : memref<8x8x128xbf16, #tpu.memory_space<vmem>>, vector<1x8x128xbf16>
    %300 = vector.shape_cast %299 : vector<1x8x128xbf16> to vector<8x128xbf16>
    %301 = vector.shape_cast %297 : vector<8x128xbf16> to vector<1x8x128xbf16>
    tpu.vector_store %arg8[%298, %c0_113, %c0_114], %301 {strides = array<i32>} : memref<8x8x128xbf16, #tpu.memory_space<vmem>>, vector<1x8x128xbf16>,
    %c7_i32 = arith.constant 7 : i32
    %302 = arith.index_cast %c7_i32 : i32 to index
    %c0_115 = arith.constant 0 : index
    %c0_116 = arith.constant 0 : index
    %303 = vector.load %arg11[%302, %c0_115, %c0_116] : memref<8x8x512xf32, #tpu.memory_space<vmem>>, vector<1x8x512xf32>
    %304 = vector.shape_cast %303 : vector<1x8x512xf32> to vector<8x512xf32>
    %cst_117 = arith.constant dense<0.000000e+00> : vector<8x512xf32>
    %305 = tpu.matmul %297, %12, %cst_117 {dimension_numbers = #tpu.dot_dimension_numbers<[1], [0], [0], [1], [0, 0, 1, 1], [], []>} : vector<8x128xbf16>, vector<128x512xbf16>, vector<8x512xf32> -> vector<8x512xf32>
    %306 = arith.addf %304, %305 : vector<8x512xf32>
    %307 = vector.extract_strided_slice %306 {offsets = [0, 0], sizes = [8, 128], strides = [1, 1]} : vector<8x512xf32> to vector<8x128xf32>
    %cst_118 = arith.constant 5.000000e-01 : f32
    %308 = vector.broadcast %cst_118 : f32 to vector<8x128xf32>
    %309 = arith.mulf %308, %307 : vector<8x128xf32>
    %310 = math.tanh %309 : vector<8x128xf32>
    %cst_119 = arith.constant 5.000000e-01 : f32
    %311 = vector.broadcast %cst_119 : f32 to vector<8x128xf32>
    %312 = arith.mulf %311, %310 : vector<8x128xf32>
    %cst_120 = arith.constant 5.000000e-01 : f32
    %313 = vector.broadcast %cst_120 : f32 to vector<8x128xf32>
    %314 = arith.addf %312, %313 : vector<8x128xf32>
    %315 = vector.extract_strided_slice %306 {offsets = [0, 128], sizes = [8, 128], strides = [1, 1]} : vector<8x512xf32> to vector<8x128xf32>
    %cst_121 = arith.constant 5.000000e-01 : f32
    %316 = vector.broadcast %cst_121 : f32 to vector<8x128xf32>
    %317 = arith.mulf %316, %315 : vector<8x128xf32>
    %318 = math.tanh %317 : vector<8x128xf32>
    %cst_122 = arith.constant 5.000000e-01 : f32
    %319 = vector.broadcast %cst_122 : f32 to vector<8x128xf32>
    %320 = arith.mulf %319, %318 : vector<8x128xf32>
    %cst_123 = arith.constant 5.000000e-01 : f32
    %321 = vector.broadcast %cst_123 : f32 to vector<8x128xf32>
    %322 = arith.addf %320, %321 : vector<8x128xf32>
    %323 = vector.extract_strided_slice %306 {offsets = [0, 256], sizes = [8, 128], strides = [1, 1]} : vector<8x512xf32> to vector<8x128xf32>
    %324 = math.tanh %323 : vector<8x128xf32>
    %325 = vector.extract_strided_slice %306 {offsets = [0, 384], sizes = [8, 128], strides = [1, 1]} : vector<8x512xf32> to vector<8x128xf32>
    %cst_124 = arith.constant 5.000000e-01 : f32
    %326 = vector.broadcast %cst_124 : f32 to vector<8x128xf32>
    %327 = arith.mulf %326, %325 : vector<8x128xf32>
    %328 = math.tanh %327 : vector<8x128xf32>
    %cst_125 = arith.constant 5.000000e-01 : f32
    %329 = vector.broadcast %cst_125 : f32 to vector<8x128xf32>
    %330 = arith.mulf %329, %328 : vector<8x128xf32>
    %cst_126 = arith.constant 5.000000e-01 : f32
    %331 = vector.broadcast %cst_126 : f32 to vector<8x128xf32>
    %332 = arith.addf %330, %331 : vector<8x128xf32>
    %333 = arith.mulf %322, %294 : vector<8x128xf32>
    %334 = arith.mulf %314, %324 : vector<8x128xf32>
    %335 = arith.addf %333, %334 : vector<8x128xf32>
    %336 = math.tanh %335 : vector<8x128xf32>
    %337 = arith.mulf %332, %336 : vector<8x128xf32>
    %338 = arith.truncf %337 : vector<8x128xf32> to vector<8x128xbf16>
    %339 = arith.index_cast %c7_i32 : i32 to index
    %c0_127 = arith.constant 0 : index
    %c0_128 = arith.constant 0 : index
    %340 = vector.load %arg8[%339, %c0_127, %c0_128] : memref<8x8x128xbf16, #tpu.memory_space<vmem>>, vector<1x8x128xbf16>
    %341 = vector.shape_cast %340 : vector<1x8x128xbf16> to vector<8x128xbf16>
    %342 = vector.shape_cast %338 : vector<8x128xbf16> to vector<1x8x128xbf16>
    tpu.vector_store %arg8[%339, %c0_127, %c0_128], %342 {strides = array<i32>} : memref<8x8x128xbf16, #tpu.memory_space<vmem>>, vector<1x8x128xbf16>,
    %c8_i32 = arith.constant 8 : i32
    %c0_129 = arith.constant 0 : index
    %c0_130 = arith.constant 0 : index
    %343 = vector.load %arg12[%c0_129, %c0_130] : memref<8x128xbf16, #tpu.memory_space<vmem>>, vector<8x128xbf16>
    tpu.vector_store %arg12[%c0_129, %c0_130], %338 {strides = array<i32>} : memref<8x128xbf16, #tpu.memory_space<vmem>>, vector<8x128xbf16>,
    %c0_131 = arith.constant 0 : index
    %c0_132 = arith.constant 0 : index
    %344 = vector.load %arg13[%c0_131, %c0_132] : memref<8x128xf32, #tpu.memory_space<vmem>>, vector<8x128xf32>
    tpu.vector_store %arg13[%c0_131, %c0_132], %335 {strides = array<i32>} : memref<8x128xf32, #tpu.memory_space<vmem>>, vector<8x128xf32>,
    %c0_i32_133 = arith.constant 0 : i32
    %345 = arith.cmpi eq, %arg1, %c0_i32_133 : i32
    %346 = arith.extui %345 : i1 to i32
    %c0_i32_134 = arith.constant 0 : i32
    %347 = arith.cmpi ne, %346, %c0_i32_134 : i32
    scf.if %347 {
      %348 = arith.extf %338 : vector<8x128xbf16> to vector<8x128xf32>
      %c0_135 = arith.constant 0 : index
      %c0_136 = arith.constant 0 : index
      %349 = vector.load %arg9[%c0_135, %c0_136] : memref<8x128xf32, #tpu.memory_space<vmem>>, vector<8x128xf32>
      tpu.vector_store %arg9[%c0_135, %c0_136], %348 {strides = array<i32>} : memref<8x128xf32, #tpu.memory_space<vmem>>, vector<8x128xf32>,
      %c0_137 = arith.constant 0 : index
      %c0_138 = arith.constant 0 : index
      %350 = vector.load %arg10[%c0_137, %c0_138] : memref<8x128xf32, #tpu.memory_space<vmem>>, vector<8x128xf32>
      tpu.vector_store %arg10[%c0_137, %c0_138], %335 {strides = array<i32>} : memref<8x128xf32, #tpu.memory_space<vmem>>, vector<8x128xf32>,
    } else {
    }
    return
  }
  func.func @transform_0(%arg0: i32, %arg1: i32) -> (i32, i32, i32) {
    %c0_i32 = arith.constant 0 : i32
    %c0_i32_0 = arith.constant 0 : i32
    return %arg1, %arg0, %c0_i32 : i32, i32, i32
  }
  func.func @transform_1(%arg0: i32, %arg1: i32) -> (i32, i32) {
    %c0_i32 = arith.constant 0 : i32
    %c0_i32_0 = arith.constant 0 : i32
    %c0_i32_1 = arith.constant 0 : i32
    return %c0_i32, %c0_i32_0 : i32, i32
  }
  func.func @transform_2(%arg0: i32, %arg1: i32) -> (i32, i32) {
    %c0_i32 = arith.constant 0 : i32
    %c0_i32_0 = arith.constant 0 : i32
    %c0_i32_1 = arith.constant 0 : i32
    return %c0_i32, %c0_i32_0 : i32, i32
  }
  func.func @transform_3(%arg0: i32, %arg1: i32) -> (i32, i32) {
    %c0_i32 = arith.constant 0 : i32
    %c0_i32_0 = arith.constant 0 : i32
    %c0_i32_1 = arith.constant 0 : i32
    return %c0_i32, %c0_i32_0 : i32, i32
  }
  func.func @transform_4(%arg0: i32, %arg1: i32) -> (i32, i32) {
    %c0_i32 = arith.constant 0 : i32
    %c0_i32_0 = arith.constant 0 : i32
    return %arg0, %c0_i32 : i32, i32
  }
  func.func @transform_5(%arg0: i32, %arg1: i32) -> (i32, i32) {
    %c0_i32 = arith.constant 0 : i32
    %c0_i32_0 = arith.constant 0 : i32
    return %arg0, %c0_i32 : i32, i32
  }
  func.func @transform_6(%arg0: i32, %arg1: i32) -> (i32, i32, i32) {
    %c0_i32 = arith.constant 0 : i32
    %c0_i32_0 = arith.constant 0 : i32
    return %arg1, %arg0, %c0_i32 : i32, i32, i32
  }
  func.func @transform_7(%arg0: i32, %arg1: i32) -> (i32, i32) {
    %c0_i32 = arith.constant 0 : i32
    %c0_i32_0 = arith.constant 0 : i32
    return %arg0, %c0_i32 : i32, i32
  }
  func.func @transform_8(%arg0: i32, %arg1: i32) -> (i32, i32) {
    %c0_i32 = arith.constant 0 : i32
    %c0_i32_0 = arith.constant 0 : i32
    return %arg0, %c0_i32 : i32, i32
  }
}

</mosaic_0001>

<llo_original>
// kernel: music_rnn_forward.5
$region0: #{music_rnn_forward.5}
  #allocation0 [shape = 'u32[]', space=smem, size = 0x4, offset = 0x4, fixed_abs, tag = 'smem constant byte address 0x4 - core index']
  #allocation1 [shape = 'u32[144,128]{1,0:T(1,128)}', space=vmem, size = 0x12000, scoped, tag = 'internal scratch']
  %s0 = inlined_call_operand.vmem [shape: bf16[64,128], index: 0, kind: input, shape index: {}]
  %s1 = inlined_call_operand.vmem [shape: bf16[128,128], index: 1, kind: input, shape index: {}]
  %s2 = inlined_call_operand.vmem [shape: f32[1,128], index: 2, kind: input, shape index: {}]
  %s3 = inlined_call_operand.vmem [shape: f32[64,128], index: 3, kind: output, shape index: {}]
  %s4 = sld [smem:[#allocation0]]
  $region22: #{music_rnn_forward.5} parent=0
    _
  %s6 = ssub.s32 1, %s4
  %s7 = scalar_select 0, %s6, %s4
  // Predicated region
  $region2: #{music_rnn_forward.5} parent=0 // pred_check
    _
  $region3: #{music_rnn_forward.5} parent=0 // pred_check_branch
    %9 = sbr.rel (0) target = $region5
  $region4: #{music_rnn_forward.5} parent=0 // pred_region
    _
  $region5: #{music_rnn_forward.5} parent=0 // pred_fallthru
    _
  // Predicated region
  $region6: #{music_rnn_forward.5} parent=0 // pred_check
    _
  $region7: #{music_rnn_forward.5} parent=0 // pred_check_branch
    %11 = sbr.rel (0) target = $region9
  $region8: #{music_rnn_forward.5} parent=0 // pred_region
    _
  $region9: #{music_rnn_forward.5} parent=0 // pred_fallthru
    _
  // Predicated region
  $region10: #{music_rnn_forward.5} parent=0 // pred_check
    _
  $region11: #{music_rnn_forward.5} parent=0 // pred_check_branch
    %13 = sbr.rel (0) target = $region13
  $region12: #{music_rnn_forward.5} parent=0 // pred_region
    _
  $region13: #{music_rnn_forward.5} parent=0 // pred_fallthru
    _
  %v15 = vld [vmem:[%s0] sm:$0xf]
  %v16 = vld [vmem:[%s0 + $0x4] sm:$0xf]
  %v17 = vld [vmem:[%s0 + $0x8] sm:$0xf]
  %v18 = vld [vmem:[%s0 + $0xc] sm:$0xf]
  %v19 = vld [vmem:[%s0 + $0x10] sm:$0xf]
  %v20 = vld [vmem:[%s0 + $0x14] sm:$0xf]
  %v21 = vld [vmem:[%s0 + $0x18] sm:$0xf]
  %v22 = vld [vmem:[%s0 + $0x1c] sm:$0xf]
  %v23 = vld [vmem:[%s1] sm:$0xf]
  %v24 = vld [vmem:[%s1 + $0x4] sm:$0xf]
  %v25 = vld [vmem:[%s1 + $0x8] sm:$0xf]
  %v26 = vld [vmem:[%s1 + $0xc] sm:$0xf]
  %v27 = vld [vmem:[%s1 + $0x10] sm:$0xf]
  %v28 = vld [vmem:[%s1 + $0x14] sm:$0xf]
  %v29 = vld [vmem:[%s1 + $0x18] sm:$0xf]
  %v30 = vld [vmem:[%s1 + $0x1c] sm:$0xf]
  %v31 = vld [vmem:[%s1 + $0x20] sm:$0xf]
  %v32 = vld [vmem:[%s1 + $0x24] sm:$0xf]
  %v33 = vld [vmem:[%s1 + $0x28] sm:$0xf]
  %v34 = vld [vmem:[%s1 + $0x2c] sm:$0xf]
  %v35 = vld [vmem:[%s1 + $0x30] sm:$0xf]
  %v36 = vld [vmem:[%s1 + $0x34] sm:$0xf]
  %v37 = vld [vmem:[%s1 + $0x38] sm:$0xf]
  %v38 = vld [vmem:[%s1 + $0x3c] sm:$0xf]
  %v39 = vld [vmem:[%s2] sm:$0x1]
  %v41 = vlaneseq
  %v42 = vshrl.u32 %v41, 7
  %v43 = vsub.s32 0, %v42
  %v44 = vrot.slane %v39, %v43
  %v54 = vunpack.c.l.b16 %v15
  %v55 = vunpack.c.l.b16 %v16
  %v56 = vunpack.c.l.b16 %v17
  %v57 = vunpack.c.l.b16 %v18
  %v58 = vunpack.c.l.b16 %v19
  %v59 = vunpack.c.l.b16 %v20
  %v60 = vunpack.c.l.b16 %v21
  %v61 = vunpack.c.l.b16 %v22
  %v62 = vpack.c.b16 %v55, %v54
  %v63 = vpack.c.b16 %v57, %v56
  %v64 = vpack.c.b16 %v59, %v58
  %v65 = vpack.c.b16 %v61, %v60
  %v86 = vunpack.c.l.b16 %v23
  %v87 = vunpack.c.l.b16 %v24
  %v88 = vunpack.c.l.b16 %v25
  %v89 = vunpack.c.l.b16 %v26
  %v90 = vunpack.c.l.b16 %v27
  %v91 = vunpack.c.l.b16 %v28
  %v92 = vunpack.c.l.b16 %v29
  %v93 = vunpack.c.l.b16 %v30
  %v94 = vunpack.c.l.b16 %v31
  %v95 = vunpack.c.l.b16 %v32
  %v96 = vunpack.c.l.b16 %v33
  %v97 = vunpack.c.l.b16 %v34
  %v98 = vunpack.c.l.b16 %v35
  %v99 = vunpack.c.l.b16 %v36
  %v100 = vunpack.c.l.b16 %v37
  %v101 = vunpack.c.l.b16 %v38
  %v102 = vpack.c.b16 %v87, %v86
  %v103 = vpack.c.b16 %v89, %v88
  %v104 = vpack.c.b16 %v91, %v90
  %v105 = vpack.c.b16 %v93, %v92
  %v106 = vpack.c.b16 %v95, %v94
  %v107 = vpack.c.b16 %v97, %v96
  %v108 = vpack.c.b16 %v99, %v98
  %v109 = vpack.c.b16 %v101, %v100
  %118 = vmatprep.subr.bf16.mxu0 0
  %119 = vmatpush1.bf16.msra.mxu0 %v109
  %120 = vmatprep.subr.bf16.mxu0 0
  %121 = vmatpush1.bf16.msra.mxu0 %v108
  %122 = vmatprep.subr.bf16.mxu0 0
  %123 = vmatpush1.bf16.msra.mxu0 %v107
  %124 = vmatprep.subr.bf16.mxu0 0
  %125 = vmatpush1.bf16.msra.mxu0 %v106
  %126 = vmatprep.subr.bf16.mxu0 0
  %127 = vmatpush1.bf16.msra.mxu0 %v105
  %128 = vmatprep.subr.bf16.mxu0 0
  %129 = vmatpush1.bf16.msra.mxu0 %v104
  %130 = vmatprep.subr.bf16.mxu0 0
  %131 = vmatpush1.bf16.msra.mxu0 %v103
  %132 = vmatprep.subr.bf16.mxu0 0
  %133 = vmatpush1.bf16.msra.mxu0 %v102
  %134 = vmatprep.subr.bf16.mxu0 0
  %135 = vmatpush2.bf16.msra.mxu0 0
  %136 = vmatprep.subr.bf16.mxu0 0
  %137 = vmatpush2.bf16.msra.mxu0 0
  %138 = vmatprep.subr.bf16.mxu0 0
  %139 = vmatpush2.bf16.msra.mxu0 0
  %140 = vmatprep.subr.bf16.mxu0 0
  %141 = vmatpush2.bf16.msra.mxu0 0
  %142 = vmatprep.subr.bf16.mxu0 0
  %143 = vmatpush2.bf16.msra.mxu0 0
  %144 = vmatprep.subr.bf16.mxu0 0
  %145 = vmatpush2.bf16.msra.mxu0 0
  %146 = vmatprep.subr.bf16.mxu0 0
  %147 = vmatpush2.bf16.msra.mxu0 0
  %148 = vmatprep.subr.bf16.mxu0 0
  %149 = vmatpush2.bf16.msra.mxu0 0
  %150 = vmatprep.mubr.bf16.mxu0 0
  %151 = vmatmul.mubr.bf16.gmra.mxu0 %v62
  %v152 = vpop.f32.mrf.mxu0
  %v153 = vadd.f32 %v44, %v152
  %v154 = vpop.f32.mrf.mxu0
  %v155 = vpop.f32.mrf.mxu0
  %v156 = vadd.f32 %v44, %v155
  %v157 = vpop.f32.mrf.mxu0
  %158 = vmatprep.mubr.bf16.mxu0 0
  %159 = vmatmul.mubr.bf16.gmra.mxu0 %v63
  %v160 = vpop.f32.mrf.mxu0
  %v161 = vadd.f32 %v44, %v160
  %v162 = vpop.f32.mrf.mxu0
  %v163 = vpop.f32.mrf.mxu0
  %v164 = vadd.f32 %v44, %v163
  %v165 = vpop.f32.mrf.mxu0
  %166 = vmatprep.mubr.bf16.mxu0 0
  %167 = vmatmul.mubr.bf16.gmra.mxu0 %v64
  %v168 = vpop.f32.mrf.mxu0
  %v169 = vadd.f32 %v44, %v168
  %v170 = vpop.f32.mrf.mxu0
  %v171 = vpop.f32.mrf.mxu0
  %v172 = vadd.f32 %v44, %v171
  %v173 = vpop.f32.mrf.mxu0
  %174 = vmatprep.mubr.bf16.mxu0 0
  %175 = vmatmul.mubr.bf16.gmra.mxu0 %v65
  %v176 = vpop.f32.mrf.mxu0
  %v177 = vadd.f32 %v44, %v176
  %v178 = vpop.f32.mrf.mxu0
  %v179 = vpop.f32.mrf.mxu0
  %v180 = vadd.f32 %v44, %v179
  %v181 = vpop.f32.mrf.mxu0
  %182 = vdwg.mxu0
  %183 = vst [vmem:[%s3] sm:$0xff] %v153
  %184 = vst [vmem:[%s3 + $0x8] sm:$0xff] %v156
  %185 = vst [vmem:[%s3 + $0x10] sm:$0xff] %v161
  %186 = vst [vmem:[%s3 + $0x18] sm:$0xff] %v164
  %187 = vst [vmem:[%s3 + $0x20] sm:$0xff] %v169
  %188 = vst [vmem:[%s3 + $0x28] sm:$0xff] %v172
  %189 = vst [vmem:[%s3 + $0x30] sm:$0xff] %v177
  %190 = vst [vmem:[%s3 + $0x38] sm:$0xff] %v180
  // Predicated region
  $region14: #{music_rnn_forward.5} parent=0 // pred_check
    _
  $region15: #{music_rnn_forward.5} parent=0 // pred_check_branch
    %192 = sbr.rel (0) target = $region17
  $region16: #{music_rnn_forward.5} parent=0 // pred_region
    _
  $region17: #{music_rnn_forward.5} parent=0 // pred_fallthru
    _
  // Predicated region
  $region18: #{music_rnn_forward.5} parent=0 // pred_check
    _
  $region19: #{music_rnn_forward.5} parent=0 // pred_check_branch
    %194 = sbr.rel (0) target = $region21
  $region20: #{music_rnn_forward.5} parent=0 // pred_region
    _
  $region21: #{music_rnn_forward.5} parent=0 // pred_fallthru
    _

// kernel: music_rnn_forward.3
$region0: #{music_rnn_forward.3}
  #allocation0 [shape = 'u32[]', space=smem, size = 0x4, offset = 0x4, fixed_abs, tag = 'smem constant byte address 0x4 - core index']
  #allocation1 [shape = 'u32[144,128]{1,0:T(1,128)}', space=vmem, size = 0x12000, scoped, tag = 'internal scratch']
  #allocation2 [shape = 'f32[8,8,512]{2,1,0:T(8,128)}', space=vmem, size = 0x20000, scoped, tag = 'scratch operand']
  #allocation3 [shape = 'bf16[8,128]{1,0:T(8,128)(2,1)}', space=vmem, size = 0x800, scoped, tag = 'scratch operand']
  #allocation4 [shape = 'f32[8,128]{1,0:T(8,128)}', space=vmem, size = 0x1000, scoped, tag = 'scratch operand']
  %s0 = inlined_call_operand.vmem [shape: bf16[8,8,128], index: 0, kind: input, shape index: {}]
  %s1 = inlined_call_operand.hbm [shape: bf16[128,512], index: 1, kind: input, shape index: {}]
  %s2 = inlined_call_operand.vmem [shape: f32[1,512], index: 2, kind: input, shape index: {}]
  %s3 = inlined_call_operand.vmem [shape: bf16[128,512], index: 3, kind: input, shape index: {}]
  %s4 = inlined_call_operand.vmem [shape: f32[8,128], index: 4, kind: input, shape index: {}, may-alias: {4,5}]
  %s5 = inlined_call_operand.vmem [shape: f32[8,128], index: 5, kind: input, shape index: {}, may-alias: {4,5}]
  %s6 = inlined_call_operand.vmem [shape: bf16[8,8,128], index: 6, kind: output, shape index: {0}]
  %s7 = inlined_call_operand.vmem [shape: f32[8,128], index: 7, kind: output, shape index: {1}]
  %s8 = inlined_call_operand.vmem [shape: f32[8,128], index: 8, kind: output, shape index: {2}]
  %9 = xla_tuple %s6, %s7, %s8
  %s10 = sld [smem:[#allocation0]]
  $region62: #{music_rnn_forward.3} parent=0
    _
  %s12 = ssub.s32 1, %s10
  %s13 = scalar_select 0, %s12, %s10
  $region1: #{music_rnn_forward.3} parent=0
    #allocation5 [shape = 'u8[131072]{0}', space=vmem, size = 0x20000, scoped, tag = 'input window, operand 1, single buffered']
    #allocation6 [shape = 's32[1]{0}', space=sflag, size = 0x4, scoped, tag = 'scoped memory for music_rnn_forward.3']
    %14 = vsyncpa [#allocation6], 0
    // Predicated region
    $region2: #{music_rnn_forward.3} parent=1 // pred_check
      _
    $region3: #{music_rnn_forward.3} parent=1 // pred_check_branch
      %16 = sbr.rel (0) target = $region5
    $region4: #{music_rnn_forward.3} parent=1 // pred_region
      _
    $region5: #{music_rnn_forward.3} parent=1 // pred_fallthru
      _
    // Predicated region
    $region6: #{music_rnn_forward.3} parent=1 // pred_check
      _
    $region7: #{music_rnn_forward.3} parent=1 // pred_check_branch
      %18 = sbr.rel (0) target = $region9
    $region8: #{music_rnn_forward.3} parent=1 // pred_region
      %s20 = ssub.s32 4096, 4096
      %21 = vsyncadd [#allocation6], %s20
      %s22 = sshll.u32 [#allocation5], 4
      %s23 = int_to_ptr.vmem [resolvable:$true] %s22
      %28 = dma.hbm_to_vmem [thread:$0]  %s1, 4096, %s23, [#allocation6], 256, 256, 16
    $region9: #{music_rnn_forward.3} parent=1 // pred_fallthru
      _
    // Predicated region
    $region10: #{music_rnn_forward.3} parent=1 // pred_check
      _
    $region11: #{music_rnn_forward.3} parent=1 // pred_check_branch
      %30 = sbr.rel (0) target = $region13
    $region12: #{music_rnn_forward.3} parent=1 // pred_region
      _
    $region13: #{music_rnn_forward.3} parent=1 // pred_fallthru
      _
    // Predicated region
    $region14: #{music_rnn_forward.3} parent=1 // pred_check
      _
    $region15: #{music_rnn_forward.3} parent=1 // pred_check_branch
      %32 = sbr.rel (0) target = $region17
    $region16: #{music_rnn_forward.3} parent=1 // pred_region
      _
    $region17: #{music_rnn_forward.3} parent=1 // pred_fallthru
      _
    // Predicated region
    $region18: #{music_rnn_forward.3} parent=1 // pred_check
      _
    $region19: #{music_rnn_forward.3} parent=1 // pred_check_branch
      %34 = sbr.rel (0) target = $region21
    $region20: #{music_rnn_forward.3} parent=1 // pred_region
      _
    $region21: #{music_rnn_forward.3} parent=1 // pred_fallthru
      _
    // Predicated region
    $region22: #{music_rnn_forward.3} parent=1 // pred_check
      _
    $region23: #{music_rnn_forward.3} parent=1 // pred_check_branch
      %36 = sbr.rel (0) target = $region25
    $region24: #{music_rnn_forward.3} parent=1 // pred_region
      _
    $region25: #{music_rnn_forward.3} parent=1 // pred_fallthru
      _
    // Predicated region
    $region26: #{music_rnn_forward.3} parent=1 // pred_check
      _
    $region27: #{music_rnn_forward.3} parent=1 // pred_check_branch
      %38 = sbr.rel (0) target = $region29
    $region28: #{music_rnn_forward.3} parent=1 // pred_region
      %39 = dma.done [#allocation6], 4096
    $region29: #{music_rnn_forward.3} parent=1 // pred_fallthru
      _
    %p41 = scmp.eq.s32.totalorder 0, 0
    // Predicated region
    $region30: #{music_rnn_forward.3} parent=1 // pred_check
      %p42 = pneg %p41
    $region31: #{music_rnn_forward.3} parent=1 // pred_check_branch
      %44 = sbr.rel (%p42) target = $region33
    $region32: #{music_rnn_forward.3} parent=1 // pred_region
      %v45 = vld [vmem:[%s4] sm:$0xff]
      %v46 = vpack.c.bf16 %v45, %v45
      %47 = vst [vmem:[#allocation3] sm:$0xf] %v46
      %v48 = vld [vmem:[%s5] sm:$0xff]
      %49 = vst [vmem:[#allocation4] sm:$0xff] %v48
    $region33: #{music_rnn_forward.3} parent=1 // pred_fallthru
      _
    %v50 = vld [vmem:[%s0] sm:$0xf]
    %v51 = vld [vmem:[%s0 + $0x4] sm:$0xf]
    %v52 = vld [vmem:[%s0 + $0x8] sm:$0xf]
    %v53 = vld [vmem:[%s0 + $0xc] sm:$0xf]
    %v54 = vld [vmem:[%s0 + $0x10] sm:$0xf]
    %v55 = vld [vmem:[%s0 + $0x14] sm:$0xf]
    %v56 = vld [vmem:[%s0 + $0x18] sm:$0xf]
    %v57 = vld [vmem:[%s0 + $0x1c] sm:$0xf]
    %v58 = vld [vmem:[#allocation5] sm:$0xff]
    %v59 = vld [vmem:[#allocation5 + $0x8] sm:$0xff]
    %v60 = vld [vmem:[#allocation5 + $0x10] sm:$0xff]
    %v61 = vld [vmem:[#allocation5 + $0x18] sm:$0xff]
    %v62 = vld [vmem:[#allocation5 + $0x20] sm:$0xff]
    %v63 = vld [vmem:[#allocation5 + $0x28] sm:$0xff]
    %v64 = vld [vmem:[#allocation5 + $0x30] sm:$0xff]
    %v65 = vld [vmem:[#allocation5 + $0x38] sm:$0xff]
    %v66 = vld [vmem:[#allocation5 + $0x40] sm:$0xff]
    %v67 = vld [vmem:[#allocation5 + $0x48] sm:$0xff]
    %v68 = vld [vmem:[#allocation5 + $0x50] sm:$0xff]
    %v69 = vld [vmem:[#allocation5 + $0x58] sm:$0xff]
    %v70 = vld [vmem:[#allocation5 + $0x60] sm:$0xff]
    %v71 = vld [vmem:[#allocation5 + $0x68] sm:$0xff]
    %v72 = vld [vmem:[#allocation5 + $0x70] sm:$0xff]
    %v73 = vld [vmem:[#allocation5 + $0x78] sm:$0xff]
    %v74 = vld [vmem:[#allocation5 + $0x80] sm:$0xff]
    %v75 = vld [vmem:[#allocation5 + $0x88] sm:$0xff]
    %v76 = vld [vmem:[#allocation5 + $0x90] sm:$0xff]
    %v77 = vld [vmem:[#allocation5 + $0x98] sm:$0xff]
    %v78 = vld [vmem:[#allocation5 + $0xa0] sm:$0xff]
    %v79 = vld [vmem:[#allocation5 + $0xa8] sm:$0xff]
    %v80 = vld [vmem:[#allocation5 + $0xb0] sm:$0xff]
    %v81 = vld [vmem:[#allocation5 + $0xb8] sm:$0xff]
    %v82 = vld [vmem:[#allocation5 + $0xc0] sm:$0xff]
    %v83 = vld [vmem:[#allocation5 + $0xc8] sm:$0xff]
    %v84 = vld [vmem:[#allocation5 + $0xd0] sm:$0xff]
    %v85 = vld [vmem:[#allocation5 + $0xd8] sm:$0xff]
    %v86 = vld [vmem:[#allocation5 + $0xe0] sm:$0xff]
    %v87 = vld [vmem:[#allocation5 + $0xe8] sm:$0xff]
    %v88 = vld [vmem:[#allocation5 + $0xf0] sm:$0xff]
    %v89 = vld [vmem:[#allocation5 + $0xf8] sm:$0xff]
    %v90 = vld [vmem:[%s2] sm:$0xf]
    %v92 = vlaneseq
    %v93 = vshrl.u32 %v92, 7
    %v94 = vsub.s32 0, %v93
    %v95 = vrot.slane %v90, %v94
    %v96 = vlaneseq
    %v97 = vshrl.u32 %v96, 7
    %v98 = vsub.s32 1, %v97
    %v99 = vrot.slane %v90, %v98
    %v100 = vlaneseq
    %v101 = vshrl.u32 %v100, 7
    %v102 = vsub.s32 2, %v101
    %v103 = vrot.slane %v90, %v102
    %v104 = vlaneseq
    %v105 = vshrl.u32 %v104, 7
    %v106 = vsub.s32 3, %v105
    %v107 = vrot.slane %v90, %v106
    %v120 = vunpack.c.l.b16 %v50
    %v121 = vunpack.c.l.b16 %v51
    %v122 = vunpack.c.l.b16 %v52
    %v123 = vunpack.c.l.b16 %v53
    %v124 = vunpack.c.l.b16 %v54
    %v125 = vunpack.c.l.b16 %v55
    %v126 = vunpack.c.l.b16 %v56
    %v127 = vunpack.c.l.b16 %v57
    %v128 = vpack.c.b16 %v121, %v120
    %v129 = vpack.c.b16 %v123, %v122
    %v130 = vpack.c.b16 %v125, %v124
    %v131 = vpack.c.b16 %v127, %v126
    %v168 = vunpack.c.l.b16 %v58
    %v169 = vunpack.c.h.b16 %v58
    %v170 = vunpack.c.l.b16 %v59
    %v171 = vunpack.c.h.b16 %v59
    %v172 = vunpack.c.l.b16 %v60
    %v173 = vunpack.c.h.b16 %v60
    %v174 = vunpack.c.l.b16 %v61
    %v175 = vunpack.c.h.b16 %v61
    %v176 = vunpack.c.l.b16 %v62
    %v177 = vunpack.c.h.b16 %v62
    %v178 = vunpack.c.l.b16 %v63
    %v179 = vunpack.c.h.b16 %v63
    %v180 = vunpack.c.l.b16 %v64
    %v181 = vunpack.c.h.b16 %v64
    %v182 = vunpack.c.l.b16 %v65
    %v183 = vunpack.c.h.b16 %v65
    %v184 = vunpack.c.l.b16 %v66
    %v185 = vunpack.c.h.b16 %v66
    %v186 = vunpack.c.l.b16 %v67
    %v187 = vunpack.c.h.b16 %v67
    %v188 = vunpack.c.l.b16 %v68
    %v189 = vunpack.c.h.b16 %v68
    %v190 = vunpack.c.l.b16 %v69
    %v191 = vunpack.c.h.b16 %v69
    %v192 = vunpack.c.l.b16 %v70
    %v193 = vunpack.c.h.b16 %v70
    %v194 = vunpack.c.l.b16 %v71
    %v195 = vunpack.c.h.b16 %v71
    %v196 = vunpack.c.l.b16 %v72
    %v197 = vunpack.c.h.b16 %v72
    %v198 = vunpack.c.l.b16 %v73
    %v199 = vunpack.c.h.b16 %v73
    %v200 = vunpack.c.l.b16 %v74
    %v201 = vunpack.c.h.b16 %v74
    %v202 = vunpack.c.l.b16 %v75
    %v203 = vunpack.c.h.b16 %v75
    %v204 = vunpack.c.l.b16 %v76
    %v205 = vunpack.c.h.b16 %v76
    %v206 = vunpack.c.l.b16 %v77
    %v207 = vunpack.c.h.b16 %v77
    %v208 = vunpack.c.l.b16 %v78
    %v209 = vunpack.c.h.b16 %v78
    %v210 = vunpack.c.l.b16 %v79
    %v211 = vunpack.c.h.b16 %v79
    %v212 = vunpack.c.l.b16 %v80
    %v213 = vunpack.c.h.b16 %v80
    %v214 = vunpack.c.l.b16 %v81
    %v215 = vunpack.c.h.b16 %v81
    %v216 = vunpack.c.l.b16 %v82
    %v217 = vunpack.c.h.b16 %v82
    %v218 = vunpack.c.l.b16 %v83
    %v219 = vunpack.c.h.b16 %v83
    %v220 = vunpack.c.l.b16 %v84
    %v221 = vunpack.c.h.b16 %v84
    %v222 = vunpack.c.l.b16 %v85
    %v223 = vunpack.c.h.b16 %v85
    %v224 = vunpack.c.l.b16 %v86
    %v225 = vunpack.c.h.b16 %v86
    %v226 = vunpack.c.l.b16 %v87
    %v227 = vunpack.c.h.b16 %v87
    %v228 = vunpack.c.l.b16 %v88
    %v229 = vunpack.c.h.b16 %v88
    %v230 = vunpack.c.l.b16 %v89
    %v231 = vunpack.c.h.b16 %v89
    %v232 = vpack.c.b16 %v172, %v168
    %v233 = vpack.c.b16 %v173, %v169
    %v234 = vpack.c.b16 %v174, %v170
    %v235 = vpack.c.b16 %v175, %v171
    %v236 = vpack.c.b16 %v180, %v176
    %v237 = vpack.c.b16 %v181, %v177
    %v238 = vpack.c.b16 %v182, %v178
    %v239 = vpack.c.b16 %v183, %v179
    %v240 = vpack.c.b16 %v188, %v184
    %v241 = vpack.c.b16 %v189, %v185
    %v242 = vpack.c.b16 %v190, %v186
    %v243 = vpack.c.b16 %v191, %v187
    %v244 = vpack.c.b16 %v196, %v192
    %v245 = vpack.c.b16 %v197, %v193
    %v246 = vpack.c.b16 %v198, %v194
    %v247 = vpack.c.b16 %v199, %v195
    %v248 = vpack.c.b16 %v204, %v200
    %v249 = vpack.c.b16 %v205, %v201
    %v250 = vpack.c.b16 %v206, %v202
    %v251 = vpack.c.b16 %v207, %v203
    %v252 = vpack.c.b16 %v212, %v208
    %v253 = vpack.c.b16 %v213, %v209
    %v254 = vpack.c.b16 %v214, %v210
    %v255 = vpack.c.b16 %v215, %v211
    %v256 = vpack.c.b16 %v220, %v216
    %v257 = vpack.c.b16 %v221, %v217
    %v258 = vpack.c.b16 %v222, %v218
    %v259 = vpack.c.b16 %v223, %v219
    %v260 = vpack.c.b16 %v228, %v224
    %v261 = vpack.c.b16 %v229, %v225
    %v262 = vpack.c.b16 %v230, %v226
    %v263 = vpack.c.b16 %v231, %v227
    %296 = vmatprep.subr.bf16.mxu0 %v261
    %297 = vmatpush1.bf16.msra.mxu0 %v260
    %298 = vmatprep.subr.bf16.mxu0 %v257
    %299 = vmatpush1.bf16.msra.mxu0 %v256
    %300 = vmatprep.subr.bf16.mxu0 %v253
    %301 = vmatpush1.bf16.msra.mxu0 %v252
    %302 = vmatprep.subr.bf16.mxu0 %v249
    %303 = vmatpush1.bf16.msra.mxu0 %v248
    %304 = vmatprep.subr.bf16.mxu0 %v245
    %305 = vmatpush1.bf16.msra.mxu0 %v244
    %306 = vmatprep.subr.bf16.mxu0 %v241
    %307 = vmatpush1.bf16.msra.mxu0 %v240
    %308 = vmatprep.subr.bf16.mxu0 %v237
    %309 = vmatpush1.bf16.msra.mxu0 %v236
    %310 = vmatprep.subr.bf16.mxu0 %v233
    %311 = vmatpush1.bf16.msra.mxu0 %v232
    %312 = vmatprep.subr.bf16.mxu0 0
    %313 = vmatpush2.bf16.msra.mxu0 0
    %314 = vmatprep.subr.bf16.mxu0 0
    %315 = vmatpush2.bf16.msra.mxu0 0
    %316 = vmatprep.subr.bf16.mxu0 0
    %317 = vmatpush2.bf16.msra.mxu0 0
    %318 = vmatprep.subr.bf16.mxu0 0
    %319 = vmatpush2.bf16.msra.mxu0 0
    %320 = vmatprep.subr.bf16.mxu0 0
    %321 = vmatpush2.bf16.msra.mxu0 0
    %322 = vmatprep.subr.bf16.mxu0 0
    %323 = vmatpush2.bf16.msra.mxu0 0
    %324 = vmatprep.subr.bf16.mxu0 0
    %325 = vmatpush2.bf16.msra.mxu0 0
    %326 = vmatprep.subr.bf16.mxu0 0
    %327 = vmatpush2.bf16.msra.mxu0 0
    %328 = vmatprep.mubr.bf16.mxu0 0
    %329 = vmatmul.mubr.bf16.gmra.mxu0 %v128
    %v330 = vpop.f32.mrf.mxu0
    %v331 = vadd.f32 %v95, %v330
    %v332 = vpop.f32.mrf.mxu0
    %v333 = vadd.f32 %v99, %v332
    %v334 = vpop.f32.mrf.mxu0
    %v335 = vadd.f32 %v95, %v334
    %v336 = vpop.f32.mrf.mxu0
    %v337 = vadd.f32 %v99, %v336
    %338 = vmatprep.mubr.bf16.mxu0 0
    %339 = vmatmul.mubr.bf16.gmra.mxu0 %v129
    %v340 = vpop.f32.mrf.mxu0
    %v341 = vadd.f32 %v95, %v340
    %v342 = vpop.f32.mrf.mxu0
    %v343 = vadd.f32 %v99, %v342
    %v344 = vpop.f32.mrf.mxu0
    %v345 = vadd.f32 %v95, %v344
    %v346 = vpop.f32.mrf.mxu0
    %v347 = vadd.f32 %v99, %v346
    %348 = vmatprep.mubr.bf16.mxu0 0
    %349 = vmatmul.mubr.bf16.gmra.mxu0 %v130
    %v350 = vpop.f32.mrf.mxu0
    %v351 = vadd.f32 %v95, %v350
    %v352 = vpop.f32.mrf.mxu0
    %v353 = vadd.f32 %v99, %v352
    %v354 = vpop.f32.mrf.mxu0
    %v355 = vadd.f32 %v95, %v354
    %v356 = vpop.f32.mrf.mxu0
    %v357 = vadd.f32 %v99, %v356
    %358 = vmatprep.mubr.bf16.mxu0 0
    %359 = vmatmul.mubr.bf16.gmra.mxu0 %v131
    %v360 = vpop.f32.mrf.mxu0
    %v361 = vadd.f32 %v95, %v360
    %v362 = vpop.f32.mrf.mxu0
    %v363 = vadd.f32 %v99, %v362
    %v364 = vpop.f32.mrf.mxu0
    %v365 = vadd.f32 %v95, %v364
    %v366 = vpop.f32.mrf.mxu0
    %v367 = vadd.f32 %v99, %v366
    %368 = vdwg.mxu0
    %369 = vmatprep.subr.bf16.mxu0 %v263
    %370 = vmatpush1.bf16.msra.mxu0 %v262
    %371 = vmatprep.subr.bf16.mxu0 %v259
    %372 = vmatpush1.bf16.msra.mxu0 %v258
    %373 = vmatprep.subr.bf16.mxu0 %v255
    %374 = vmatpush1.bf16.msra.mxu0 %v254
    %375 = vmatprep.subr.bf16.mxu0 %v251
    %376 = vmatpush1.bf16.msra.mxu0 %v250
    %377 = vmatprep.subr.bf16.mxu0 %v247
    %378 = vmatpush1.bf16.msra.mxu0 %v246
    %379 = vmatprep.subr.bf16.mxu0 %v243
    %380 = vmatpush1.bf16.msra.mxu0 %v242
    %381 = vmatprep.subr.bf16.mxu0 %v239
    %382 = vmatpush1.bf16.msra.mxu0 %v238
    %383 = vmatprep.subr.bf16.mxu0 %v235
    %384 = vmatpush1.bf16.msra.mxu0 %v234
    %385 = vmatprep.subr.bf16.mxu0 0
    %386 = vmatpush2.bf16.msra.mxu0 0
    %387 = vmatprep.subr.bf16.mxu0 0
    %388 = vmatpush2.bf16.msra.mxu0 0
    %389 = vmatprep.subr.bf16.mxu0 0
    %390 = vmatpush2.bf16.msra.mxu0 0
    %391 = vmatprep.subr.bf16.mxu0 0
    %392 = vmatpush2.bf16.msra.mxu0 0
    %393 = vmatprep.subr.bf16.mxu0 0
    %394 = vmatpush2.bf16.msra.mxu0 0
    %395 = vmatprep.subr.bf16.mxu0 0
    %396 = vmatpush2.bf16.msra.mxu0 0
    %397 = vmatprep.subr.bf16.mxu0 0
    %398 = vmatpush2.bf16.msra.mxu0 0
    %399 = vmatprep.subr.bf16.mxu0 0
    %400 = vmatpush2.bf16.msra.mxu0 0
    %401 = vmatprep.mubr.bf16.mxu0 0
    %402 = vmatmul.mubr.bf16.gmra.mxu0 %v128
    %v403 = vpop.f32.mrf.mxu0
    %v404 = vadd.f32 %v103, %v403
    %v405 = vpop.f32.mrf.mxu0
    %v406 = vadd.f32 %v107, %v405
    %v407 = vpop.f32.mrf.mxu0
    %v408 = vadd.f32 %v103, %v407
    %v409 = vpop.f32.mrf.mxu0
    %v410 = vadd.f32 %v107, %v409
    %411 = vmatprep.mubr.bf16.mxu0 0
    %412 = vmatmul.mubr.bf16.gmra.mxu0 %v129
    %v413 = vpop.f32.mrf.mxu0
    %v414 = vadd.f32 %v103, %v413
    %v415 = vpop.f32.mrf.mxu0
    %v416 = vadd.f32 %v107, %v415
    %v417 = vpop.f32.mrf.mxu0
    %v418 = vadd.f32 %v103, %v417
    %v419 = vpop.f32.mrf.mxu0
    %v420 = vadd.f32 %v107, %v419
    %421 = vmatprep.mubr.bf16.mxu0 0
    %422 = vmatmul.mubr.bf16.gmra.mxu0 %v130
    %v423 = vpop.f32.mrf.mxu0
    %v424 = vadd.f32 %v103, %v423
    %v425 = vpop.f32.mrf.mxu0
    %v426 = vadd.f32 %v107, %v425
    %v427 = vpop.f32.mrf.mxu0
    %v428 = vadd.f32 %v103, %v427
    %v429 = vpop.f32.mrf.mxu0
    %v430 = vadd.f32 %v107, %v429
    %431 = vmatprep.mubr.bf16.mxu0 0
    %432 = vmatmul.mubr.bf16.gmra.mxu0 %v131
    %v433 = vpop.f32.mrf.mxu0
    %v434 = vadd.f32 %v103, %v433
    %v435 = vpop.f32.mrf.mxu0
    %v436 = vadd.f32 %v107, %v435
    %v437 = vpop.f32.mrf.mxu0
    %v438 = vadd.f32 %v103, %v437
    %v439 = vpop.f32.mrf.mxu0
    %v440 = vadd.f32 %v107, %v439
    %441 = vdwg.mxu0
    %442 = vst [vmem:[#allocation2] sm:$0xff] %v331
    %443 = vst [vmem:[#allocation2 + $0x8] sm:$0xff] %v333
    %444 = vst [vmem:[#allocation2 + $0x10] sm:$0xff] %v404
    %445 = vst [vmem:[#allocation2 + $0x18] sm:$0xff] %v406
    %446 = vst [vmem:[#allocation2 + $0x20] sm:$0xff] %v335
    %447 = vst [vmem:[#allocation2 + $0x28] sm:$0xff] %v337
    %448 = vst [vmem:[#allocation2 + $0x30] sm:$0xff] %v408
    %449 = vst [vmem:[#allocation2 + $0x38] sm:$0xff] %v410
    %450 = vst [vmem:[#allocation2 + $0x40] sm:$0xff] %v341
    %451 = vst [vmem:[#allocation2 + $0x48] sm:$0xff] %v343
    %452 = vst [vmem:[#allocation2 + $0x50] sm:$0xff] %v414
    %453 = vst [vmem:[#allocation2 + $0x58] sm:$0xff] %v416
    %454 = vst [vmem:[#allocation2 + $0x60] sm:$0xff] %v345
    %455 = vst [vmem:[#allocation2 + $0x68] sm:$0xff] %v347
    %456 = vst [vmem:[#allocation2 + $0x70] sm:$0xff] %v418
    %457 = vst [vmem:[#allocation2 + $0x78] sm:$0xff] %v420
    %458 = vst [vmem:[#allocation2 + $0x80] sm:$0xff] %v351
    %459 = vst [vmem:[#allocation2 + $0x88] sm:$0xff] %v353
    %460 = vst [vmem:[#allocation2 + $0x90] sm:$0xff] %v424
    %461 = vst [vmem:[#allocation2 + $0x98] sm:$0xff] %v426
    %462 = vst [vmem:[#allocation2 + $0xa0] sm:$0xff] %v355
    %463 = vst [vmem:[#allocation2 + $0xa8] sm:$0xff] %v357
    %464 = vst [vmem:[#allocation2 + $0xb0] sm:$0xff] %v428
    %465 = vst [vmem:[#allocation2 + $0xb8] sm:$0xff] %v430
    %466 = vst [vmem:[#allocation2 + $0xc0] sm:$0xff] %v361
    %467 = vst [vmem:[#allocation2 + $0xc8] sm:$0xff] %v363
    %468 = vst [vmem:[#allocation2 + $0xd0] sm:$0xff] %v434
    %469 = vst [vmem:[#allocation2 + $0xd8] sm:$0xff] %v436
    %470 = vst [vmem:[#allocation2 + $0xe0] sm:$0xff] %v365
    %471 = vst [vmem:[#allocation2 + $0xe8] sm:$0xff] %v367
    %472 = vst [vmem:[#allocation2 + $0xf0] sm:$0xff] %v438
    %473 = vst [vmem:[#allocation2 + $0xf8] sm:$0xff] %v440
    %v474 = vld [vmem:[%s3] sm:$0xff]
    %v475 = vld [vmem:[%s3 + $0x8] sm:$0xff]
    %v476 = vld [vmem:[%s3 + $0x10] sm:$0xff]
    %v477 = vld [vmem:[%s3 + $0x18] sm:$0xff]
    %v478 = vld [vmem:[%s3 + $0x20] sm:$0xff]
    %v479 = vld [vmem:[%s3 + $0x28] sm:$0xff]
    %v480 = vld [vmem:[%s3 + $0x30] sm:$0xff]
    %v481 = vld [vmem:[%s3 + $0x38] sm:$0xff]
    %v482 = vld [vmem:[%s3 + $0x40] sm:$0xff]
    %v483 = vld [vmem:[%s3 + $0x48] sm:$0xff]
    %v484 = vld [vmem:[%s3 + $0x50] sm:$0xff]
    %v485 = vld [vmem:[%s3 + $0x58] sm:$0xff]
    %v486 = vld [vmem:[%s3 + $0x60] sm:$0xff]
    %v487 = vld [vmem:[%s3 + $0x68] sm:$0xff]
    %v488 = vld [vmem:[%s3 + $0x70] sm:$0xff]
    %v489 = vld [vmem:[%s3 + $0x78] sm:$0xff]
    %v490 = vld [vmem:[%s3 + $0x80] sm:$0xff]
    %v491 = vld [vmem:[%s3 + $0x88] sm:$0xff]
    %v492 = vld [vmem:[%s3 + $0x90] sm:$0xff]
    %v493 = vld [vmem:[%s3 + $0x98] sm:$0xff]
    %v494 = vld [vmem:[%s3 + $0xa0] sm:$0xff]
    %v495 = vld [vmem:[%s3 + $0xa8] sm:$0xff]
    %v496 = vld [vmem:[%s3 + $0xb0] sm:$0xff]
    %v497 = vld [vmem:[%s3 + $0xb8] sm:$0xff]
    %v498 = vld [vmem:[%s3 + $0xc0] sm:$0xff]
    %v499 = vld [vmem:[%s3 + $0xc8] sm:$0xff]
    %v500 = vld [vmem:[%s3 + $0xd0] sm:$0xff]
    %v501 = vld [vmem:[%s3 + $0xd8] sm:$0xff]
    %v502 = vld [vmem:[%s3 + $0xe0] sm:$0xff]
    %v503 = vld [vmem:[%s3 + $0xe8] sm:$0xff]
    %v504 = vld [vmem:[%s3 + $0xf0] sm:$0xff]
    %v505 = vld [vmem:[%s3 + $0xf8] sm:$0xff]
    %v506 = vld [vmem:[#allocation3] sm:$0xf]
    %v507 = vld [vmem:[#allocation4] sm:$0xff]
    %v508 = vld [vmem:[#allocation2] sm:$0xff]
    %v509 = vld [vmem:[#allocation2 + $0x8] sm:$0xff]
    %v510 = vld [vmem:[#allocation2 + $0x10] sm:$0xff]
    %v511 = vld [vmem:[#allocation2 + $0x18] sm:$0xff]
    %v544 = vunpack.c.l.b16 %v474
    %v545 = vunpack.c.h.b16 %v474
    %v546 = vunpack.c.l.b16 %v475
    %v547 = vunpack.c.h.b16 %v475
    %v548 = vunpack.c.l.b16 %v476
    %v549 = vunpack.c.h.b16 %v476
    %v550 = vunpack.c.l.b16 %v477
    %v551 = vunpack.c.h.b16 %v477
    %v552 = vunpack.c.l.b16 %v478
    %v553 = vunpack.c.h.b16 %v478
    %v554 = vunpack.c.l.b16 %v479
    %v555 = vunpack.c.h.b16 %v479
    %v556 = vunpack.c.l.b16 %v480
    %v557 = vunpack.c.h.b16 %v480
    %v558 = vunpack.c.l.b16 %v481
    %v559 = vunpack.c.h.b16 %v481
    %v560 = vunpack.c.l.b16 %v482
    %v561 = vunpack.c.h.b16 %v482
    %v562 = vunpack.c.l.b16 %v483
    %v563 = vunpack.c.h.b16 %v483
    %v564 = vunpack.c.l.b16 %v484
    %v565 = vunpack.c.h.b16 %v484
    %v566 = vunpack.c.l.b16 %v485
    %v567 = vunpack.c.h.b16 %v485
    %v568 = vunpack.c.l.b16 %v486
    %v569 = vunpack.c.h.b16 %v486
    %v570 = vunpack.c.l.b16 %v487
    %v571 = vunpack.c.h.b16 %v487
    %v572 = vunpack.c.l.b16 %v488
    %v573 = vunpack.c.h.b16 %v488
    %v574 = vunpack.c.l.b16 %v489
    %v575 = vunpack.c.h.b16 %v489
    %v576 = vunpack.c.l.b16 %v490
    %v577 = vunpack.c.h.b16 %v490
    %v578 = vunpack.c.l.b16 %v491
    %v579 = vunpack.c.h.b16 %v491
    %v580 = vunpack.c.l.b16 %v492
    %v581 = vunpack.c.h.b16 %v492
    %v582 = vunpack.c.l.b16 %v493
    %v583 = vunpack.c.h.b16 %v493
    %v584 = vunpack.c.l.b16 %v494
    %v585 = vunpack.c.h.b16 %v494
    %v586 = vunpack.c.l.b16 %v495
    %v587 = vunpack.c.h.b16 %v495
    %v588 = vunpack.c.l.b16 %v496
    %v589 = vunpack.c.h.b16 %v496
    %v590 = vunpack.c.l.b16 %v497
    %v591 = vunpack.c.h.b16 %v497
    %v592 = vunpack.c.l.b16 %v498
    %v593 = vunpack.c.h.b16 %v498
    %v594 = vunpack.c.l.b16 %v499
    %v595 = vunpack.c.h.b16 %v499
    %v596 = vunpack.c.l.b16 %v500
    %v597 = vunpack.c.h.b16 %v500
    %v598 = vunpack.c.l.b16 %v501
    %v599 = vunpack.c.h.b16 %v501
    %v600 = vunpack.c.l.b16 %v502
    %v601 = vunpack.c.h.b16 %v502
    %v602 = vunpack.c.l.b16 %v503
    %v603 = vunpack.c.h.b16 %v503
    %v604 = vunpack.c.l.b16 %v504
    %v605 = vunpack.c.h.b16 %v504
    %v606 = vunpack.c.l.b16 %v505
    %v607 = vunpack.c.h.b16 %v505
    %v608 = vpack.c.b16 %v548, %v544
    %v609 = vpack.c.b16 %v549, %v545
    %v610 = vpack.c.b16 %v550, %v546
    %v611 = vpack.c.b16 %v551, %v547
    %v612 = vpack.c.b16 %v556, %v552
    %v613 = vpack.c.b16 %v557, %v553
    %v614 = vpack.c.b16 %v558, %v554
    %v615 = vpack.c.b16 %v559, %v555
    %v616 = vpack.c.b16 %v564, %v560
    %v617 = vpack.c.b16 %v565, %v561
    %v618 = vpack.c.b16 %v566, %v562
    %v619 = vpack.c.b16 %v567, %v563
    %v620 = vpack.c.b16 %v572, %v568
    %v621 = vpack.c.b16 %v573, %v569
    %v622 = vpack.c.b16 %v574, %v570
    %v623 = vpack.c.b16 %v575, %v571
    %v624 = vpack.c.b16 %v580, %v576
    %v625 = vpack.c.b16 %v581, %v577
    %v626 = vpack.c.b16 %v582, %v578
    %v627 = vpack.c.b16 %v583, %v579
    %v628 = vpack.c.b16 %v588, %v584
    %v629 = vpack.c.b16 %v589, %v585
    %v630 = vpack.c.b16 %v590, %v586
    %v631 = vpack.c.b16 %v591, %v587
    %v632 = vpack.c.b16 %v596, %v592
    %v633 = vpack.c.b16 %v597, %v593
    %v634 = vpack.c.b16 %v598, %v594
    %v635 = vpack.c.b16 %v599, %v595
    %v636 = vpack.c.b16 %v604, %v600
    %v637 = vpack.c.b16 %v605, %v601
    %v638 = vpack.c.b16 %v606, %v602
    %v639 = vpack.c.b16 %v607, %v603
    %672 = vmatprep.subr.bf16.mxu0 %v637
    %673 = vmatpush1.bf16.msra.mxu0 %v636
    %674 = vmatprep.subr.bf16.mxu0 %v633
    %675 = vmatpush1.bf16.msra.mxu0 %v632
    %676 = vmatprep.subr.bf16.mxu0 %v629
    %677 = vmatpush1.bf16.msra.mxu0 %v628
    %678 = vmatprep.subr.bf16.mxu0 %v625
    %679 = vmatpush1.bf16.msra.mxu0 %v624
    %680 = vmatprep.subr.bf16.mxu0 %v621
    %681 = vmatpush1.bf16.msra.mxu0 %v620
    %682 = vmatprep.subr.bf16.mxu0 %v617
    %683 = vmatpush1.bf16.msra.mxu0 %v616
    %684 = vmatprep.subr.bf16.mxu0 %v613
    %685 = vmatpush1.bf16.msra.mxu0 %v612
    %686 = vmatprep.subr.bf16.mxu0 %v609
    %687 = vmatpush1.bf16.msra.mxu0 %v608
    %688 = vmatprep.subr.bf16.mxu0 0
    %689 = vmatpush2.bf16.msra.mxu0 0
    %690 = vmatprep.subr.bf16.mxu0 0
    %691 = vmatpush2.bf16.msra.mxu0 0
    %692 = vmatprep.subr.bf16.mxu0 0
    %693 = vmatpush2.bf16.msra.mxu0 0
    %694 = vmatprep.subr.bf16.mxu0 0
    %695 = vmatpush2.bf16.msra.mxu0 0
    %696 = vmatprep.subr.bf16.mxu0 0
    %697 = vmatpush2.bf16.msra.mxu0 0
    %698 = vmatprep.subr.bf16.mxu0 0
    %699 = vmatpush2.bf16.msra.mxu0 0
    %700 = vmatprep.subr.bf16.mxu0 0
    %701 = vmatpush2.bf16.msra.mxu0 0
    %702 = vmatprep.subr.bf16.mxu0 0
    %703 = vmatpush2.bf16.msra.mxu0 0
    %704 = vmatprep.mubr.bf16.mxu0 0
    %705 = vmatmul.mubr.bf16.gmra.mxu0 %v506
    %v706 = vpop.f32.mrf.mxu0
    %v707 = vadd.f32 0.0, %v706
    %v708 = vpop.f32.mrf.mxu0
    %v709 = vadd.f32 0.0, %v708
    %v710 = vpop.f32.mrf.mxu0
    %v711 = vpop.f32.mrf.mxu0
    %712 = vdwg.mxu0
    %713 = vmatprep.subr.bf16.mxu0 %v639
    %714 = vmatpush1.bf16.msra.mxu0 %v638
    %715 = vmatprep.subr.bf16.mxu0 %v635
    %716 = vmatpush1.bf16.msra.mxu0 %v634
    %717 = vmatprep.subr.bf16.mxu0 %v631
    %718 = vmatpush1.bf16.msra.mxu0 %v630
    %719 = vmatprep.subr.bf16.mxu0 %v627
    %720 = vmatpush1.bf16.msra.mxu0 %v626
    %721 = vmatprep.subr.bf16.mxu0 %v623
    %722 = vmatpush1.bf16.msra.mxu0 %v622
    %723 = vmatprep.subr.bf16.mxu0 %v619
    %724 = vmatpush1.bf16.msra.mxu0 %v618
    %725 = vmatprep.subr.bf16.mxu0 %v615
    %726 = vmatpush1.bf16.msra.mxu0 %v614
    %727 = vmatprep.subr.bf16.mxu0 %v611
    %728 = vmatpush1.bf16.msra.mxu0 %v610
    %729 = vmatprep.subr.bf16.mxu0 0
    %730 = vmatpush2.bf16.msra.mxu0 0
    %731 = vmatprep.subr.bf16.mxu0 0
    %732 = vmatpush2.bf16.msra.mxu0 0
    %733 = vmatprep.subr.bf16.mxu0 0
    %734 = vmatpush2.bf16.msra.mxu0 0
    %735 = vmatprep.subr.bf16.mxu0 0
    %736 = vmatpush2.bf16.msra.mxu0 0
    %737 = vmatprep.subr.bf16.mxu0 0
    %738 = vmatpush2.bf16.msra.mxu0 0
    %739 = vmatprep.subr.bf16.mxu0 0
    %740 = vmatpush2.bf16.msra.mxu0 0
    %741 = vmatprep.subr.bf16.mxu0 0
    %742 = vmatpush2.bf16.msra.mxu0 0
    %743 = vmatprep.subr.bf16.mxu0 0
    %744 = vmatpush2.bf16.msra.mxu0 0
    %745 = vmatprep.mubr.bf16.mxu0 0
    %746 = vmatmul.mubr.bf16.gmra.mxu0 %v506
    %v747 = vpop.f32.mrf.mxu0
    %v748 = vadd.f32 0.0, %v747
    %v749 = vpop.f32.mrf.mxu0
    %v750 = vadd.f32 0.0, %v749
    %v751 = vpop.f32.mrf.mxu0
    %v752 = vpop.f32.mrf.mxu0
    %753 = vdwg.mxu0
    %v754 = vadd.f32 %v508, %v707
    %v755 = vadd.f32 %v509, %v709
    %v756 = vadd.f32 %v510, %v748
    %v757 = vadd.f32 %v511, %v750
    %v758 = vmul.f32 %v754, 0.5
    %v759 = vtanh.pop %v758
    %v760 = vmul.f32 %v759, 0.5
    %v761 = vadd.f32 %v760, 0.5
    %v762 = vmul.f32 %v755, 0.5
    %v763 = vtanh.pop %v762
    %v764 = vmul.f32 %v763, 0.5
    %v765 = vadd.f32 %v764, 0.5
    %v766 = vtanh.pop %v756
    %v767 = vmul.f32 %v757, 0.5
    %v768 = vtanh.pop %v767
    %v769 = vmul.f32 %v768, 0.5
    %v770 = vadd.f32 %v769, 0.5
    %v771 = vmul.f32 %v765, %v507
    %v772 = vmul.f32 %v761, %v766
    %v773 = vadd.f32 %v771, %v772
    %v774 = vtanh.pop %v773
    %v775 = vmul.f32 %v770, %v774
    %v776 = vpack.c.bf16 %v775, %v775
    %777 = vst [vmem:[%s6] sm:$0xf] %v776
    %s778 = scalar_lea.vmem [#allocation2], 32
    %v779 = vld [vmem:[%s778] sm:$0xff]
    %v780 = vld [vmem:[%s778 + $0x8] sm:$0xff]
    %v781 = vld [vmem:[%s778 + $0x10] sm:$0xff]
    %v782 = vld [vmem:[%s778 + $0x18] sm:$0xff]
    %783 = vmatprep.subr.bf16.mxu0 %v637
    %784 = vmatpush1.bf16.msra.mxu0 %v636
    %785 = vmatprep.subr.bf16.mxu0 %v633
    %786 = vmatpush1.bf16.msra.mxu0 %v632
    %787 = vmatprep.subr.bf16.mxu0 %v629
    %788 = vmatpush1.bf16.msra.mxu0 %v628
    %789 = vmatprep.subr.bf16.mxu0 %v625
    %790 = vmatpush1.bf16.msra.mxu0 %v624
    %791 = vmatprep.subr.bf16.mxu0 %v621
    %792 = vmatpush1.bf16.msra.mxu0 %v620
    %793 = vmatprep.subr.bf16.mxu0 %v617
    %794 = vmatpush1.bf16.msra.mxu0 %v616
    %795 = vmatprep.subr.bf16.mxu0 %v613
    %796 = vmatpush1.bf16.msra.mxu0 %v612
    %797 = vmatprep.subr.bf16.mxu0 %v609
    %798 = vmatpush1.bf16.msra.mxu0 %v608
    %799 = vmatprep.subr.bf16.mxu0 0
    %800 = vmatpush2.bf16.msra.mxu0 0
    %801 = vmatprep.subr.bf16.mxu0 0
    %802 = vmatpush2.bf16.msra.mxu0 0
    %803 = vmatprep.subr.bf16.mxu0 0
    %804 = vmatpush2.bf16.msra.mxu0 0
    %805 = vmatprep.subr.bf16.mxu0 0
    %806 = vmatpush2.bf16.msra.mxu0 0
    %807 = vmatprep.subr.bf16.mxu0 0
    %808 = vmatpush2.bf16.msra.mxu0 0
    %809 = vmatprep.subr.bf16.mxu0 0
    %810 = vmatpush2.bf16.msra.mxu0 0
    %811 = vmatprep.subr.bf16.mxu0 0
    %812 = vmatpush2.bf16.msra.mxu0 0
    %813 = vmatprep.subr.bf16.mxu0 0
    %814 = vmatpush2.bf16.msra.mxu0 0
    %815 = vmatprep.mubr.bf16.mxu0 0
    %816 = vmatmul.mubr.bf16.gmra.mxu0 %v776
    %v817 = vpop.f32.mrf.mxu0
    %v818 = vadd.f32 0.0, %v817
    %v819 = vpop.f32.mrf.mxu0
    %v820 = vadd.f32 0.0, %v819
    %v821 = vpop.f32.mrf.mxu0
    %v822 = vpop.f32.mrf.mxu0
    %823 = vdwg.mxu0
    %824 = vmatprep.subr.bf16.mxu0 %v639
    %825 = vmatpush1.bf16.msra.mxu0 %v638
    %826 = vmatprep.subr.bf16.mxu0 %v635
    %827 = vmatpush1.bf16.msra.mxu0 %v634
    %828 = vmatprep.subr.bf16.mxu0 %v631
    %829 = vmatpush1.bf16.msra.mxu0 %v630
    %830 = vmatprep.subr.bf16.mxu0 %v627
    %831 = vmatpush1.bf16.msra.mxu0 %v626
    %832 = vmatprep.subr.bf16.mxu0 %v623
    %833 = vmatpush1.bf16.msra.mxu0 %v622
    %834 = vmatprep.subr.bf16.mxu0 %v619
    %835 = vmatpush1.bf16.msra.mxu0 %v618
    %836 = vmatprep.subr.bf16.mxu0 %v615
    %837 = vmatpush1.bf16.msra.mxu0 %v614
    %838 = vmatprep.subr.bf16.mxu0 %v611
    %839 = vmatpush1.bf16.msra.mxu0 %v610
    %840 = vmatprep.subr.bf16.mxu0 0
    %841 = vmatpush2.bf16.msra.mxu0 0
    %842 = vmatprep.subr.bf16.mxu0 0
    %843 = vmatpush2.bf16.msra.mxu0 0
    %844 = vmatprep.subr.bf16.mxu0 0
    %845 = vmatpush2.bf16.msra.mxu0 0
    %846 = vmatprep.subr.bf16.mxu0 0
    %847 = vmatpush2.bf16.msra.mxu0 0
    %848 = vmatprep.subr.bf16.mxu0 0
    %849 = vmatpush2.bf16.msra.mxu0 0
    %850 = vmatprep.subr.bf16.mxu0 0
    %851 = vmatpush2.bf16.msra.mxu0 0
    %852 = vmatprep.subr.bf16.mxu0 0
    %853 = vmatpush2.bf16.msra.mxu0 0
    %854 = vmatprep.subr.bf16.mxu0 0
    %855 = vmatpush2.bf16.msra.mxu0 0
    %856 = vmatprep.mubr.bf16.mxu0 0
    %857 = vmatmul.mubr.bf16.gmra.mxu0 %v776
    %v858 = vpop.f32.mrf.mxu0
    %v859 = vadd.f32 0.0, %v858
    %v860 = vpop.f32.mrf.mxu0
    %v861 = vadd.f32 0.0, %v860
    %v862 = vpop.f32.mrf.mxu0
    %v863 = vpop.f32.mrf.mxu0
    %864 = vdwg.mxu0
    %v865 = vadd.f32 %v779, %v818
    %v866 = vadd.f32 %v780, %v820
    %v867 = vadd.f32 %v781, %v859
    %v868 = vadd.f32 %v782, %v861
    %v869 = vmul.f32 %v865, 0.5
    %v870 = vtanh.pop %v869
    %v871 = vmul.f32 %v870, 0.5
    %v872 = vadd.f32 %v871, 0.5
    %v873 = vmul.f32 %v866, 0.5
    %v874 = vtanh.pop %v873
    %v875 = vmul.f32 %v874, 0.5
    %v876 = vadd.f32 %v875, 0.5
    %v877 = vtanh.pop %v867
    %v878 = vmul.f32 %v868, 0.5
    %v879 = vtanh.pop %v878
    %v880 = vmul.f32 %v879, 0.5
    %v881 = vadd.f32 %v880, 0.5
    %v882 = vmul.f32 %v876, %v773
    %v883 = vmul.f32 %v872, %v877
    %v884 = vadd.f32 %v882, %v883
    %v885 = vtanh.pop %v884
    %v886 = vmul.f32 %v881, %v885
    %v887 = vpack.c.bf16 %v886, %v886
    %s888 = scalar_lea.vmem %s6, 4
    %889 = vst [vmem:[%s888] sm:$0xf] %v887
    %s890 = scalar_lea.vmem [#allocation2], 64
    %v891 = vld [vmem:[%s890] sm:$0xff]
    %v892 = vld [vmem:[%s890 + $0x8] sm:$0xff]
    %v893 = vld [vmem:[%s890 + $0x10] sm:$0xff]
    %v894 = vld [vmem:[%s890 + $0x18] sm:$0xff]
    %895 = vmatprep.subr.bf16.mxu0 %v637
    %896 = vmatpush1.bf16.msra.mxu0 %v636
    %897 = vmatprep.subr.bf16.mxu0 %v633
    %898 = vmatpush1.bf16.msra.mxu0 %v632
    %899 = vmatprep.subr.bf16.mxu0 %v629
    %900 = vmatpush1.bf16.msra.mxu0 %v628
    %901 = vmatprep.subr.bf16.mxu0 %v625
    %902 = vmatpush1.bf16.msra.mxu0 %v624
    %903 = vmatprep.subr.bf16.mxu0 %v621
    %904 = vmatpush1.bf16.msra.mxu0 %v620
    %905 = vmatprep.subr.bf16.mxu0 %v617
    %906 = vmatpush1.bf16.msra.mxu0 %v616
    %907 = vmatprep.subr.bf16.mxu0 %v613
    %908 = vmatpush1.bf16.msra.mxu0 %v612
    %909 = vmatprep.subr.bf16.mxu0 %v609
    %910 = vmatpush1.bf16.msra.mxu0 %v608
    %911 = vmatprep.subr.bf16.mxu0 0
    %912 = vmatpush2.bf16.msra.mxu0 0
    %913 = vmatprep.subr.bf16.mxu0 0
    %914 = vmatpush2.bf16.msra.mxu0 0
    %915 = vmatprep.subr.bf16.mxu0 0
    %916 = vmatpush2.bf16.msra.mxu0 0
    %917 = vmatprep.subr.bf16.mxu0 0
    %918 = vmatpush2.bf16.msra.mxu0 0
    %919 = vmatprep.subr.bf16.mxu0 0
    %920 = vmatpush2.bf16.msra.mxu0 0
    %921 = vmatprep.subr.bf16.mxu0 0
    %922 = vmatpush2.bf16.msra.mxu0 0
    %923 = vmatprep.subr.bf16.mxu0 0
    %924 = vmatpush2.bf16.msra.mxu0 0
    %925 = vmatprep.subr.bf16.mxu0 0
    %926 = vmatpush2.bf16.msra.mxu0 0
    %927 = vmatprep.mubr.bf16.mxu0 0
    %928 = vmatmul.mubr.bf16.gmra.mxu0 %v887
    %v929 = vpop.f32.mrf.mxu0
    %v930 = vadd.f32 0.0, %v929
    %v931 = vpop.f32.mrf.mxu0
    %v932 = vadd.f32 0.0, %v931
    %v933 = vpop.f32.mrf.mxu0
    %v934 = vpop.f32.mrf.mxu0
    %935 = vdwg.mxu0
    %936 = vmatprep.subr.bf16.mxu0 %v639
    %937 = vmatpush1.bf16.msra.mxu0 %v638
    %938 = vmatprep.subr.bf16.mxu0 %v635
    %939 = vmatpush1.bf16.msra.mxu0 %v634
    %940 = vmatprep.subr.bf16.mxu0 %v631
    %941 = vmatpush1.bf16.msra.mxu0 %v630
    %942 = vmatprep.subr.bf16.mxu0 %v627
    %943 = vmatpush1.bf16.msra.mxu0 %v626
    %944 = vmatprep.subr.bf16.mxu0 %v623
    %945 = vmatpush1.bf16.msra.mxu0 %v622
    %946 = vmatprep.subr.bf16.mxu0 %v619
    %947 = vmatpush1.bf16.msra.mxu0 %v618
    %948 = vmatprep.subr.bf16.mxu0 %v615
    %949 = vmatpush1.bf16.msra.mxu0 %v614
    %950 = vmatprep.subr.bf16.mxu0 %v611
    %951 = vmatpush1.bf16.msra.mxu0 %v610
    %952 = vmatprep.subr.bf16.mxu0 0
    %953 = vmatpush2.bf16.msra.mxu0 0
    %954 = vmatprep.subr.bf16.mxu0 0
    %955 = vmatpush2.bf16.msra.mxu0 0
    %956 = vmatprep.subr.bf16.mxu0 0
    %957 = vmatpush2.bf16.msra.mxu0 0
    %958 = vmatprep.subr.bf16.mxu0 0
    %959 = vmatpush2.bf16.msra.mxu0 0
    %960 = vmatprep.subr.bf16.mxu0 0
    %961 = vmatpush2.bf16.msra.mxu0 0
    %962 = vmatprep.subr.bf16.mxu0 0
    %963 = vmatpush2.bf16.msra.mxu0 0
    %964 = vmatprep.subr.bf16.mxu0 0
    %965 = vmatpush2.bf16.msra.mxu0 0
    %966 = vmatprep.subr.bf16.mxu0 0
    %967 = vmatpush2.bf16.msra.mxu0 0
    %968 = vmatprep.mubr.bf16.mxu0 0
    %969 = vmatmul.mubr.bf16.gmra.mxu0 %v887
    %v970 = vpop.f32.mrf.mxu0
    %v971 = vadd.f32 0.0, %v970
    %v972 = vpop.f32.mrf.mxu0
    %v973 = vadd.f32 0.0, %v972
    %v974 = vpop.f32.mrf.mxu0
    %v975 = vpop.f32.mrf.mxu0
    %976 = vdwg.mxu0
    %v977 = vadd.f32 %v891, %v930
    %v978 = vadd.f32 %v892, %v932
    %v979 = vadd.f32 %v893, %v971
    %v980 = vadd.f32 %v894, %v973
    %v981 = vmul.f32 %v977, 0.5
    %v982 = vtanh.pop %v981
    %v983 = vmul.f32 %v982, 0.5
    %v984 = vadd.f32 %v983, 0.5
    %v985 = vmul.f32 %v978, 0.5
    %v986 = vtanh.pop %v985
    %v987 = vmul.f32 %v986, 0.5
    %v988 = vadd.f32 %v987, 0.5
    %v989 = vtanh.pop %v979
    %v990 = vmul.f32 %v980, 0.5
    %v991 = vtanh.pop %v990
    %v992 = vmul.f32 %v991, 0.5
    %v993 = vadd.f32 %v992, 0.5
    %v994 = vmul.f32 %v988, %v884
    %v995 = vmul.f32 %v984, %v989
    %v996 = vadd.f32 %v994, %v995
    %v997 = vtanh.pop %v996
    %v998 = vmul.f32 %v993, %v997
    %v999 = vpack.c.bf16 %v998, %v998
    %s1000 = scalar_lea.vmem %s6, 8
    %1001 = vst [vmem:[%s1000] sm:$0xf] %v999
    %s1002 = scalar_lea.vmem [#allocation2], 96
    %v1003 = vld [vmem:[%s1002] sm:$0xff]
    %v1004 = vld [vmem:[%s1002 + $0x8] sm:$0xff]
    %v1005 = vld [vmem:[%s1002 + $0x10] sm:$0xff]
    %v1006 = vld [vmem:[%s1002 + $0x18] sm:$0xff]
    %1007 = vmatprep.subr.bf16.mxu0 %v637
    %1008 = vmatpush1.bf16.msra.mxu0 %v636
    %1009 = vmatprep.subr.bf16.mxu0 %v633
    %1010 = vmatpush1.bf16.msra.mxu0 %v632
    %1011 = vmatprep.subr.bf16.mxu0 %v629
    %1012 = vmatpush1.bf16.msra.mxu0 %v628
    %1013 = vmatprep.subr.bf16.mxu0 %v625
    %1014 = vmatpush1.bf16.msra.mxu0 %v624
    %1015 = vmatprep.subr.bf16.mxu0 %v621
    %1016 = vmatpush1.bf16.msra.mxu0 %v620
    %1017 = vmatprep.subr.bf16.mxu0 %v617
    %1018 = vmatpush1.bf16.msra.mxu0 %v616
    %1019 = vmatprep.subr.bf16.mxu0 %v613
    %1020 = vmatpush1.bf16.msra.mxu0 %v612
    %1021 = vmatprep.subr.bf16.mxu0 %v609
    %1022 = vmatpush1.bf16.msra.mxu0 %v608
    %1023 = vmatprep.subr.bf16.mxu0 0
    %1024 = vmatpush2.bf16.msra.mxu0 0
    %1025 = vmatprep.subr.bf16.mxu0 0
    %1026 = vmatpush2.bf16.msra.mxu0 0
    %1027 = vmatprep.subr.bf16.mxu0 0
    %1028 = vmatpush2.bf16.msra.mxu0 0
    %1029 = vmatprep.subr.bf16.mxu0 0
    %1030 = vmatpush2.bf16.msra.mxu0 0
    %1031 = vmatprep.subr.bf16.mxu0 0
    %1032 = vmatpush2.bf16.msra.mxu0 0
    %1033 = vmatprep.subr.bf16.mxu0 0
    %1034 = vmatpush2.bf16.msra.mxu0 0
    %1035 = vmatprep.subr.bf16.mxu0 0
    %1036 = vmatpush2.bf16.msra.mxu0 0
    %1037 = vmatprep.subr.bf16.mxu0 0
    %1038 = vmatpush2.bf16.msra.mxu0 0
    %1039 = vmatprep.mubr.bf16.mxu0 0
    %1040 = vmatmul.mubr.bf16.gmra.mxu0 %v999
    %v1041 = vpop.f32.mrf.mxu0
    %v1042 = vadd.f32 0.0, %v1041
    %v1043 = vpop.f32.mrf.mxu0
    %v1044 = vadd.f32 0.0, %v1043
    %v1045 = vpop.f32.mrf.mxu0
    %v1046 = vpop.f32.mrf.mxu0
    %1047 = vdwg.mxu0
    %1048 = vmatprep.subr.bf16.mxu0 %v639
    %1049 = vmatpush1.bf16.msra.mxu0 %v638
    %1050 = vmatprep.subr.bf16.mxu0 %v635
    %1051 = vmatpush1.bf16.msra.mxu0 %v634
    %1052 = vmatprep.subr.bf16.mxu0 %v631
    %1053 = vmatpush1.bf16.msra.mxu0 %v630
    %1054 = vmatprep.subr.bf16.mxu0 %v627
    %1055 = vmatpush1.bf16.msra.mxu0 %v626
    %1056 = vmatprep.subr.bf16.mxu0 %v623
    %1057 = vmatpush1.bf16.msra.mxu0 %v622
    %1058 = vmatprep.subr.bf16.mxu0 %v619
    %1059 = vmatpush1.bf16.msra.mxu0 %v618
    %1060 = vmatprep.subr.bf16.mxu0 %v615
    %1061 = vmatpush1.bf16.msra.mxu0 %v614
    %1062 = vmatprep.subr.bf16.mxu0 %v611
    %1063 = vmatpush1.bf16.msra.mxu0 %v610
    %1064 = vmatprep.subr.bf16.mxu0 0
    %1065 = vmatpush2.bf16.msra.mxu0 0
    %1066 = vmatprep.subr.bf16.mxu0 0
    %1067 = vmatpush2.bf16.msra.mxu0 0
    %1068 = vmatprep.subr.bf16.mxu0 0
    %1069 = vmatpush2.bf16.msra.mxu0 0
    %1070 = vmatprep.subr.bf16.mxu0 0
    %1071 = vmatpush2.bf16.msra.mxu0 0
    %1072 = vmatprep.subr.bf16.mxu0 0
    %1073 = vmatpush2.bf16.msra.mxu0 0
    %1074 = vmatprep.subr.bf16.mxu0 0
    %1075 = vmatpush2.bf16.msra.mxu0 0
    %1076 = vmatprep.subr.bf16.mxu0 0
    %1077 = vmatpush2.bf16.msra.mxu0 0
    %1078 = vmatprep.subr.bf16.mxu0 0
    %1079 = vmatpush2.bf16.msra.mxu0 0
    %1080 = vmatprep.mubr.bf16.mxu0 0
    %1081 = vmatmul.mubr.bf16.gmra.mxu0 %v999
    %v1082 = vpop.f32.mrf.mxu0
    %v1083 = vadd.f32 0.0, %v1082
    %v1084 = vpop.f32.mrf.mxu0
    %v1085 = vadd.f32 0.0, %v1084
    %v1086 = vpop.f32.mrf.mxu0
    %v1087 = vpop.f32.mrf.mxu0
    %1088 = vdwg.mxu0
    %v1089 = vadd.f32 %v1003, %v1042
    %v1090 = vadd.f32 %v1004, %v1044
    %v1091 = vadd.f32 %v1005, %v1083
    %v1092 = vadd.f32 %v1006, %v1085
    %v1093 = vmul.f32 %v1089, 0.5
    %v1094 = vtanh.pop %v1093
    %v1095 = vmul.f32 %v1094, 0.5
    %v1096 = vadd.f32 %v1095, 0.5
    %v1097 = vmul.f32 %v1090, 0.5
    %v1098 = vtanh.pop %v1097
    %v1099 = vmul.f32 %v1098, 0.5
    %v1100 = vadd.f32 %v1099, 0.5
    %v1101 = vtanh.pop %v1091
    %v1102 = vmul.f32 %v1092, 0.5
    %v1103 = vtanh.pop %v1102
    %v1104 = vmul.f32 %v1103, 0.5
    %v1105 = vadd.f32 %v1104, 0.5
    %v1106 = vmul.f32 %v1100, %v996
    %v1107 = vmul.f32 %v1096, %v1101
    %v1108 = vadd.f32 %v1106, %v1107
    %v1109 = vtanh.pop %v1108
    %v1110 = vmul.f32 %v1105, %v1109
    %v1111 = vpack.c.bf16 %v1110, %v1110
    %s1112 = scalar_lea.vmem %s6, 12
    %1113 = vst [vmem:[%s1112] sm:$0xf] %v1111
    %s1114 = scalar_lea.vmem [#allocation2], 128
    %v1115 = vld [vmem:[%s1114] sm:$0xff]
    %v1116 = vld [vmem:[%s1114 + $0x8] sm:$0xff]
    %v1117 = vld [vmem:[%s1114 + $0x10] sm:$0xff]
    %v1118 = vld [vmem:[%s1114 + $0x18] sm:$0xff]
    %1119 = vmatprep.subr.bf16.mxu0 %v637
    %1120 = vmatpush1.bf16.msra.mxu0 %v636
    %1121 = vmatprep.subr.bf16.mxu0 %v633
    %1122 = vmatpush1.bf16.msra.mxu0 %v632
    %1123 = vmatprep.subr.bf16.mxu0 %v629
    %1124 = vmatpush1.bf16.msra.mxu0 %v628
    %1125 = vmatprep.subr.bf16.mxu0 %v625
    %1126 = vmatpush1.bf16.msra.mxu0 %v624
    %1127 = vmatprep.subr.bf16.mxu0 %v621
    %1128 = vmatpush1.bf16.msra.mxu0 %v620
    %1129 = vmatprep.subr.bf16.mxu0 %v617
    %1130 = vmatpush1.bf16.msra.mxu0 %v616
    %1131 = vmatprep.subr.bf16.mxu0 %v613
    %1132 = vmatpush1.bf16.msra.mxu0 %v612
    %1133 = vmatprep.subr.bf16.mxu0 %v609
    %1134 = vmatpush1.bf16.msra.mxu0 %v608
    %1135 = vmatprep.subr.bf16.mxu0 0
    %1136 = vmatpush2.bf16.msra.mxu0 0
    %1137 = vmatprep.subr.bf16.mxu0 0
    %1138 = vmatpush2.bf16.msra.mxu0 0
    %1139 = vmatprep.subr.bf16.mxu0 0
    %1140 = vmatpush2.bf16.msra.mxu0 0
    %1141 = vmatprep.subr.bf16.mxu0 0
    %1142 = vmatpush2.bf16.msra.mxu0 0
    %1143 = vmatprep.subr.bf16.mxu0 0
    %1144 = vmatpush2.bf16.msra.mxu0 0
    %1145 = vmatprep.subr.bf16.mxu0 0
    %1146 = vmatpush2.bf16.msra.mxu0 0
    %1147 = vmatprep.subr.bf16.mxu0 0
    %1148 = vmatpush2.bf16.msra.mxu0 0
    %1149 = vmatprep.subr.bf16.mxu0 0
    %1150 = vmatpush2.bf16.msra.mxu0 0
    %1151 = vmatprep.mubr.bf16.mxu0 0
    %1152 = vmatmul.mubr.bf16.gmra.mxu0 %v1111
    %v1153 = vpop.f32.mrf.mxu0
    %v1154 = vadd.f32 0.0, %v1153
    %v1155 = vpop.f32.mrf.mxu0
    %v1156 = vadd.f32 0.0, %v1155
    %v1157 = vpop.f32.mrf.mxu0
    %v1158 = vpop.f32.mrf.mxu0
    %1159 = vdwg.mxu0
    %1160 = vmatprep.subr.bf16.mxu0 %v639
    %1161 = vmatpush1.bf16.msra.mxu0 %v638
    %1162 = vmatprep.subr.bf16.mxu0 %v635
    %1163 = vmatpush1.bf16.msra.mxu0 %v634
    %1164 = vmatprep.subr.bf16.mxu0 %v631
    %1165 = vmatpush1.bf16.msra.mxu0 %v630
    %1166 = vmatprep.subr.bf16.mxu0 %v627
    %1167 = vmatpush1.bf16.msra.mxu0 %v626
    %1168 = vmatprep.subr.bf16.mxu0 %v623
    %1169 = vmatpush1.bf16.msra.mxu0 %v622
    %1170 = vmatprep.subr.bf16.mxu0 %v619
    %1171 = vmatpush1.bf16.msra.mxu0 %v618
    %1172 = vmatprep.subr.bf16.mxu0 %v615
    %1173 = vmatpush1.bf16.msra.mxu0 %v614
    %1174 = vmatprep.subr.bf16.mxu0 %v611
    %1175 = vmatpush1.bf16.msra.mxu0 %v610
    %1176 = vmatprep.subr.bf16.mxu0 0
    %1177 = vmatpush2.bf16.msra.mxu0 0
    %1178 = vmatprep.subr.bf16.mxu0 0
    %1179 = vmatpush2.bf16.msra.mxu0 0
    %1180 = vmatprep.subr.bf16.mxu0 0
    %1181 = vmatpush2.bf16.msra.mxu0 0
    %1182 = vmatprep.subr.bf16.mxu0 0
    %1183 = vmatpush2.bf16.msra.mxu0 0
    %1184 = vmatprep.subr.bf16.mxu0 0
    %1185 = vmatpush2.bf16.msra.mxu0 0
    %1186 = vmatprep.subr.bf16.mxu0 0
    %1187 = vmatpush2.bf16.msra.mxu0 0
    %1188 = vmatprep.subr.bf16.mxu0 0
    %1189 = vmatpush2.bf16.msra.mxu0 0
    %1190 = vmatprep.subr.bf16.mxu0 0
    %1191 = vmatpush2.bf16.msra.mxu0 0
    %1192 = vmatprep.mubr.bf16.mxu0 0
    %1193 = vmatmul.mubr.bf16.gmra.mxu0 %v1111
    %v1194 = vpop.f32.mrf.mxu0
    %v1195 = vadd.f32 0.0, %v1194
    %v1196 = vpop.f32.mrf.mxu0
    %v1197 = vadd.f32 0.0, %v1196
    %v1198 = vpop.f32.mrf.mxu0
    %v1199 = vpop.f32.mrf.mxu0
    %1200 = vdwg.mxu0
    %v1201 = vadd.f32 %v1115, %v1154
    %v1202 = vadd.f32 %v1116, %v1156
    %v1203 = vadd.f32 %v1117, %v1195
    %v1204 = vadd.f32 %v1118, %v1197
    %v1205 = vmul.f32 %v1201, 0.5
    %v1206 = vtanh.pop %v1205
    %v1207 = vmul.f32 %v1206, 0.5
    %v1208 = vadd.f32 %v1207, 0.5
    %v1209 = vmul.f32 %v1202, 0.5
    %v1210 = vtanh.pop %v1209
    %v1211 = vmul.f32 %v1210, 0.5
    %v1212 = vadd.f32 %v1211, 0.5
    %v1213 = vtanh.pop %v1203
    %v1214 = vmul.f32 %v1204, 0.5
    %v1215 = vtanh.pop %v1214
    %v1216 = vmul.f32 %v1215, 0.5
    %v1217 = vadd.f32 %v1216, 0.5
    %v1218 = vmul.f32 %v1212, %v1108
    %v1219 = vmul.f32 %v1208, %v1213
    %v1220 = vadd.f32 %v1218, %v1219
    %v1221 = vtanh.pop %v1220
    %v1222 = vmul.f32 %v1217, %v1221
    %v1223 = vpack.c.bf16 %v1222, %v1222
    %s1224 = scalar_lea.vmem %s6, 16
    %1225 = vst [vmem:[%s1224] sm:$0xf] %v1223
    %s1226 = scalar_lea.vmem [#allocation2], 160
    %v1227 = vld [vmem:[%s1226] sm:$0xff]
    %v1228 = vld [vmem:[%s1226 + $0x8] sm:$0xff]
    %v1229 = vld [vmem:[%s1226 + $0x10] sm:$0xff]
    %v1230 = vld [vmem:[%s1226 + $0x18] sm:$0xff]
    %1231 = vmatprep.subr.bf16.mxu0 %v637
    %1232 = vmatpush1.bf16.msra.mxu0 %v636
    %1233 = vmatprep.subr.bf16.mxu0 %v633
    %1234 = vmatpush1.bf16.msra.mxu0 %v632
    %1235 = vmatprep.subr.bf16.mxu0 %v629
    %1236 = vmatpush1.bf16.msra.mxu0 %v628
    %1237 = vmatprep.subr.bf16.mxu0 %v625
    %1238 = vmatpush1.bf16.msra.mxu0 %v624
    %1239 = vmatprep.subr.bf16.mxu0 %v621
    %1240 = vmatpush1.bf16.msra.mxu0 %v620
    %1241 = vmatprep.subr.bf16.mxu0 %v617
    %1242 = vmatpush1.bf16.msra.mxu0 %v616
    %1243 = vmatprep.subr.bf16.mxu0 %v613
    %1244 = vmatpush1.bf16.msra.mxu0 %v612
    %1245 = vmatprep.subr.bf16.mxu0 %v609
    %1246 = vmatpush1.bf16.msra.mxu0 %v608
    %1247 = vmatprep.subr.bf16.mxu0 0
    %1248 = vmatpush2.bf16.msra.mxu0 0
    %1249 = vmatprep.subr.bf16.mxu0 0
    %1250 = vmatpush2.bf16.msra.mxu0 0
    %1251 = vmatprep.subr.bf16.mxu0 0
    %1252 = vmatpush2.bf16.msra.mxu0 0
    %1253 = vmatprep.subr.bf16.mxu0 0
    %1254 = vmatpush2.bf16.msra.mxu0 0
    %1255 = vmatprep.subr.bf16.mxu0 0
    %1256 = vmatpush2.bf16.msra.mxu0 0
    %1257 = vmatprep.subr.bf16.mxu0 0
    %1258 = vmatpush2.bf16.msra.mxu0 0
    %1259 = vmatprep.subr.bf16.mxu0 0
    %1260 = vmatpush2.bf16.msra.mxu0 0
    %1261 = vmatprep.subr.bf16.mxu0 0
    %1262 = vmatpush2.bf16.msra.mxu0 0
    %1263 = vmatprep.mubr.bf16.mxu0 0
    %1264 = vmatmul.mubr.bf16.gmra.mxu0 %v1223
    %v1265 = vpop.f32.mrf.mxu0
    %v1266 = vadd.f32 0.0, %v1265
    %v1267 = vpop.f32.mrf.mxu0
    %v1268 = vadd.f32 0.0, %v1267
    %v1269 = vpop.f32.mrf.mxu0
    %v1270 = vpop.f32.mrf.mxu0
    %1271 = vdwg.mxu0
    %1272 = vmatprep.subr.bf16.mxu0 %v639
    %1273 = vmatpush1.bf16.msra.mxu0 %v638
    %1274 = vmatprep.subr.bf16.mxu0 %v635
    %1275 = vmatpush1.bf16.msra.mxu0 %v634
    %1276 = vmatprep.subr.bf16.mxu0 %v631
    %1277 = vmatpush1.bf16.msra.mxu0 %v630
    %1278 = vmatprep.subr.bf16.mxu0 %v627
    %1279 = vmatpush1.bf16.msra.mxu0 %v626
    %1280 = vmatprep.subr.bf16.mxu0 %v623
    %1281 = vmatpush1.bf16.msra.mxu0 %v622
    %1282 = vmatprep.subr.bf16.mxu0 %v619
    %1283 = vmatpush1.bf16.msra.mxu0 %v618
    %1284 = vmatprep.subr.bf16.mxu0 %v615
    %1285 = vmatpush1.bf16.msra.mxu0 %v614
    %1286 = vmatprep.subr.bf16.mxu0 %v611
    %1287 = vmatpush1.bf16.msra.mxu0 %v610
    %1288 = vmatprep.subr.bf16.mxu0 0
    %1289 = vmatpush2.bf16.msra.mxu0 0
    %1290 = vmatprep.subr.bf16.mxu0 0
    %1291 = vmatpush2.bf16.msra.mxu0 0
    %1292 = vmatprep.subr.bf16.mxu0 0
    %1293 = vmatpush2.bf16.msra.mxu0 0
    %1294 = vmatprep.subr.bf16.mxu0 0
    %1295 = vmatpush2.bf16.msra.mxu0 0
    %1296 = vmatprep.subr.bf16.mxu0 0
    %1297 = vmatpush2.bf16.msra.mxu0 0
    %1298 = vmatprep.subr.bf16.mxu0 0
    %1299 = vmatpush2.bf16.msra.mxu0 0
    %1300 = vmatprep.subr.bf16.mxu0 0
    %1301 = vmatpush2.bf16.msra.mxu0 0
    %1302 = vmatprep.subr.bf16.mxu0 0
    %1303 = vmatpush2.bf16.msra.mxu0 0
    %1304 = vmatprep.mubr.bf16.mxu0 0
    %1305 = vmatmul.mubr.bf16.gmra.mxu0 %v1223
    %v1306 = vpop.f32.mrf.mxu0
    %v1307 = vadd.f32 0.0, %v1306
    %v1308 = vpop.f32.mrf.mxu0
    %v1309 = vadd.f32 0.0, %v1308
    %v1310 = vpop.f32.mrf.mxu0
    %v1311 = vpop.f32.mrf.mxu0
    %1312 = vdwg.mxu0
    %v1313 = vadd.f32 %v1227, %v1266
    %v1314 = vadd.f32 %v1228, %v1268
    %v1315 = vadd.f32 %v1229, %v1307
    %v1316 = vadd.f32 %v1230, %v1309
    %v1317 = vmul.f32 %v1313, 0.5
    %v1318 = vtanh.pop %v1317
    %v1319 = vmul.f32 %v1318, 0.5
    %v1320 = vadd.f32 %v1319, 0.5
    %v1321 = vmul.f32 %v1314, 0.5
    %v1322 = vtanh.pop %v1321
    %v1323 = vmul.f32 %v1322, 0.5
    %v1324 = vadd.f32 %v1323, 0.5
    %v1325 = vtanh.pop %v1315
    %v1326 = vmul.f32 %v1316, 0.5
    %v1327 = vtanh.pop %v1326
    %v1328 = vmul.f32 %v1327, 0.5
    %v1329 = vadd.f32 %v1328, 0.5
    %v1330 = vmul.f32 %v1324, %v1220
    %v1331 = vmul.f32 %v1320, %v1325
    %v1332 = vadd.f32 %v1330, %v1331
    %v1333 = vtanh.pop %v1332
    %v1334 = vmul.f32 %v1329, %v1333
    %v1335 = vpack.c.bf16 %v1334, %v1334
    %s1336 = scalar_lea.vmem %s6, 20
    %1337 = vst [vmem:[%s1336] sm:$0xf] %v1335
    %s1338 = scalar_lea.vmem [#allocation2], 192
    %v1339 = vld [vmem:[%s1338] sm:$0xff]
    %v1340 = vld [vmem:[%s1338 + $0x8] sm:$0xff]
    %v1341 = vld [vmem:[%s1338 + $0x10] sm:$0xff]
    %v1342 = vld [vmem:[%s1338 + $0x18] sm:$0xff]
    %1343 = vmatprep.subr.bf16.mxu0 %v637
    %1344 = vmatpush1.bf16.msra.mxu0 %v636
    %1345 = vmatprep.subr.bf16.mxu0 %v633
    %1346 = vmatpush1.bf16.msra.mxu0 %v632
    %1347 = vmatprep.subr.bf16.mxu0 %v629
    %1348 = vmatpush1.bf16.msra.mxu0 %v628
    %1349 = vmatprep.subr.bf16.mxu0 %v625
    %1350 = vmatpush1.bf16.msra.mxu0 %v624
    %1351 = vmatprep.subr.bf16.mxu0 %v621
    %1352 = vmatpush1.bf16.msra.mxu0 %v620
    %1353 = vmatprep.subr.bf16.mxu0 %v617
    %1354 = vmatpush1.bf16.msra.mxu0 %v616
    %1355 = vmatprep.subr.bf16.mxu0 %v613
    %1356 = vmatpush1.bf16.msra.mxu0 %v612
    %1357 = vmatprep.subr.bf16.mxu0 %v609
    %1358 = vmatpush1.bf16.msra.mxu0 %v608
    %1359 = vmatprep.subr.bf16.mxu0 0
    %1360 = vmatpush2.bf16.msra.mxu0 0
    %1361 = vmatprep.subr.bf16.mxu0 0
    %1362 = vmatpush2.bf16.msra.mxu0 0
    %1363 = vmatprep.subr.bf16.mxu0 0
    %1364 = vmatpush2.bf16.msra.mxu0 0
    %1365 = vmatprep.subr.bf16.mxu0 0
    %1366 = vmatpush2.bf16.msra.mxu0 0
    %1367 = vmatprep.subr.bf16.mxu0 0
    %1368 = vmatpush2.bf16.msra.mxu0 0
    %1369 = vmatprep.subr.bf16.mxu0 0
    %1370 = vmatpush2.bf16.msra.mxu0 0
    %1371 = vmatprep.subr.bf16.mxu0 0
    %1372 = vmatpush2.bf16.msra.mxu0 0
    %1373 = vmatprep.subr.bf16.mxu0 0
    %1374 = vmatpush2.bf16.msra.mxu0 0
    %1375 = vmatprep.mubr.bf16.mxu0 0
    %1376 = vmatmul.mubr.bf16.gmra.mxu0 %v1335
    %v1377 = vpop.f32.mrf.mxu0
    %v1378 = vadd.f32 0.0, %v1377
    %v1379 = vpop.f32.mrf.mxu0
    %v1380 = vadd.f32 0.0, %v1379
    %v1381 = vpop.f32.mrf.mxu0
    %v1382 = vpop.f32.mrf.mxu0
    %1383 = vdwg.mxu0
    %1384 = vmatprep.subr.bf16.mxu0 %v639
    %1385 = vmatpush1.bf16.msra.mxu0 %v638
    %1386 = vmatprep.subr.bf16.mxu0 %v635
    %1387 = vmatpush1.bf16.msra.mxu0 %v634
    %1388 = vmatprep.subr.bf16.mxu0 %v631
    %1389 = vmatpush1.bf16.msra.mxu0 %v630
    %1390 = vmatprep.subr.bf16.mxu0 %v627
    %1391 = vmatpush1.bf16.msra.mxu0 %v626
    %1392 = vmatprep.subr.bf16.mxu0 %v623
    %1393 = vmatpush1.bf16.msra.mxu0 %v622
    %1394 = vmatprep.subr.bf16.mxu0 %v619
    %1395 = vmatpush1.bf16.msra.mxu0 %v618
    %1396 = vmatprep.subr.bf16.mxu0 %v615
    %1397 = vmatpush1.bf16.msra.mxu0 %v614
    %1398 = vmatprep.subr.bf16.mxu0 %v611
    %1399 = vmatpush1.bf16.msra.mxu0 %v610
    %1400 = vmatprep.subr.bf16.mxu0 0
    %1401 = vmatpush2.bf16.msra.mxu0 0
    %1402 = vmatprep.subr.bf16.mxu0 0
    %1403 = vmatpush2.bf16.msra.mxu0 0
    %1404 = vmatprep.subr.bf16.mxu0 0
    %1405 = vmatpush2.bf16.msra.mxu0 0
    %1406 = vmatprep.subr.bf16.mxu0 0
    %1407 = vmatpush2.bf16.msra.mxu0 0
    %1408 = vmatprep.subr.bf16.mxu0 0
    %1409 = vmatpush2.bf16.msra.mxu0 0
    %1410 = vmatprep.subr.bf16.mxu0 0
    %1411 = vmatpush2.bf16.msra.mxu0 0
    %1412 = vmatprep.subr.bf16.mxu0 0
    %1413 = vmatpush2.bf16.msra.mxu0 0
    %1414 = vmatprep.subr.bf16.mxu0 0
    %1415 = vmatpush2.bf16.msra.mxu0 0
    %1416 = vmatprep.mubr.bf16.mxu0 0
    %1417 = vmatmul.mubr.bf16.gmra.mxu0 %v1335
    %v1418 = vpop.f32.mrf.mxu0
    %v1419 = vadd.f32 0.0, %v1418
    %v1420 = vpop.f32.mrf.mxu0
    %v1421 = vadd.f32 0.0, %v1420
    %v1422 = vpop.f32.mrf.mxu0
    %v1423 = vpop.f32.mrf.mxu0
    %1424 = vdwg.mxu0
    %v1425 = vadd.f32 %v1339, %v1378
    %v1426 = vadd.f32 %v1340, %v1380
    %v1427 = vadd.f32 %v1341, %v1419
    %v1428 = vadd.f32 %v1342, %v1421
    %v1429 = vmul.f32 %v1425, 0.5
    %v1430 = vtanh.pop %v1429
    %v1431 = vmul.f32 %v1430, 0.5
    %v1432 = vadd.f32 %v1431, 0.5
    %v1433 = vmul.f32 %v1426, 0.5
    %v1434 = vtanh.pop %v1433
    %v1435 = vmul.f32 %v1434, 0.5
    %v1436 = vadd.f32 %v1435, 0.5
    %v1437 = vtanh.pop %v1427
    %v1438 = vmul.f32 %v1428, 0.5
    %v1439 = vtanh.pop %v1438
    %v1440 = vmul.f32 %v1439, 0.5
    %v1441 = vadd.f32 %v1440, 0.5
    %v1442 = vmul.f32 %v1436, %v1332
    %v1443 = vmul.f32 %v1432, %v1437
    %v1444 = vadd.f32 %v1442, %v1443
    %v1445 = vtanh.pop %v1444
    %v1446 = vmul.f32 %v1441, %v1445
    %v1447 = vpack.c.bf16 %v1446, %v1446
    %s1448 = scalar_lea.vmem %s6, 24
    %1449 = vst [vmem:[%s1448] sm:$0xf] %v1447
    %s1450 = scalar_lea.vmem [#allocation2], 224
    %v1451 = vld [vmem:[%s1450] sm:$0xff]
    %v1452 = vld [vmem:[%s1450 + $0x8] sm:$0xff]
    %v1453 = vld [vmem:[%s1450 + $0x10] sm:$0xff]
    %v1454 = vld [vmem:[%s1450 + $0x18] sm:$0xff]
    %1455 = vmatprep.subr.bf16.mxu0 %v637
    %1456 = vmatpush1.bf16.msra.mxu0 %v636
    %1457 = vmatprep.subr.bf16.mxu0 %v633
    %1458 = vmatpush1.bf16.msra.mxu0 %v632
    %1459 = vmatprep.subr.bf16.mxu0 %v629
    %1460 = vmatpush1.bf16.msra.mxu0 %v628
    %1461 = vmatprep.subr.bf16.mxu0 %v625
    %1462 = vmatpush1.bf16.msra.mxu0 %v624
    %1463 = vmatprep.subr.bf16.mxu0 %v621
    %1464 = vmatpush1.bf16.msra.mxu0 %v620
    %1465 = vmatprep.subr.bf16.mxu0 %v617
    %1466 = vmatpush1.bf16.msra.mxu0 %v616
    %1467 = vmatprep.subr.bf16.mxu0 %v613
    %1468 = vmatpush1.bf16.msra.mxu0 %v612
    %1469 = vmatprep.subr.bf16.mxu0 %v609
    %1470 = vmatpush1.bf16.msra.mxu0 %v608
    %1471 = vmatprep.subr.bf16.mxu0 0
    %1472 = vmatpush2.bf16.msra.mxu0 0
    %1473 = vmatprep.subr.bf16.mxu0 0
    %1474 = vmatpush2.bf16.msra.mxu0 0
    %1475 = vmatprep.subr.bf16.mxu0 0
    %1476 = vmatpush2.bf16.msra.mxu0 0
    %1477 = vmatprep.subr.bf16.mxu0 0
    %1478 = vmatpush2.bf16.msra.mxu0 0
    %1479 = vmatprep.subr.bf16.mxu0 0
    %1480 = vmatpush2.bf16.msra.mxu0 0
    %1481 = vmatprep.subr.bf16.mxu0 0
    %1482 = vmatpush2.bf16.msra.mxu0 0
    %1483 = vmatprep.subr.bf16.mxu0 0
    %1484 = vmatpush2.bf16.msra.mxu0 0
    %1485 = vmatprep.subr.bf16.mxu0 0
    %1486 = vmatpush2.bf16.msra.mxu0 0
    %1487 = vmatprep.mubr.bf16.mxu0 0
    %1488 = vmatmul.mubr.bf16.gmra.mxu0 %v1447
    %v1489 = vpop.f32.mrf.mxu0
    %v1490 = vadd.f32 0.0, %v1489
    %v1491 = vpop.f32.mrf.mxu0
    %v1492 = vadd.f32 0.0, %v1491
    %v1493 = vpop.f32.mrf.mxu0
    %v1494 = vpop.f32.mrf.mxu0
    %1495 = vdwg.mxu0
    %1496 = vmatprep.subr.bf16.mxu0 %v639
    %1497 = vmatpush1.bf16.msra.mxu0 %v638
    %1498 = vmatprep.subr.bf16.mxu0 %v635
    %1499 = vmatpush1.bf16.msra.mxu0 %v634
    %1500 = vmatprep.subr.bf16.mxu0 %v631
    %1501 = vmatpush1.bf16.msra.mxu0 %v630
    %1502 = vmatprep.subr.bf16.mxu0 %v627
    %1503 = vmatpush1.bf16.msra.mxu0 %v626
    %1504 = vmatprep.subr.bf16.mxu0 %v623
    %1505 = vmatpush1.bf16.msra.mxu0 %v622
    %1506 = vmatprep.subr.bf16.mxu0 %v619
    %1507 = vmatpush1.bf16.msra.mxu0 %v618
    %1508 = vmatprep.subr.bf16.mxu0 %v615
    %1509 = vmatpush1.bf16.msra.mxu0 %v614
    %1510 = vmatprep.subr.bf16.mxu0 %v611
    %1511 = vmatpush1.bf16.msra.mxu0 %v610
    %1512 = vmatprep.subr.bf16.mxu0 0
    %1513 = vmatpush2.bf16.msra.mxu0 0
    %1514 = vmatprep.subr.bf16.mxu0 0
    %1515 = vmatpush2.bf16.msra.mxu0 0
    %1516 = vmatprep.subr.bf16.mxu0 0
    %1517 = vmatpush2.bf16.msra.mxu0 0
    %1518 = vmatprep.subr.bf16.mxu0 0
    %1519 = vmatpush2.bf16.msra.mxu0 0
    %1520 = vmatprep.subr.bf16.mxu0 0
    %1521 = vmatpush2.bf16.msra.mxu0 0
    %1522 = vmatprep.subr.bf16.mxu0 0
    %1523 = vmatpush2.bf16.msra.mxu0 0
    %1524 = vmatprep.subr.bf16.mxu0 0
    %1525 = vmatpush2.bf16.msra.mxu0 0
    %1526 = vmatprep.subr.bf16.mxu0 0
    %1527 = vmatpush2.bf16.msra.mxu0 0
    %1528 = vmatprep.mubr.bf16.mxu0 0
    %1529 = vmatmul.mubr.bf16.gmra.mxu0 %v1447
    %v1530 = vpop.f32.mrf.mxu0
    %v1531 = vadd.f32 0.0, %v1530
    %v1532 = vpop.f32.mrf.mxu0
    %v1533 = vadd.f32 0.0, %v1532
    %v1534 = vpop.f32.mrf.mxu0
    %v1535 = vpop.f32.mrf.mxu0
    %1536 = vdwg.mxu0
    %v1537 = vadd.f32 %v1451, %v1490
    %v1538 = vadd.f32 %v1452, %v1492
    %v1539 = vadd.f32 %v1453, %v1531
    %v1540 = vadd.f32 %v1454, %v1533
    %v1541 = vmul.f32 %v1537, 0.5
    %v1542 = vtanh.pop %v1541
    %v1543 = vmul.f32 %v1542, 0.5
    %v1544 = vadd.f32 %v1543, 0.5
    %v1545 = vmul.f32 %v1538, 0.5
    %v1546 = vtanh.pop %v1545
    %v1547 = vmul.f32 %v1546, 0.5
    %v1548 = vadd.f32 %v1547, 0.5
    %v1549 = vtanh.pop %v1539
    %v1550 = vmul.f32 %v1540, 0.5
    %v1551 = vtanh.pop %v1550
    %v1552 = vmul.f32 %v1551, 0.5
    %v1553 = vadd.f32 %v1552, 0.5
    %v1554 = vmul.f32 %v1548, %v1444
    %v1555 = vmul.f32 %v1544, %v1549
    %v1556 = vadd.f32 %v1554, %v1555
    %v1557 = vtanh.pop %v1556
    %v1558 = vmul.f32 %v1553, %v1557
    %v1559 = vpack.c.bf16 %v1558, %v1558
    %s1560 = scalar_lea.vmem %s6, 28
    %1561 = vst [vmem:[%s1560] sm:$0xf] %v1559
    %1562 = vst [vmem:[#allocation3] sm:$0xf] %v1559
    %1563 = vst [vmem:[#allocation4] sm:$0xff] %v1556
    // Predicated region
    $region34: #{music_rnn_forward.3} parent=1 // pred_check
      %p1564 = pneg %p41
    $region35: #{music_rnn_forward.3} parent=1 // pred_check_branch
      %1566 = sbr.rel (%p1564) target = $region37
    $region36: #{music_rnn_forward.3} parent=1 // pred_region
      %v1567 = vunpack.c.l.bf16 %v1559
      %1568 = vst [vmem:[%s7] sm:$0xff] %v1567
      %1569 = vst [vmem:[%s8] sm:$0xff] %v1556
    $region37: #{music_rnn_forward.3} parent=1 // pred_fallthru
      _
    // Predicated region
    $region38: #{music_rnn_forward.3} parent=1 // pred_check
      _
    $region39: #{music_rnn_forward.3} parent=1 // pred_check_branch
      %1571 = sbr.rel (0) target = $region41
    $region40: #{music_rnn_forward.3} parent=1 // pred_region
      _
    $region41: #{music_rnn_forward.3} parent=1 // pred_fallthru
      _
    // Predicated region
    $region42: #{music_rnn_forward.3} parent=1 // pred_check
      _
    $region43: #{music_rnn_forward.3} parent=1 // pred_check_branch
      %1573 = sbr.rel (0) target = $region45
    $region44: #{music_rnn_forward.3} parent=1 // pred_region
      _
    $region45: #{music_rnn_forward.3} parent=1 // pred_fallthru
      _
    // Predicated region
    $region46: #{music_rnn_forward.3} parent=1 // pred_check
      _
    $region47: #{music_rnn_forward.3} parent=1 // pred_check_branch
      %1575 = sbr.rel (0) target = $region49
    $region48: #{music_rnn_forward.3} parent=1 // pred_region
      _
    $region49: #{music_rnn_forward.3} parent=1 // pred_fallthru
      _
    // Predicated region
    $region50: #{music_rnn_forward.3} parent=1 // pred_check
      _
    $region51: #{music_rnn_forward.3} parent=1 // pred_check_branch
      %1577 = sbr.rel (0) target = $region53
    $region52: #{music_rnn_forward.3} parent=1 // pred_region
      _
    $region53: #{music_rnn_forward.3} parent=1 // pred_fallthru
      _
    // Predicated region
    $region54: #{music_rnn_forward.3} parent=1 // pred_check
      _
    $region55: #{music_rnn_forward.3} parent=1 // pred_check_branch
      %1579 = sbr.rel (0) target = $region57
    $region56: #{music_rnn_forward.3} parent=1 // pred_region
      _
    $region57: #{music_rnn_forward.3} parent=1 // pred_fallthru
      _
    // Predicated region
    $region58: #{music_rnn_forward.3} parent=1 // pred_check
      _
    $region59: #{music_rnn_forward.3} parent=1 // pred_check_branch
      %1581 = sbr.rel (0) target = $region61
    $region60: #{music_rnn_forward.3} parent=1 // pred_region
      _
    $region61: #{music_rnn_forward.3} parent=1 // pred_fallthru
      _
    %1582 = vsyncpa [#allocation6], 1

// kernel: music_rnn_forward.4
$region0: #{music_rnn_forward.4}
  #allocation0 [shape = 'u32[]', space=smem, size = 0x4, offset = 0x4, fixed_abs, tag = 'smem constant byte address 0x4 - core index']
  #allocation1 [shape = 'u32[144,128]{1,0:T(1,128)}', space=vmem, size = 0x12000, scoped, tag = 'internal scratch']
  #allocation2 [shape = 'f32[8,8,512]{2,1,0:T(8,128)}', space=vmem, size = 0x20000, scoped, tag = 'scratch operand']
  #allocation3 [shape = 'bf16[8,128]{1,0:T(8,128)(2,1)}', space=vmem, size = 0x800, scoped, tag = 'scratch operand']
  #allocation4 [shape = 'f32[8,128]{1,0:T(8,128)}', space=vmem, size = 0x1000, scoped, tag = 'scratch operand']
  %s0 = inlined_call_operand.vmem [shape: bf16[8,8,128], index: 0, kind: input, shape index: {}]
  %s1 = inlined_call_operand.vmem [shape: bf16[128,512], index: 1, kind: input, shape index: {}]
  %s2 = inlined_call_operand.vmem [shape: f32[1,512], index: 2, kind: input, shape index: {}]
  %s3 = inlined_call_operand.vmem [shape: bf16[128,512], index: 3, kind: input, shape index: {}]
  %s4 = inlined_call_operand.vmem [shape: f32[8,128], index: 4, kind: input, shape index: {}, may-alias: {4,5}]
  %s5 = inlined_call_operand.vmem [shape: f32[8,128], index: 5, kind: input, shape index: {}, may-alias: {4,5}]
  %s6 = inlined_call_operand.vmem [shape: bf16[8,8,128], index: 6, kind: output, shape index: {0}]
  %s7 = inlined_call_operand.vmem [shape: f32[8,128], index: 7, kind: output, shape index: {1}]
  %s8 = inlined_call_operand.vmem [shape: f32[8,128], index: 8, kind: output, shape index: {2}]
  %9 = xla_tuple %s6, %s7, %s8
  %s10 = sld [smem:[#allocation0]]
  $region58: #{music_rnn_forward.4} parent=0
    _
  %s12 = ssub.s32 1, %s10
  %s13 = scalar_select 0, %s12, %s10
  // Predicated region
  $region2: #{music_rnn_forward.4} parent=0 // pred_check
    _
  $region3: #{music_rnn_forward.4} parent=0 // pred_check_branch
    %15 = sbr.rel (0) target = $region5
  $region4: #{music_rnn_forward.4} parent=0 // pred_region
    _
  $region5: #{music_rnn_forward.4} parent=0 // pred_fallthru
    _
  // Predicated region
  $region6: #{music_rnn_forward.4} parent=0 // pred_check
    _
  $region7: #{music_rnn_forward.4} parent=0 // pred_check_branch
    %17 = sbr.rel (0) target = $region9
  $region8: #{music_rnn_forward.4} parent=0 // pred_region
    _
  $region9: #{music_rnn_forward.4} parent=0 // pred_fallthru
    _
  // Predicated region
  $region10: #{music_rnn_forward.4} parent=0 // pred_check
    _
  $region11: #{music_rnn_forward.4} parent=0 // pred_check_branch
    %19 = sbr.rel (0) target = $region13
  $region12: #{music_rnn_forward.4} parent=0 // pred_region
    _
  $region13: #{music_rnn_forward.4} parent=0 // pred_fallthru
    _
  // Predicated region
  $region14: #{music_rnn_forward.4} parent=0 // pred_check
    _
  $region15: #{music_rnn_forward.4} parent=0 // pred_check_branch
    %21 = sbr.rel (0) target = $region17
  $region16: #{music_rnn_forward.4} parent=0 // pred_region
    _
  $region17: #{music_rnn_forward.4} parent=0 // pred_fallthru
    _
  // Predicated region
  $region18: #{music_rnn_forward.4} parent=0 // pred_check
    _
  $region19: #{music_rnn_forward.4} parent=0 // pred_check_branch
    %23 = sbr.rel (0) target = $region21
  $region20: #{music_rnn_forward.4} parent=0 // pred_region
    _
  $region21: #{music_rnn_forward.4} parent=0 // pred_fallthru
    _
  // Predicated region
  $region22: #{music_rnn_forward.4} parent=0 // pred_check
    _
  $region23: #{music_rnn_forward.4} parent=0 // pred_check_branch
    %25 = sbr.rel (0) target = $region25
  $region24: #{music_rnn_forward.4} parent=0 // pred_region
    _
  $region25: #{music_rnn_forward.4} parent=0 // pred_fallthru
    _
  %p27 = scmp.eq.s32.totalorder 0, 0
  // Predicated region
  $region26: #{music_rnn_forward.4} parent=0 // pred_check
    %p28 = pneg %p27
  $region27: #{music_rnn_forward.4} parent=0 // pred_check_branch
    %30 = sbr.rel (%p28) target = $region29
  $region28: #{music_rnn_forward.4} parent=0 // pred_region
    %v31 = vld [vmem:[%s4] sm:$0xff]
    %v32 = vpack.c.bf16 %v31, %v31
    %33 = vst [vmem:[#allocation3] sm:$0xf] %v32
    %v34 = vld [vmem:[%s5] sm:$0xff]
    %35 = vst [vmem:[#allocation4] sm:$0xff] %v34
  $region29: #{music_rnn_forward.4} parent=0 // pred_fallthru
    _
  %v36 = vld [vmem:[%s0] sm:$0xf]
  %v37 = vld [vmem:[%s0 + $0x4] sm:$0xf]
  %v38 = vld [vmem:[%s0 + $0x8] sm:$0xf]
  %v39 = vld [vmem:[%s0 + $0xc] sm:$0xf]
  %v40 = vld [vmem:[%s0 + $0x10] sm:$0xf]
  %v41 = vld [vmem:[%s0 + $0x14] sm:$0xf]
  %v42 = vld [vmem:[%s0 + $0x18] sm:$0xf]
  %v43 = vld [vmem:[%s0 + $0x1c] sm:$0xf]
  %v44 = vld [vmem:[%s1] sm:$0xff]
  %v45 = vld [vmem:[%s1 + $0x8] sm:$0xff]
  %v46 = vld [vmem:[%s1 + $0x10] sm:$0xff]
  %v47 = vld [vmem:[%s1 + $0x18] sm:$0xff]
  %v48 = vld [vmem:[%s1 + $0x20] sm:$0xff]
  %v49 = vld [vmem:[%s1 + $0x28] sm:$0xff]
  %v50 = vld [vmem:[%s1 + $0x30] sm:$0xff]
  %v51 = vld [vmem:[%s1 + $0x38] sm:$0xff]
  %v52 = vld [vmem:[%s1 + $0x40] sm:$0xff]
  %v53 = vld [vmem:[%s1 + $0x48] sm:$0xff]
  %v54 = vld [vmem:[%s1 + $0x50] sm:$0xff]
  %v55 = vld [vmem:[%s1 + $0x58] sm:$0xff]
  %v56 = vld [vmem:[%s1 + $0x60] sm:$0xff]
  %v57 = vld [vmem:[%s1 + $0x68] sm:$0xff]
  %v58 = vld [vmem:[%s1 + $0x70] sm:$0xff]
  %v59 = vld [vmem:[%s1 + $0x78] sm:$0xff]
  %v60 = vld [vmem:[%s1 + $0x80] sm:$0xff]
  %v61 = vld [vmem:[%s1 + $0x88] sm:$0xff]
  %v62 = vld [vmem:[%s1 + $0x90] sm:$0xff]
  %v63 = vld [vmem:[%s1 + $0x98] sm:$0xff]
  %v64 = vld [vmem:[%s1 + $0xa0] sm:$0xff]
  %v65 = vld [vmem:[%s1 + $0xa8] sm:$0xff]
  %v66 = vld [vmem:[%s1 + $0xb0] sm:$0xff]
  %v67 = vld [vmem:[%s1 + $0xb8] sm:$0xff]
  %v68 = vld [vmem:[%s1 + $0xc0] sm:$0xff]
  %v69 = vld [vmem:[%s1 + $0xc8] sm:$0xff]
  %v70 = vld [vmem:[%s1 + $0xd0] sm:$0xff]
  %v71 = vld [vmem:[%s1 + $0xd8] sm:$0xff]
  %v72 = vld [vmem:[%s1 + $0xe0] sm:$0xff]
  %v73 = vld [vmem:[%s1 + $0xe8] sm:$0xff]
  %v74 = vld [vmem:[%s1 + $0xf0] sm:$0xff]
  %v75 = vld [vmem:[%s1 + $0xf8] sm:$0xff]
  %v76 = vld [vmem:[%s2] sm:$0xf]
  %v78 = vlaneseq
  %v79 = vshrl.u32 %v78, 7
  %v80 = vsub.s32 0, %v79
  %v81 = vrot.slane %v76, %v80
  %v82 = vlaneseq
  %v83 = vshrl.u32 %v82, 7
  %v84 = vsub.s32 1, %v83
  %v85 = vrot.slane %v76, %v84
  %v86 = vlaneseq
  %v87 = vshrl.u32 %v86, 7
  %v88 = vsub.s32 2, %v87
  %v89 = vrot.slane %v76, %v88
  %v90 = vlaneseq
  %v91 = vshrl.u32 %v90, 7
  %v92 = vsub.s32 3, %v91
  %v93 = vrot.slane %v76, %v92
  %v106 = vunpack.c.l.b16 %v36
  %v107 = vunpack.c.l.b16 %v37
  %v108 = vunpack.c.l.b16 %v38
  %v109 = vunpack.c.l.b16 %v39
  %v110 = vunpack.c.l.b16 %v40
  %v111 = vunpack.c.l.b16 %v41
  %v112 = vunpack.c.l.b16 %v42
  %v113 = vunpack.c.l.b16 %v43
  %v114 = vpack.c.b16 %v107, %v106
  %v115 = vpack.c.b16 %v109, %v108
  %v116 = vpack.c.b16 %v111, %v110
  %v117 = vpack.c.b16 %v113, %v112
  %v154 = vunpack.c.l.b16 %v44
  %v155 = vunpack.c.h.b16 %v44
  %v156 = vunpack.c.l.b16 %v45
  %v157 = vunpack.c.h.b16 %v45
  %v158 = vunpack.c.l.b16 %v46
  %v159 = vunpack.c.h.b16 %v46
  %v160 = vunpack.c.l.b16 %v47
  %v161 = vunpack.c.h.b16 %v47
  %v162 = vunpack.c.l.b16 %v48
  %v163 = vunpack.c.h.b16 %v48
  %v164 = vunpack.c.l.b16 %v49
  %v165 = vunpack.c.h.b16 %v49
  %v166 = vunpack.c.l.b16 %v50
  %v167 = vunpack.c.h.b16 %v50
  %v168 = vunpack.c.l.b16 %v51
  %v169 = vunpack.c.h.b16 %v51
  %v170 = vunpack.c.l.b16 %v52
  %v171 = vunpack.c.h.b16 %v52
  %v172 = vunpack.c.l.b16 %v53
  %v173 = vunpack.c.h.b16 %v53
  %v174 = vunpack.c.l.b16 %v54
  %v175 = vunpack.c.h.b16 %v54
  %v176 = vunpack.c.l.b16 %v55
  %v177 = vunpack.c.h.b16 %v55
  %v178 = vunpack.c.l.b16 %v56
  %v179 = vunpack.c.h.b16 %v56
  %v180 = vunpack.c.l.b16 %v57
  %v181 = vunpack.c.h.b16 %v57
  %v182 = vunpack.c.l.b16 %v58
  %v183 = vunpack.c.h.b16 %v58
  %v184 = vunpack.c.l.b16 %v59
  %v185 = vunpack.c.h.b16 %v59
  %v186 = vunpack.c.l.b16 %v60
  %v187 = vunpack.c.h.b16 %v60
  %v188 = vunpack.c.l.b16 %v61
  %v189 = vunpack.c.h.b16 %v61
  %v190 = vunpack.c.l.b16 %v62
  %v191 = vunpack.c.h.b16 %v62
  %v192 = vunpack.c.l.b16 %v63
  %v193 = vunpack.c.h.b16 %v63
  %v194 = vunpack.c.l.b16 %v64
  %v195 = vunpack.c.h.b16 %v64
  %v196 = vunpack.c.l.b16 %v65
  %v197 = vunpack.c.h.b16 %v65
  %v198 = vunpack.c.l.b16 %v66
  %v199 = vunpack.c.h.b16 %v66
  %v200 = vunpack.c.l.b16 %v67
  %v201 = vunpack.c.h.b16 %v67
  %v202 = vunpack.c.l.b16 %v68
  %v203 = vunpack.c.h.b16 %v68
  %v204 = vunpack.c.l.b16 %v69
  %v205 = vunpack.c.h.b16 %v69
  %v206 = vunpack.c.l.b16 %v70
  %v207 = vunpack.c.h.b16 %v70
  %v208 = vunpack.c.l.b16 %v71
  %v209 = vunpack.c.h.b16 %v71
  %v210 = vunpack.c.l.b16 %v72
  %v211 = vunpack.c.h.b16 %v72
  %v212 = vunpack.c.l.b16 %v73
  %v213 = vunpack.c.h.b16 %v73
  %v214 = vunpack.c.l.b16 %v74
  %v215 = vunpack.c.h.b16 %v74
  %v216 = vunpack.c.l.b16 %v75
  %v217 = vunpack.c.h.b16 %v75
  %v218 = vpack.c.b16 %v158, %v154
  %v219 = vpack.c.b16 %v159, %v155
  %v220 = vpack.c.b16 %v160, %v156
  %v221 = vpack.c.b16 %v161, %v157
  %v222 = vpack.c.b16 %v166, %v162
  %v223 = vpack.c.b16 %v167, %v163
  %v224 = vpack.c.b16 %v168, %v164
  %v225 = vpack.c.b16 %v169, %v165
  %v226 = vpack.c.b16 %v174, %v170
  %v227 = vpack.c.b16 %v175, %v171
  %v228 = vpack.c.b16 %v176, %v172
  %v229 = vpack.c.b16 %v177, %v173
  %v230 = vpack.c.b16 %v182, %v178
  %v231 = vpack.c.b16 %v183, %v179
  %v232 = vpack.c.b16 %v184, %v180
  %v233 = vpack.c.b16 %v185, %v181
  %v234 = vpack.c.b16 %v190, %v186
  %v235 = vpack.c.b16 %v191, %v187
  %v236 = vpack.c.b16 %v192, %v188
  %v237 = vpack.c.b16 %v193, %v189
  %v238 = vpack.c.b16 %v198, %v194
  %v239 = vpack.c.b16 %v199, %v195
  %v240 = vpack.c.b16 %v200, %v196
  %v241 = vpack.c.b16 %v201, %v197
  %v242 = vpack.c.b16 %v206, %v202
  %v243 = vpack.c.b16 %v207, %v203
  %v244 = vpack.c.b16 %v208, %v204
  %v245 = vpack.c.b16 %v209, %v205
  %v246 = vpack.c.b16 %v214, %v210
  %v247 = vpack.c.b16 %v215, %v211
  %v248 = vpack.c.b16 %v216, %v212
  %v249 = vpack.c.b16 %v217, %v213
  %282 = vmatprep.subr.bf16.mxu0 %v247
  %283 = vmatpush1.bf16.msra.mxu0 %v246
  %284 = vmatprep.subr.bf16.mxu0 %v243
  %285 = vmatpush1.bf16.msra.mxu0 %v242
  %286 = vmatprep.subr.bf16.mxu0 %v239
  %287 = vmatpush1.bf16.msra.mxu0 %v238
  %288 = vmatprep.subr.bf16.mxu0 %v235
  %289 = vmatpush1.bf16.msra.mxu0 %v234
  %290 = vmatprep.subr.bf16.mxu0 %v231
  %291 = vmatpush1.bf16.msra.mxu0 %v230
  %292 = vmatprep.subr.bf16.mxu0 %v227
  %293 = vmatpush1.bf16.msra.mxu0 %v226
  %294 = vmatprep.subr.bf16.mxu0 %v223
  %295 = vmatpush1.bf16.msra.mxu0 %v222
  %296 = vmatprep.subr.bf16.mxu0 %v219
  %297 = vmatpush1.bf16.msra.mxu0 %v218
  %298 = vmatprep.subr.bf16.mxu0 0
  %299 = vmatpush2.bf16.msra.mxu0 0
  %300 = vmatprep.subr.bf16.mxu0 0
  %301 = vmatpush2.bf16.msra.mxu0 0
  %302 = vmatprep.subr.bf16.mxu0 0
  %303 = vmatpush2.bf16.msra.mxu0 0
  %304 = vmatprep.subr.bf16.mxu0 0
  %305 = vmatpush2.bf16.msra.mxu0 0
  %306 = vmatprep.subr.bf16.mxu0 0
  %307 = vmatpush2.bf16.msra.mxu0 0
  %308 = vmatprep.subr.bf16.mxu0 0
  %309 = vmatpush2.bf16.msra.mxu0 0
  %310 = vmatprep.subr.bf16.mxu0 0
  %311 = vmatpush2.bf16.msra.mxu0 0
  %312 = vmatprep.subr.bf16.mxu0 0
  %313 = vmatpush2.bf16.msra.mxu0 0
  %314 = vmatprep.mubr.bf16.mxu0 0
  %315 = vmatmul.mubr.bf16.gmra.mxu0 %v114
  %v316 = vpop.f32.mrf.mxu0
  %v317 = vadd.f32 %v81, %v316
  %v318 = vpop.f32.mrf.mxu0
  %v319 = vadd.f32 %v85, %v318
  %v320 = vpop.f32.mrf.mxu0
  %v321 = vadd.f32 %v81, %v320
  %v322 = vpop.f32.mrf.mxu0
  %v323 = vadd.f32 %v85, %v322
  %324 = vmatprep.mubr.bf16.mxu0 0
  %325 = vmatmul.mubr.bf16.gmra.mxu0 %v115
  %v326 = vpop.f32.mrf.mxu0
  %v327 = vadd.f32 %v81, %v326
  %v328 = vpop.f32.mrf.mxu0
  %v329 = vadd.f32 %v85, %v328
  %v330 = vpop.f32.mrf.mxu0
  %v331 = vadd.f32 %v81, %v330
  %v332 = vpop.f32.mrf.mxu0
  %v333 = vadd.f32 %v85, %v332
  %334 = vmatprep.mubr.bf16.mxu0 0
  %335 = vmatmul.mubr.bf16.gmra.mxu0 %v116
  %v336 = vpop.f32.mrf.mxu0
  %v337 = vadd.f32 %v81, %v336
  %v338 = vpop.f32.mrf.mxu0
  %v339 = vadd.f32 %v85, %v338
  %v340 = vpop.f32.mrf.mxu0
  %v341 = vadd.f32 %v81, %v340
  %v342 = vpop.f32.mrf.mxu0
  %v343 = vadd.f32 %v85, %v342
  %344 = vmatprep.mubr.bf16.mxu0 0
  %345 = vmatmul.mubr.bf16.gmra.mxu0 %v117
  %v346 = vpop.f32.mrf.mxu0
  %v347 = vadd.f32 %v81, %v346
  %v348 = vpop.f32.mrf.mxu0
  %v349 = vadd.f32 %v85, %v348
  %v350 = vpop.f32.mrf.mxu0
  %v351 = vadd.f32 %v81, %v350
  %v352 = vpop.f32.mrf.mxu0
  %v353 = vadd.f32 %v85, %v352
  %354 = vdwg.mxu0
  %355 = vmatprep.subr.bf16.mxu0 %v249
  %356 = vmatpush1.bf16.msra.mxu0 %v248
  %357 = vmatprep.subr.bf16.mxu0 %v245
  %358 = vmatpush1.bf16.msra.mxu0 %v244
  %359 = vmatprep.subr.bf16.mxu0 %v241
  %360 = vmatpush1.bf16.msra.mxu0 %v240
  %361 = vmatprep.subr.bf16.mxu0 %v237
  %362 = vmatpush1.bf16.msra.mxu0 %v236
  %363 = vmatprep.subr.bf16.mxu0 %v233
  %364 = vmatpush1.bf16.msra.mxu0 %v232
  %365 = vmatprep.subr.bf16.mxu0 %v229
  %366 = vmatpush1.bf16.msra.mxu0 %v228
  %367 = vmatprep.subr.bf16.mxu0 %v225
  %368 = vmatpush1.bf16.msra.mxu0 %v224
  %369 = vmatprep.subr.bf16.mxu0 %v221
  %370 = vmatpush1.bf16.msra.mxu0 %v220
  %371 = vmatprep.subr.bf16.mxu0 0
  %372 = vmatpush2.bf16.msra.mxu0 0
  %373 = vmatprep.subr.bf16.mxu0 0
  %374 = vmatpush2.bf16.msra.mxu0 0
  %375 = vmatprep.subr.bf16.mxu0 0
  %376 = vmatpush2.bf16.msra.mxu0 0
  %377 = vmatprep.subr.bf16.mxu0 0
  %378 = vmatpush2.bf16.msra.mxu0 0
  %379 = vmatprep.subr.bf16.mxu0 0
  %380 = vmatpush2.bf16.msra.mxu0 0
  %381 = vmatprep.subr.bf16.mxu0 0
  %382 = vmatpush2.bf16.msra.mxu0 0
  %383 = vmatprep.subr.bf16.mxu0 0
  %384 = vmatpush2.bf16.msra.mxu0 0
  %385 = vmatprep.subr.bf16.mxu0 0
  %386 = vmatpush2.bf16.msra.mxu0 0
  %387 = vmatprep.mubr.bf16.mxu0 0
  %388 = vmatmul.mubr.bf16.gmra.mxu0 %v114
  %v389 = vpop.f32.mrf.mxu0
  %v390 = vadd.f32 %v89, %v389
  %v391 = vpop.f32.mrf.mxu0
  %v392 = vadd.f32 %v93, %v391
  %v393 = vpop.f32.mrf.mxu0
  %v394 = vadd.f32 %v89, %v393
  %v395 = vpop.f32.mrf.mxu0
  %v396 = vadd.f32 %v93, %v395
  %397 = vmatprep.mubr.bf16.mxu0 0
  %398 = vmatmul.mubr.bf16.gmra.mxu0 %v115
  %v399 = vpop.f32.mrf.mxu0
  %v400 = vadd.f32 %v89, %v399
  %v401 = vpop.f32.mrf.mxu0
  %v402 = vadd.f32 %v93, %v401
  %v403 = vpop.f32.mrf.mxu0
  %v404 = vadd.f32 %v89, %v403
  %v405 = vpop.f32.mrf.mxu0
  %v406 = vadd.f32 %v93, %v405
  %407 = vmatprep.mubr.bf16.mxu0 0
  %408 = vmatmul.mubr.bf16.gmra.mxu0 %v116
  %v409 = vpop.f32.mrf.mxu0
  %v410 = vadd.f32 %v89, %v409
  %v411 = vpop.f32.mrf.mxu0
  %v412 = vadd.f32 %v93, %v411
  %v413 = vpop.f32.mrf.mxu0
  %v414 = vadd.f32 %v89, %v413
  %v415 = vpop.f32.mrf.mxu0
  %v416 = vadd.f32 %v93, %v415
  %417 = vmatprep.mubr.bf16.mxu0 0
  %418 = vmatmul.mubr.bf16.gmra.mxu0 %v117
  %v419 = vpop.f32.mrf.mxu0
  %v420 = vadd.f32 %v89, %v419
  %v421 = vpop.f32.mrf.mxu0
  %v422 = vadd.f32 %v93, %v421
  %v423 = vpop.f32.mrf.mxu0
  %v424 = vadd.f32 %v89, %v423
  %v425 = vpop.f32.mrf.mxu0
  %v426 = vadd.f32 %v93, %v425
  %427 = vdwg.mxu0
  %428 = vst [vmem:[#allocation2] sm:$0xff] %v317
  %429 = vst [vmem:[#allocation2 + $0x8] sm:$0xff] %v319
  %430 = vst [vmem:[#allocation2 + $0x10] sm:$0xff] %v390
  %431 = vst [vmem:[#allocation2 + $0x18] sm:$0xff] %v392
  %432 = vst [vmem:[#allocation2 + $0x20] sm:$0xff] %v321
  %433 = vst [vmem:[#allocation2 + $0x28] sm:$0xff] %v323
  %434 = vst [vmem:[#allocation2 + $0x30] sm:$0xff] %v394
  %435 = vst [vmem:[#allocation2 + $0x38] sm:$0xff] %v396
  %436 = vst [vmem:[#allocation2 + $0x40] sm:$0xff] %v327
  %437 = vst [vmem:[#allocation2 + $0x48] sm:$0xff] %v329
  %438 = vst [vmem:[#allocation2 + $0x50] sm:$0xff] %v400
  %439 = vst [vmem:[#allocation2 + $0x58] sm:$0xff] %v402
  %440 = vst [vmem:[#allocation2 + $0x60] sm:$0xff] %v331
  %441 = vst [vmem:[#allocation2 + $0x68] sm:$0xff] %v333
  %442 = vst [vmem:[#allocation2 + $0x70] sm:$0xff] %v404
  %443 = vst [vmem:[#allocation2 + $0x78] sm:$0xff] %v406
  %444 = vst [vmem:[#allocation2 + $0x80] sm:$0xff] %v337
  %445 = vst [vmem:[#allocation2 + $0x88] sm:$0xff] %v339
  %446 = vst [vmem:[#allocation2 + $0x90] sm:$0xff] %v410
  %447 = vst [vmem:[#allocation2 + $0x98] sm:$0xff] %v412
  %448 = vst [vmem:[#allocation2 + $0xa0] sm:$0xff] %v341
  %449 = vst [vmem:[#allocation2 + $0xa8] sm:$0xff] %v343
  %450 = vst [vmem:[#allocation2 + $0xb0] sm:$0xff] %v414
  %451 = vst [vmem:[#allocation2 + $0xb8] sm:$0xff] %v416
  %452 = vst [vmem:[#allocation2 + $0xc0] sm:$0xff] %v347
  %453 = vst [vmem:[#allocation2 + $0xc8] sm:$0xff] %v349
  %454 = vst [vmem:[#allocation2 + $0xd0] sm:$0xff] %v420
  %455 = vst [vmem:[#allocation2 + $0xd8] sm:$0xff] %v422
  %456 = vst [vmem:[#allocation2 + $0xe0] sm:$0xff] %v351
  %457 = vst [vmem:[#allocation2 + $0xe8] sm:$0xff] %v353
  %458 = vst [vmem:[#allocation2 + $0xf0] sm:$0xff] %v424
  %459 = vst [vmem:[#allocation2 + $0xf8] sm:$0xff] %v426
  %v460 = vld [vmem:[%s3] sm:$0xff]
  %v461 = vld [vmem:[%s3 + $0x8] sm:$0xff]
  %v462 = vld [vmem:[%s3 + $0x10] sm:$0xff]
  %v463 = vld [vmem:[%s3 + $0x18] sm:$0xff]
  %v464 = vld [vmem:[%s3 + $0x20] sm:$0xff]
  %v465 = vld [vmem:[%s3 + $0x28] sm:$0xff]
  %v466 = vld [vmem:[%s3 + $0x30] sm:$0xff]
  %v467 = vld [vmem:[%s3 + $0x38] sm:$0xff]
  %v468 = vld [vmem:[%s3 + $0x40] sm:$0xff]
  %v469 = vld [vmem:[%s3 + $0x48] sm:$0xff]
  %v470 = vld [vmem:[%s3 + $0x50] sm:$0xff]
  %v471 = vld [vmem:[%s3 + $0x58] sm:$0xff]
  %v472 = vld [vmem:[%s3 + $0x60] sm:$0xff]
  %v473 = vld [vmem:[%s3 + $0x68] sm:$0xff]
  %v474 = vld [vmem:[%s3 + $0x70] sm:$0xff]
  %v475 = vld [vmem:[%s3 + $0x78] sm:$0xff]
  %v476 = vld [vmem:[%s3 + $0x80] sm:$0xff]
  %v477 = vld [vmem:[%s3 + $0x88] sm:$0xff]
  %v478 = vld [vmem:[%s3 + $0x90] sm:$0xff]
  %v479 = vld [vmem:[%s3 + $0x98] sm:$0xff]
  %v480 = vld [vmem:[%s3 + $0xa0] sm:$0xff]
  %v481 = vld [vmem:[%s3 + $0xa8] sm:$0xff]
  %v482 = vld [vmem:[%s3 + $0xb0] sm:$0xff]
  %v483 = vld [vmem:[%s3 + $0xb8] sm:$0xff]
  %v484 = vld [vmem:[%s3 + $0xc0] sm:$0xff]
  %v485 = vld [vmem:[%s3 + $0xc8] sm:$0xff]
  %v486 = vld [vmem:[%s3 + $0xd0] sm:$0xff]
  %v487 = vld [vmem:[%s3 + $0xd8] sm:$0xff]
  %v488 = vld [vmem:[%s3 + $0xe0] sm:$0xff]
  %v489 = vld [vmem:[%s3 + $0xe8] sm:$0xff]
  %v490 = vld [vmem:[%s3 + $0xf0] sm:$0xff]
  %v491 = vld [vmem:[%s3 + $0xf8] sm:$0xff]
  %v492 = vld [vmem:[#allocation3] sm:$0xf]
  %v493 = vld [vmem:[#allocation4] sm:$0xff]
  %v494 = vld [vmem:[#allocation2] sm:$0xff]
  %v495 = vld [vmem:[#allocation2 + $0x8] sm:$0xff]
  %v496 = vld [vmem:[#allocation2 + $0x10] sm:$0xff]
  %v497 = vld [vmem:[#allocation2 + $0x18] sm:$0xff]
  %v530 = vunpack.c.l.b16 %v460
  %v531 = vunpack.c.h.b16 %v460
  %v532 = vunpack.c.l.b16 %v461
  %v533 = vunpack.c.h.b16 %v461
  %v534 = vunpack.c.l.b16 %v462
  %v535 = vunpack.c.h.b16 %v462
  %v536 = vunpack.c.l.b16 %v463
  %v537 = vunpack.c.h.b16 %v463
  %v538 = vunpack.c.l.b16 %v464
  %v539 = vunpack.c.h.b16 %v464
  %v540 = vunpack.c.l.b16 %v465
  %v541 = vunpack.c.h.b16 %v465
  %v542 = vunpack.c.l.b16 %v466
  %v543 = vunpack.c.h.b16 %v466
  %v544 = vunpack.c.l.b16 %v467
  %v545 = vunpack.c.h.b16 %v467
  %v546 = vunpack.c.l.b16 %v468
  %v547 = vunpack.c.h.b16 %v468
  %v548 = vunpack.c.l.b16 %v469
  %v549 = vunpack.c.h.b16 %v469
  %v550 = vunpack.c.l.b16 %v470
  %v551 = vunpack.c.h.b16 %v470
  %v552 = vunpack.c.l.b16 %v471
  %v553 = vunpack.c.h.b16 %v471
  %v554 = vunpack.c.l.b16 %v472
  %v555 = vunpack.c.h.b16 %v472
  %v556 = vunpack.c.l.b16 %v473
  %v557 = vunpack.c.h.b16 %v473
  %v558 = vunpack.c.l.b16 %v474
  %v559 = vunpack.c.h.b16 %v474
  %v560 = vunpack.c.l.b16 %v475
  %v561 = vunpack.c.h.b16 %v475
  %v562 = vunpack.c.l.b16 %v476
  %v563 = vunpack.c.h.b16 %v476
  %v564 = vunpack.c.l.b16 %v477
  %v565 = vunpack.c.h.b16 %v477
  %v566 = vunpack.c.l.b16 %v478
  %v567 = vunpack.c.h.b16 %v478
  %v568 = vunpack.c.l.b16 %v479
  %v569 = vunpack.c.h.b16 %v479
  %v570 = vunpack.c.l.b16 %v480
  %v571 = vunpack.c.h.b16 %v480
  %v572 = vunpack.c.l.b16 %v481
  %v573 = vunpack.c.h.b16 %v481
  %v574 = vunpack.c.l.b16 %v482
  %v575 = vunpack.c.h.b16 %v482
  %v576 = vunpack.c.l.b16 %v483
  %v577 = vunpack.c.h.b16 %v483
  %v578 = vunpack.c.l.b16 %v484
  %v579 = vunpack.c.h.b16 %v484
  %v580 = vunpack.c.l.b16 %v485
  %v581 = vunpack.c.h.b16 %v485
  %v582 = vunpack.c.l.b16 %v486
  %v583 = vunpack.c.h.b16 %v486
  %v584 = vunpack.c.l.b16 %v487
  %v585 = vunpack.c.h.b16 %v487
  %v586 = vunpack.c.l.b16 %v488
  %v587 = vunpack.c.h.b16 %v488
  %v588 = vunpack.c.l.b16 %v489
  %v589 = vunpack.c.h.b16 %v489
  %v590 = vunpack.c.l.b16 %v490
  %v591 = vunpack.c.h.b16 %v490
  %v592 = vunpack.c.l.b16 %v491
  %v593 = vunpack.c.h.b16 %v491
  %v594 = vpack.c.b16 %v534, %v530
  %v595 = vpack.c.b16 %v535, %v531
  %v596 = vpack.c.b16 %v536, %v532
  %v597 = vpack.c.b16 %v537, %v533
  %v598 = vpack.c.b16 %v542, %v538
  %v599 = vpack.c.b16 %v543, %v539
  %v600 = vpack.c.b16 %v544, %v540
  %v601 = vpack.c.b16 %v545, %v541
  %v602 = vpack.c.b16 %v550, %v546
  %v603 = vpack.c.b16 %v551, %v547
  %v604 = vpack.c.b16 %v552, %v548
  %v605 = vpack.c.b16 %v553, %v549
  %v606 = vpack.c.b16 %v558, %v554
  %v607 = vpack.c.b16 %v559, %v555
  %v608 = vpack.c.b16 %v560, %v556
  %v609 = vpack.c.b16 %v561, %v557
  %v610 = vpack.c.b16 %v566, %v562
  %v611 = vpack.c.b16 %v567, %v563
  %v612 = vpack.c.b16 %v568, %v564
  %v613 = vpack.c.b16 %v569, %v565
  %v614 = vpack.c.b16 %v574, %v570
  %v615 = vpack.c.b16 %v575, %v571
  %v616 = vpack.c.b16 %v576, %v572
  %v617 = vpack.c.b16 %v577, %v573
  %v618 = vpack.c.b16 %v582, %v578
  %v619 = vpack.c.b16 %v583, %v579
  %v620 = vpack.c.b16 %v584, %v580
  %v621 = vpack.c.b16 %v585, %v581
  %v622 = vpack.c.b16 %v590, %v586
  %v623 = vpack.c.b16 %v591, %v587
  %v624 = vpack.c.b16 %v592, %v588
  %v625 = vpack.c.b16 %v593, %v589
  %658 = vmatprep.subr.bf16.mxu0 %v623
  %659 = vmatpush1.bf16.msra.mxu0 %v622
  %660 = vmatprep.subr.bf16.mxu0 %v619
  %661 = vmatpush1.bf16.msra.mxu0 %v618
  %662 = vmatprep.subr.bf16.mxu0 %v615
  %663 = vmatpush1.bf16.msra.mxu0 %v614
  %664 = vmatprep.subr.bf16.mxu0 %v611
  %665 = vmatpush1.bf16.msra.mxu0 %v610
  %666 = vmatprep.subr.bf16.mxu0 %v607
  %667 = vmatpush1.bf16.msra.mxu0 %v606
  %668 = vmatprep.subr.bf16.mxu0 %v603
  %669 = vmatpush1.bf16.msra.mxu0 %v602
  %670 = vmatprep.subr.bf16.mxu0 %v599
  %671 = vmatpush1.bf16.msra.mxu0 %v598
  %672 = vmatprep.subr.bf16.mxu0 %v595
  %673 = vmatpush1.bf16.msra.mxu0 %v594
  %674 = vmatprep.subr.bf16.mxu0 0
  %675 = vmatpush2.bf16.msra.mxu0 0
  %676 = vmatprep.subr.bf16.mxu0 0
  %677 = vmatpush2.bf16.msra.mxu0 0
  %678 = vmatprep.subr.bf16.mxu0 0
  %679 = vmatpush2.bf16.msra.mxu0 0
  %680 = vmatprep.subr.bf16.mxu0 0
  %681 = vmatpush2.bf16.msra.mxu0 0
  %682 = vmatprep.subr.bf16.mxu0 0
  %683 = vmatpush2.bf16.msra.mxu0 0
  %684 = vmatprep.subr.bf16.mxu0 0
  %685 = vmatpush2.bf16.msra.mxu0 0
  %686 = vmatprep.subr.bf16.mxu0 0
  %687 = vmatpush2.bf16.msra.mxu0 0
  %688 = vmatprep.subr.bf16.mxu0 0
  %689 = vmatpush2.bf16.msra.mxu0 0
  %690 = vmatprep.mubr.bf16.mxu0 0
  %691 = vmatmul.mubr.bf16.gmra.mxu0 %v492
  %v692 = vpop.f32.mrf.mxu0
  %v693 = vadd.f32 0.0, %v692
  %v694 = vpop.f32.mrf.mxu0
  %v695 = vadd.f32 0.0, %v694
  %v696 = vpop.f32.mrf.mxu0
  %v697 = vpop.f32.mrf.mxu0
  %698 = vdwg.mxu0
  %699 = vmatprep.subr.bf16.mxu0 %v625
  %700 = vmatpush1.bf16.msra.mxu0 %v624
  %701 = vmatprep.subr.bf16.mxu0 %v621
  %702 = vmatpush1.bf16.msra.mxu0 %v620
  %703 = vmatprep.subr.bf16.mxu0 %v617
  %704 = vmatpush1.bf16.msra.mxu0 %v616
  %705 = vmatprep.subr.bf16.mxu0 %v613
  %706 = vmatpush1.bf16.msra.mxu0 %v612
  %707 = vmatprep.subr.bf16.mxu0 %v609
  %708 = vmatpush1.bf16.msra.mxu0 %v608
  %709 = vmatprep.subr.bf16.mxu0 %v605
  %710 = vmatpush1.bf16.msra.mxu0 %v604
  %711 = vmatprep.subr.bf16.mxu0 %v601
  %712 = vmatpush1.bf16.msra.mxu0 %v600
  %713 = vmatprep.subr.bf16.mxu0 %v597
  %714 = vmatpush1.bf16.msra.mxu0 %v596
  %715 = vmatprep.subr.bf16.mxu0 0
  %716 = vmatpush2.bf16.msra.mxu0 0
  %717 = vmatprep.subr.bf16.mxu0 0
  %718 = vmatpush2.bf16.msra.mxu0 0
  %719 = vmatprep.subr.bf16.mxu0 0
  %720 = vmatpush2.bf16.msra.mxu0 0
  %721 = vmatprep.subr.bf16.mxu0 0
  %722 = vmatpush2.bf16.msra.mxu0 0
  %723 = vmatprep.subr.bf16.mxu0 0
  %724 = vmatpush2.bf16.msra.mxu0 0
  %725 = vmatprep.subr.bf16.mxu0 0
  %726 = vmatpush2.bf16.msra.mxu0 0
  %727 = vmatprep.subr.bf16.mxu0 0
  %728 = vmatpush2.bf16.msra.mxu0 0
  %729 = vmatprep.subr.bf16.mxu0 0
  %730 = vmatpush2.bf16.msra.mxu0 0
  %731 = vmatprep.mubr.bf16.mxu0 0
  %732 = vmatmul.mubr.bf16.gmra.mxu0 %v492
  %v733 = vpop.f32.mrf.mxu0
  %v734 = vadd.f32 0.0, %v733
  %v735 = vpop.f32.mrf.mxu0
  %v736 = vadd.f32 0.0, %v735
  %v737 = vpop.f32.mrf.mxu0
  %v738 = vpop.f32.mrf.mxu0
  %739 = vdwg.mxu0
  %v740 = vadd.f32 %v494, %v693
  %v741 = vadd.f32 %v495, %v695
  %v742 = vadd.f32 %v496, %v734
  %v743 = vadd.f32 %v497, %v736
  %v744 = vmul.f32 %v740, 0.5
  %v745 = vtanh.pop %v744
  %v746 = vmul.f32 %v745, 0.5
  %v747 = vadd.f32 %v746, 0.5
  %v748 = vmul.f32 %v741, 0.5
  %v749 = vtanh.pop %v748
  %v750 = vmul.f32 %v749, 0.5
  %v751 = vadd.f32 %v750, 0.5
  %v752 = vtanh.pop %v742
  %v753 = vmul.f32 %v743, 0.5
  %v754 = vtanh.pop %v753
  %v755 = vmul.f32 %v754, 0.5
  %v756 = vadd.f32 %v755, 0.5
  %v757 = vmul.f32 %v751, %v493
  %v758 = vmul.f32 %v747, %v752
  %v759 = vadd.f32 %v757, %v758
  %v760 = vtanh.pop %v759
  %v761 = vmul.f32 %v756, %v760
  %v762 = vpack.c.bf16 %v761, %v761
  %763 = vst [vmem:[%s6] sm:$0xf] %v762
  %s764 = scalar_lea.vmem [#allocation2], 32
  %v765 = vld [vmem:[%s764] sm:$0xff]
  %v766 = vld [vmem:[%s764 + $0x8] sm:$0xff]
  %v767 = vld [vmem:[%s764 + $0x10] sm:$0xff]
  %v768 = vld [vmem:[%s764 + $0x18] sm:$0xff]
  %769 = vmatprep.subr.bf16.mxu0 %v623
  %770 = vmatpush1.bf16.msra.mxu0 %v622
  %771 = vmatprep.subr.bf16.mxu0 %v619
  %772 = vmatpush1.bf16.msra.mxu0 %v618
  %773 = vmatprep.subr.bf16.mxu0 %v615
  %774 = vmatpush1.bf16.msra.mxu0 %v614
  %775 = vmatprep.subr.bf16.mxu0 %v611
  %776 = vmatpush1.bf16.msra.mxu0 %v610
  %777 = vmatprep.subr.bf16.mxu0 %v607
  %778 = vmatpush1.bf16.msra.mxu0 %v606
  %779 = vmatprep.subr.bf16.mxu0 %v603
  %780 = vmatpush1.bf16.msra.mxu0 %v602
  %781 = vmatprep.subr.bf16.mxu0 %v599
  %782 = vmatpush1.bf16.msra.mxu0 %v598
  %783 = vmatprep.subr.bf16.mxu0 %v595
  %784 = vmatpush1.bf16.msra.mxu0 %v594
  %785 = vmatprep.subr.bf16.mxu0 0
  %786 = vmatpush2.bf16.msra.mxu0 0
  %787 = vmatprep.subr.bf16.mxu0 0
  %788 = vmatpush2.bf16.msra.mxu0 0
  %789 = vmatprep.subr.bf16.mxu0 0
  %790 = vmatpush2.bf16.msra.mxu0 0
  %791 = vmatprep.subr.bf16.mxu0 0
  %792 = vmatpush2.bf16.msra.mxu0 0
  %793 = vmatprep.subr.bf16.mxu0 0
  %794 = vmatpush2.bf16.msra.mxu0 0
  %795 = vmatprep.subr.bf16.mxu0 0
  %796 = vmatpush2.bf16.msra.mxu0 0
  %797 = vmatprep.subr.bf16.mxu0 0
  %798 = vmatpush2.bf16.msra.mxu0 0
  %799 = vmatprep.subr.bf16.mxu0 0
  %800 = vmatpush2.bf16.msra.mxu0 0
  %801 = vmatprep.mubr.bf16.mxu0 0
  %802 = vmatmul.mubr.bf16.gmra.mxu0 %v762
  %v803 = vpop.f32.mrf.mxu0
  %v804 = vadd.f32 0.0, %v803
  %v805 = vpop.f32.mrf.mxu0
  %v806 = vadd.f32 0.0, %v805
  %v807 = vpop.f32.mrf.mxu0
  %v808 = vpop.f32.mrf.mxu0
  %809 = vdwg.mxu0
  %810 = vmatprep.subr.bf16.mxu0 %v625
  %811 = vmatpush1.bf16.msra.mxu0 %v624
  %812 = vmatprep.subr.bf16.mxu0 %v621
  %813 = vmatpush1.bf16.msra.mxu0 %v620
  %814 = vmatprep.subr.bf16.mxu0 %v617
  %815 = vmatpush1.bf16.msra.mxu0 %v616
  %816 = vmatprep.subr.bf16.mxu0 %v613
  %817 = vmatpush1.bf16.msra.mxu0 %v612
  %818 = vmatprep.subr.bf16.mxu0 %v609
  %819 = vmatpush1.bf16.msra.mxu0 %v608
  %820 = vmatprep.subr.bf16.mxu0 %v605
  %821 = vmatpush1.bf16.msra.mxu0 %v604
  %822 = vmatprep.subr.bf16.mxu0 %v601
  %823 = vmatpush1.bf16.msra.mxu0 %v600
  %824 = vmatprep.subr.bf16.mxu0 %v597
  %825 = vmatpush1.bf16.msra.mxu0 %v596
  %826 = vmatprep.subr.bf16.mxu0 0
  %827 = vmatpush2.bf16.msra.mxu0 0
  %828 = vmatprep.subr.bf16.mxu0 0
  %829 = vmatpush2.bf16.msra.mxu0 0
  %830 = vmatprep.subr.bf16.mxu0 0
  %831 = vmatpush2.bf16.msra.mxu0 0
  %832 = vmatprep.subr.bf16.mxu0 0
  %833 = vmatpush2.bf16.msra.mxu0 0
  %834 = vmatprep.subr.bf16.mxu0 0
  %835 = vmatpush2.bf16.msra.mxu0 0
  %836 = vmatprep.subr.bf16.mxu0 0
  %837 = vmatpush2.bf16.msra.mxu0 0
  %838 = vmatprep.subr.bf16.mxu0 0
  %839 = vmatpush2.bf16.msra.mxu0 0
  %840 = vmatprep.subr.bf16.mxu0 0
  %841 = vmatpush2.bf16.msra.mxu0 0
  %842 = vmatprep.mubr.bf16.mxu0 0
  %843 = vmatmul.mubr.bf16.gmra.mxu0 %v762
  %v844 = vpop.f32.mrf.mxu0
  %v845 = vadd.f32 0.0, %v844
  %v846 = vpop.f32.mrf.mxu0
  %v847 = vadd.f32 0.0, %v846
  %v848 = vpop.f32.mrf.mxu0
  %v849 = vpop.f32.mrf.mxu0
  %850 = vdwg.mxu0
  %v851 = vadd.f32 %v765, %v804
  %v852 = vadd.f32 %v766, %v806
  %v853 = vadd.f32 %v767, %v845
  %v854 = vadd.f32 %v768, %v847
  %v855 = vmul.f32 %v851, 0.5
  %v856 = vtanh.pop %v855
  %v857 = vmul.f32 %v856, 0.5
  %v858 = vadd.f32 %v857, 0.5
  %v859 = vmul.f32 %v852, 0.5
  %v860 = vtanh.pop %v859
  %v861 = vmul.f32 %v860, 0.5
  %v862 = vadd.f32 %v861, 0.5
  %v863 = vtanh.pop %v853
  %v864 = vmul.f32 %v854, 0.5
  %v865 = vtanh.pop %v864
  %v866 = vmul.f32 %v865, 0.5
  %v867 = vadd.f32 %v866, 0.5
  %v868 = vmul.f32 %v862, %v759
  %v869 = vmul.f32 %v858, %v863
  %v870 = vadd.f32 %v868, %v869
  %v871 = vtanh.pop %v870
  %v872 = vmul.f32 %v867, %v871
  %v873 = vpack.c.bf16 %v872, %v872
  %s874 = scalar_lea.vmem %s6, 4
  %875 = vst [vmem:[%s874] sm:$0xf] %v873
  %s876 = scalar_lea.vmem [#allocation2], 64
  %v877 = vld [vmem:[%s876] sm:$0xff]
  %v878 = vld [vmem:[%s876 + $0x8] sm:$0xff]
  %v879 = vld [vmem:[%s876 + $0x10] sm:$0xff]
  %v880 = vld [vmem:[%s876 + $0x18] sm:$0xff]
  %881 = vmatprep.subr.bf16.mxu0 %v623
  %882 = vmatpush1.bf16.msra.mxu0 %v622
  %883 = vmatprep.subr.bf16.mxu0 %v619
  %884 = vmatpush1.bf16.msra.mxu0 %v618
  %885 = vmatprep.subr.bf16.mxu0 %v615
  %886 = vmatpush1.bf16.msra.mxu0 %v614
  %887 = vmatprep.subr.bf16.mxu0 %v611
  %888 = vmatpush1.bf16.msra.mxu0 %v610
  %889 = vmatprep.subr.bf16.mxu0 %v607
  %890 = vmatpush1.bf16.msra.mxu0 %v606
  %891 = vmatprep.subr.bf16.mxu0 %v603
  %892 = vmatpush1.bf16.msra.mxu0 %v602
  %893 = vmatprep.subr.bf16.mxu0 %v599
  %894 = vmatpush1.bf16.msra.mxu0 %v598
  %895 = vmatprep.subr.bf16.mxu0 %v595
  %896 = vmatpush1.bf16.msra.mxu0 %v594
  %897 = vmatprep.subr.bf16.mxu0 0
  %898 = vmatpush2.bf16.msra.mxu0 0
  %899 = vmatprep.subr.bf16.mxu0 0
  %900 = vmatpush2.bf16.msra.mxu0 0
  %901 = vmatprep.subr.bf16.mxu0 0
  %902 = vmatpush2.bf16.msra.mxu0 0
  %903 = vmatprep.subr.bf16.mxu0 0
  %904 = vmatpush2.bf16.msra.mxu0 0
  %905 = vmatprep.subr.bf16.mxu0 0
  %906 = vmatpush2.bf16.msra.mxu0 0
  %907 = vmatprep.subr.bf16.mxu0 0
  %908 = vmatpush2.bf16.msra.mxu0 0
  %909 = vmatprep.subr.bf16.mxu0 0
  %910 = vmatpush2.bf16.msra.mxu0 0
  %911 = vmatprep.subr.bf16.mxu0 0
  %912 = vmatpush2.bf16.msra.mxu0 0
  %913 = vmatprep.mubr.bf16.mxu0 0
  %914 = vmatmul.mubr.bf16.gmra.mxu0 %v873
  %v915 = vpop.f32.mrf.mxu0
  %v916 = vadd.f32 0.0, %v915
  %v917 = vpop.f32.mrf.mxu0
  %v918 = vadd.f32 0.0, %v917
  %v919 = vpop.f32.mrf.mxu0
  %v920 = vpop.f32.mrf.mxu0
  %921 = vdwg.mxu0
  %922 = vmatprep.subr.bf16.mxu0 %v625
  %923 = vmatpush1.bf16.msra.mxu0 %v624
  %924 = vmatprep.subr.bf16.mxu0 %v621
  %925 = vmatpush1.bf16.msra.mxu0 %v620
  %926 = vmatprep.subr.bf16.mxu0 %v617
  %927 = vmatpush1.bf16.msra.mxu0 %v616
  %928 = vmatprep.subr.bf16.mxu0 %v613
  %929 = vmatpush1.bf16.msra.mxu0 %v612
  %930 = vmatprep.subr.bf16.mxu0 %v609
  %931 = vmatpush1.bf16.msra.mxu0 %v608
  %932 = vmatprep.subr.bf16.mxu0 %v605
  %933 = vmatpush1.bf16.msra.mxu0 %v604
  %934 = vmatprep.subr.bf16.mxu0 %v601
  %935 = vmatpush1.bf16.msra.mxu0 %v600
  %936 = vmatprep.subr.bf16.mxu0 %v597
  %937 = vmatpush1.bf16.msra.mxu0 %v596
  %938 = vmatprep.subr.bf16.mxu0 0
  %939 = vmatpush2.bf16.msra.mxu0 0
  %940 = vmatprep.subr.bf16.mxu0 0
  %941 = vmatpush2.bf16.msra.mxu0 0
  %942 = vmatprep.subr.bf16.mxu0 0
  %943 = vmatpush2.bf16.msra.mxu0 0
  %944 = vmatprep.subr.bf16.mxu0 0
  %945 = vmatpush2.bf16.msra.mxu0 0
  %946 = vmatprep.subr.bf16.mxu0 0
  %947 = vmatpush2.bf16.msra.mxu0 0
  %948 = vmatprep.subr.bf16.mxu0 0
  %949 = vmatpush2.bf16.msra.mxu0 0
  %950 = vmatprep.subr.bf16.mxu0 0
  %951 = vmatpush2.bf16.msra.mxu0 0
  %952 = vmatprep.subr.bf16.mxu0 0
  %953 = vmatpush2.bf16.msra.mxu0 0
  %954 = vmatprep.mubr.bf16.mxu0 0
  %955 = vmatmul.mubr.bf16.gmra.mxu0 %v873
  %v956 = vpop.f32.mrf.mxu0
  %v957 = vadd.f32 0.0, %v956
  %v958 = vpop.f32.mrf.mxu0
  %v959 = vadd.f32 0.0, %v958
  %v960 = vpop.f32.mrf.mxu0
  %v961 = vpop.f32.mrf.mxu0
  %962 = vdwg.mxu0
  %v963 = vadd.f32 %v877, %v916
  %v964 = vadd.f32 %v878, %v918
  %v965 = vadd.f32 %v879, %v957
  %v966 = vadd.f32 %v880, %v959
  %v967 = vmul.f32 %v963, 0.5
  %v968 = vtanh.pop %v967
  %v969 = vmul.f32 %v968, 0.5
  %v970 = vadd.f32 %v969, 0.5
  %v971 = vmul.f32 %v964, 0.5
  %v972 = vtanh.pop %v971
  %v973 = vmul.f32 %v972, 0.5
  %v974 = vadd.f32 %v973, 0.5
  %v975 = vtanh.pop %v965
  %v976 = vmul.f32 %v966, 0.5
  %v977 = vtanh.pop %v976
  %v978 = vmul.f32 %v977, 0.5
  %v979 = vadd.f32 %v978, 0.5
  %v980 = vmul.f32 %v974, %v870
  %v981 = vmul.f32 %v970, %v975
  %v982 = vadd.f32 %v980, %v981
  %v983 = vtanh.pop %v982
  %v984 = vmul.f32 %v979, %v983
  %v985 = vpack.c.bf16 %v984, %v984
  %s986 = scalar_lea.vmem %s6, 8
  %987 = vst [vmem:[%s986] sm:$0xf] %v985
  %s988 = scalar_lea.vmem [#allocation2], 96
  %v989 = vld [vmem:[%s988] sm:$0xff]
  %v990 = vld [vmem:[%s988 + $0x8] sm:$0xff]
  %v991 = vld [vmem:[%s988 + $0x10] sm:$0xff]
  %v992 = vld [vmem:[%s988 + $0x18] sm:$0xff]
  %993 = vmatprep.subr.bf16.mxu0 %v623
  %994 = vmatpush1.bf16.msra.mxu0 %v622
  %995 = vmatprep.subr.bf16.mxu0 %v619
  %996 = vmatpush1.bf16.msra.mxu0 %v618
  %997 = vmatprep.subr.bf16.mxu0 %v615
  %998 = vmatpush1.bf16.msra.mxu0 %v614
  %999 = vmatprep.subr.bf16.mxu0 %v611
  %1000 = vmatpush1.bf16.msra.mxu0 %v610
  %1001 = vmatprep.subr.bf16.mxu0 %v607
  %1002 = vmatpush1.bf16.msra.mxu0 %v606
  %1003 = vmatprep.subr.bf16.mxu0 %v603
  %1004 = vmatpush1.bf16.msra.mxu0 %v602
  %1005 = vmatprep.subr.bf16.mxu0 %v599
  %1006 = vmatpush1.bf16.msra.mxu0 %v598
  %1007 = vmatprep.subr.bf16.mxu0 %v595
  %1008 = vmatpush1.bf16.msra.mxu0 %v594
  %1009 = vmatprep.subr.bf16.mxu0 0
  %1010 = vmatpush2.bf16.msra.mxu0 0
  %1011 = vmatprep.subr.bf16.mxu0 0
  %1012 = vmatpush2.bf16.msra.mxu0 0
  %1013 = vmatprep.subr.bf16.mxu0 0
  %1014 = vmatpush2.bf16.msra.mxu0 0
  %1015 = vmatprep.subr.bf16.mxu0 0
  %1016 = vmatpush2.bf16.msra.mxu0 0
  %1017 = vmatprep.subr.bf16.mxu0 0
  %1018 = vmatpush2.bf16.msra.mxu0 0
  %1019 = vmatprep.subr.bf16.mxu0 0
  %1020 = vmatpush2.bf16.msra.mxu0 0
  %1021 = vmatprep.subr.bf16.mxu0 0
  %1022 = vmatpush2.bf16.msra.mxu0 0
  %1023 = vmatprep.subr.bf16.mxu0 0
  %1024 = vmatpush2.bf16.msra.mxu0 0
  %1025 = vmatprep.mubr.bf16.mxu0 0
  %1026 = vmatmul.mubr.bf16.gmra.mxu0 %v985
  %v1027 = vpop.f32.mrf.mxu0
  %v1028 = vadd.f32 0.0, %v1027
  %v1029 = vpop.f32.mrf.mxu0
  %v1030 = vadd.f32 0.0, %v1029
  %v1031 = vpop.f32.mrf.mxu0
  %v1032 = vpop.f32.mrf.mxu0
  %1033 = vdwg.mxu0
  %1034 = vmatprep.subr.bf16.mxu0 %v625
  %1035 = vmatpush1.bf16.msra.mxu0 %v624
  %1036 = vmatprep.subr.bf16.mxu0 %v621
  %1037 = vmatpush1.bf16.msra.mxu0 %v620
  %1038 = vmatprep.subr.bf16.mxu0 %v617
  %1039 = vmatpush1.bf16.msra.mxu0 %v616
  %1040 = vmatprep.subr.bf16.mxu0 %v613
  %1041 = vmatpush1.bf16.msra.mxu0 %v612
  %1042 = vmatprep.subr.bf16.mxu0 %v609
  %1043 = vmatpush1.bf16.msra.mxu0 %v608
  %1044 = vmatprep.subr.bf16.mxu0 %v605
  %1045 = vmatpush1.bf16.msra.mxu0 %v604
  %1046 = vmatprep.subr.bf16.mxu0 %v601
  %1047 = vmatpush1.bf16.msra.mxu0 %v600
  %1048 = vmatprep.subr.bf16.mxu0 %v597
  %1049 = vmatpush1.bf16.msra.mxu0 %v596
  %1050 = vmatprep.subr.bf16.mxu0 0
  %1051 = vmatpush2.bf16.msra.mxu0 0
  %1052 = vmatprep.subr.bf16.mxu0 0
  %1053 = vmatpush2.bf16.msra.mxu0 0
  %1054 = vmatprep.subr.bf16.mxu0 0
  %1055 = vmatpush2.bf16.msra.mxu0 0
  %1056 = vmatprep.subr.bf16.mxu0 0
  %1057 = vmatpush2.bf16.msra.mxu0 0
  %1058 = vmatprep.subr.bf16.mxu0 0
  %1059 = vmatpush2.bf16.msra.mxu0 0
  %1060 = vmatprep.subr.bf16.mxu0 0
  %1061 = vmatpush2.bf16.msra.mxu0 0
  %1062 = vmatprep.subr.bf16.mxu0 0
  %1063 = vmatpush2.bf16.msra.mxu0 0
  %1064 = vmatprep.subr.bf16.mxu0 0
  %1065 = vmatpush2.bf16.msra.mxu0 0
  %1066 = vmatprep.mubr.bf16.mxu0 0
  %1067 = vmatmul.mubr.bf16.gmra.mxu0 %v985
  %v1068 = vpop.f32.mrf.mxu0
  %v1069 = vadd.f32 0.0, %v1068
  %v1070 = vpop.f32.mrf.mxu0
  %v1071 = vadd.f32 0.0, %v1070
  %v1072 = vpop.f32.mrf.mxu0
  %v1073 = vpop.f32.mrf.mxu0
  %1074 = vdwg.mxu0
  %v1075 = vadd.f32 %v989, %v1028
  %v1076 = vadd.f32 %v990, %v1030
  %v1077 = vadd.f32 %v991, %v1069
  %v1078 = vadd.f32 %v992, %v1071
  %v1079 = vmul.f32 %v1075, 0.5
  %v1080 = vtanh.pop %v1079
  %v1081 = vmul.f32 %v1080, 0.5
  %v1082 = vadd.f32 %v1081, 0.5
  %v1083 = vmul.f32 %v1076, 0.5
  %v1084 = vtanh.pop %v1083
  %v1085 = vmul.f32 %v1084, 0.5
  %v1086 = vadd.f32 %v1085, 0.5
  %v1087 = vtanh.pop %v1077
  %v1088 = vmul.f32 %v1078, 0.5
  %v1089 = vtanh.pop %v1088
  %v1090 = vmul.f32 %v1089, 0.5
  %v1091 = vadd.f32 %v1090, 0.5
  %v1092 = vmul.f32 %v1086, %v982
  %v1093 = vmul.f32 %v1082, %v1087
  %v1094 = vadd.f32 %v1092, %v1093
  %v1095 = vtanh.pop %v1094
  %v1096 = vmul.f32 %v1091, %v1095
  %v1097 = vpack.c.bf16 %v1096, %v1096
  %s1098 = scalar_lea.vmem %s6, 12
  %1099 = vst [vmem:[%s1098] sm:$0xf] %v1097
  %s1100 = scalar_lea.vmem [#allocation2], 128
  %v1101 = vld [vmem:[%s1100] sm:$0xff]
  %v1102 = vld [vmem:[%s1100 + $0x8] sm:$0xff]
  %v1103 = vld [vmem:[%s1100 + $0x10] sm:$0xff]
  %v1104 = vld [vmem:[%s1100 + $0x18] sm:$0xff]
  %1105 = vmatprep.subr.bf16.mxu0 %v623
  %1106 = vmatpush1.bf16.msra.mxu0 %v622
  %1107 = vmatprep.subr.bf16.mxu0 %v619
  %1108 = vmatpush1.bf16.msra.mxu0 %v618
  %1109 = vmatprep.subr.bf16.mxu0 %v615
  %1110 = vmatpush1.bf16.msra.mxu0 %v614
  %1111 = vmatprep.subr.bf16.mxu0 %v611
  %1112 = vmatpush1.bf16.msra.mxu0 %v610
  %1113 = vmatprep.subr.bf16.mxu0 %v607
  %1114 = vmatpush1.bf16.msra.mxu0 %v606
  %1115 = vmatprep.subr.bf16.mxu0 %v603
  %1116 = vmatpush1.bf16.msra.mxu0 %v602
  %1117 = vmatprep.subr.bf16.mxu0 %v599
  %1118 = vmatpush1.bf16.msra.mxu0 %v598
  %1119 = vmatprep.subr.bf16.mxu0 %v595
  %1120 = vmatpush1.bf16.msra.mxu0 %v594
  %1121 = vmatprep.subr.bf16.mxu0 0
  %1122 = vmatpush2.bf16.msra.mxu0 0
  %1123 = vmatprep.subr.bf16.mxu0 0
  %1124 = vmatpush2.bf16.msra.mxu0 0
  %1125 = vmatprep.subr.bf16.mxu0 0
  %1126 = vmatpush2.bf16.msra.mxu0 0
  %1127 = vmatprep.subr.bf16.mxu0 0
  %1128 = vmatpush2.bf16.msra.mxu0 0
  %1129 = vmatprep.subr.bf16.mxu0 0
  %1130 = vmatpush2.bf16.msra.mxu0 0
  %1131 = vmatprep.subr.bf16.mxu0 0
  %1132 = vmatpush2.bf16.msra.mxu0 0
  %1133 = vmatprep.subr.bf16.mxu0 0
  %1134 = vmatpush2.bf16.msra.mxu0 0
  %1135 = vmatprep.subr.bf16.mxu0 0
  %1136 = vmatpush2.bf16.msra.mxu0 0
  %1137 = vmatprep.mubr.bf16.mxu0 0
  %1138 = vmatmul.mubr.bf16.gmra.mxu0 %v1097
  %v1139 = vpop.f32.mrf.mxu0
  %v1140 = vadd.f32 0.0, %v1139
  %v1141 = vpop.f32.mrf.mxu0
  %v1142 = vadd.f32 0.0, %v1141
  %v1143 = vpop.f32.mrf.mxu0
  %v1144 = vpop.f32.mrf.mxu0
  %1145 = vdwg.mxu0
  %1146 = vmatprep.subr.bf16.mxu0 %v625
  %1147 = vmatpush1.bf16.msra.mxu0 %v624
  %1148 = vmatprep.subr.bf16.mxu0 %v621
  %1149 = vmatpush1.bf16.msra.mxu0 %v620
  %1150 = vmatprep.subr.bf16.mxu0 %v617
  %1151 = vmatpush1.bf16.msra.mxu0 %v616
  %1152 = vmatprep.subr.bf16.mxu0 %v613
  %1153 = vmatpush1.bf16.msra.mxu0 %v612
  %1154 = vmatprep.subr.bf16.mxu0 %v609
  %1155 = vmatpush1.bf16.msra.mxu0 %v608
  %1156 = vmatprep.subr.bf16.mxu0 %v605
  %1157 = vmatpush1.bf16.msra.mxu0 %v604
  %1158 = vmatprep.subr.bf16.mxu0 %v601
  %1159 = vmatpush1.bf16.msra.mxu0 %v600
  %1160 = vmatprep.subr.bf16.mxu0 %v597
  %1161 = vmatpush1.bf16.msra.mxu0 %v596
  %1162 = vmatprep.subr.bf16.mxu0 0
  %1163 = vmatpush2.bf16.msra.mxu0 0
  %1164 = vmatprep.subr.bf16.mxu0 0
  %1165 = vmatpush2.bf16.msra.mxu0 0
  %1166 = vmatprep.subr.bf16.mxu0 0
  %1167 = vmatpush2.bf16.msra.mxu0 0
  %1168 = vmatprep.subr.bf16.mxu0 0
  %1169 = vmatpush2.bf16.msra.mxu0 0
  %1170 = vmatprep.subr.bf16.mxu0 0
  %1171 = vmatpush2.bf16.msra.mxu0 0
  %1172 = vmatprep.subr.bf16.mxu0 0
  %1173 = vmatpush2.bf16.msra.mxu0 0
  %1174 = vmatprep.subr.bf16.mxu0 0
  %1175 = vmatpush2.bf16.msra.mxu0 0
  %1176 = vmatprep.subr.bf16.mxu0 0
  %1177 = vmatpush2.bf16.msra.mxu0 0
  %1178 = vmatprep.mubr.bf16.mxu0 0
  %1179 = vmatmul.mubr.bf16.gmra.mxu0 %v1097
  %v1180 = vpop.f32.mrf.mxu0
  %v1181 = vadd.f32 0.0, %v1180
  %v1182 = vpop.f32.mrf.mxu0
  %v1183 = vadd.f32 0.0, %v1182
  %v1184 = vpop.f32.mrf.mxu0
  %v1185 = vpop.f32.mrf.mxu0
  %1186 = vdwg.mxu0
  %v1187 = vadd.f32 %v1101, %v1140
  %v1188 = vadd.f32 %v1102, %v1142
  %v1189 = vadd.f32 %v1103, %v1181
  %v1190 = vadd.f32 %v1104, %v1183
  %v1191 = vmul.f32 %v1187, 0.5
  %v1192 = vtanh.pop %v1191
  %v1193 = vmul.f32 %v1192, 0.5
  %v1194 = vadd.f32 %v1193, 0.5
  %v1195 = vmul.f32 %v1188, 0.5
  %v1196 = vtanh.pop %v1195
  %v1197 = vmul.f32 %v1196, 0.5
  %v1198 = vadd.f32 %v1197, 0.5
  %v1199 = vtanh.pop %v1189
  %v1200 = vmul.f32 %v1190, 0.5
  %v1201 = vtanh.pop %v1200
  %v1202 = vmul.f32 %v1201, 0.5
  %v1203 = vadd.f32 %v1202, 0.5
  %v1204 = vmul.f32 %v1198, %v1094
  %v1205 = vmul.f32 %v1194, %v1199
  %v1206 = vadd.f32 %v1204, %v1205
  %v1207 = vtanh.pop %v1206
  %v1208 = vmul.f32 %v1203, %v1207
  %v1209 = vpack.c.bf16 %v1208, %v1208
  %s1210 = scalar_lea.vmem %s6, 16
  %1211 = vst [vmem:[%s1210] sm:$0xf] %v1209
  %s1212 = scalar_lea.vmem [#allocation2], 160
  %v1213 = vld [vmem:[%s1212] sm:$0xff]
  %v1214 = vld [vmem:[%s1212 + $0x8] sm:$0xff]
  %v1215 = vld [vmem:[%s1212 + $0x10] sm:$0xff]
  %v1216 = vld [vmem:[%s1212 + $0x18] sm:$0xff]
  %1217 = vmatprep.subr.bf16.mxu0 %v623
  %1218 = vmatpush1.bf16.msra.mxu0 %v622
  %1219 = vmatprep.subr.bf16.mxu0 %v619
  %1220 = vmatpush1.bf16.msra.mxu0 %v618
  %1221 = vmatprep.subr.bf16.mxu0 %v615
  %1222 = vmatpush1.bf16.msra.mxu0 %v614
  %1223 = vmatprep.subr.bf16.mxu0 %v611
  %1224 = vmatpush1.bf16.msra.mxu0 %v610
  %1225 = vmatprep.subr.bf16.mxu0 %v607
  %1226 = vmatpush1.bf16.msra.mxu0 %v606
  %1227 = vmatprep.subr.bf16.mxu0 %v603
  %1228 = vmatpush1.bf16.msra.mxu0 %v602
  %1229 = vmatprep.subr.bf16.mxu0 %v599
  %1230 = vmatpush1.bf16.msra.mxu0 %v598
  %1231 = vmatprep.subr.bf16.mxu0 %v595
  %1232 = vmatpush1.bf16.msra.mxu0 %v594
  %1233 = vmatprep.subr.bf16.mxu0 0
  %1234 = vmatpush2.bf16.msra.mxu0 0
  %1235 = vmatprep.subr.bf16.mxu0 0
  %1236 = vmatpush2.bf16.msra.mxu0 0
  %1237 = vmatprep.subr.bf16.mxu0 0
  %1238 = vmatpush2.bf16.msra.mxu0 0
  %1239 = vmatprep.subr.bf16.mxu0 0
  %1240 = vmatpush2.bf16.msra.mxu0 0
  %1241 = vmatprep.subr.bf16.mxu0 0
  %1242 = vmatpush2.bf16.msra.mxu0 0
  %1243 = vmatprep.subr.bf16.mxu0 0
  %1244 = vmatpush2.bf16.msra.mxu0 0
  %1245 = vmatprep.subr.bf16.mxu0 0
  %1246 = vmatpush2.bf16.msra.mxu0 0
  %1247 = vmatprep.subr.bf16.mxu0 0
  %1248 = vmatpush2.bf16.msra.mxu0 0
  %1249 = vmatprep.mubr.bf16.mxu0 0
  %1250 = vmatmul.mubr.bf16.gmra.mxu0 %v1209
  %v1251 = vpop.f32.mrf.mxu0
  %v1252 = vadd.f32 0.0, %v1251
  %v1253 = vpop.f32.mrf.mxu0
  %v1254 = vadd.f32 0.0, %v1253
  %v1255 = vpop.f32.mrf.mxu0
  %v1256 = vpop.f32.mrf.mxu0
  %1257 = vdwg.mxu0
  %1258 = vmatprep.subr.bf16.mxu0 %v625
  %1259 = vmatpush1.bf16.msra.mxu0 %v624
  %1260 = vmatprep.subr.bf16.mxu0 %v621
  %1261 = vmatpush1.bf16.msra.mxu0 %v620
  %1262 = vmatprep.subr.bf16.mxu0 %v617
  %1263 = vmatpush1.bf16.msra.mxu0 %v616
  %1264 = vmatprep.subr.bf16.mxu0 %v613
  %1265 = vmatpush1.bf16.msra.mxu0 %v612
  %1266 = vmatprep.subr.bf16.mxu0 %v609
  %1267 = vmatpush1.bf16.msra.mxu0 %v608
  %1268 = vmatprep.subr.bf16.mxu0 %v605
  %1269 = vmatpush1.bf16.msra.mxu0 %v604
  %1270 = vmatprep.subr.bf16.mxu0 %v601
  %1271 = vmatpush1.bf16.msra.mxu0 %v600
  %1272 = vmatprep.subr.bf16.mxu0 %v597
  %1273 = vmatpush1.bf16.msra.mxu0 %v596
  %1274 = vmatprep.subr.bf16.mxu0 0
  %1275 = vmatpush2.bf16.msra.mxu0 0
  %1276 = vmatprep.subr.bf16.mxu0 0
  %1277 = vmatpush2.bf16.msra.mxu0 0
  %1278 = vmatprep.subr.bf16.mxu0 0
  %1279 = vmatpush2.bf16.msra.mxu0 0
  %1280 = vmatprep.subr.bf16.mxu0 0
  %1281 = vmatpush2.bf16.msra.mxu0 0
  %1282 = vmatprep.subr.bf16.mxu0 0
  %1283 = vmatpush2.bf16.msra.mxu0 0
  %1284 = vmatprep.subr.bf16.mxu0 0
  %1285 = vmatpush2.bf16.msra.mxu0 0
  %1286 = vmatprep.subr.bf16.mxu0 0
  %1287 = vmatpush2.bf16.msra.mxu0 0
  %1288 = vmatprep.subr.bf16.mxu0 0
  %1289 = vmatpush2.bf16.msra.mxu0 0
  %1290 = vmatprep.mubr.bf16.mxu0 0
  %1291 = vmatmul.mubr.bf16.gmra.mxu0 %v1209
  %v1292 = vpop.f32.mrf.mxu0
  %v1293 = vadd.f32 0.0, %v1292
  %v1294 = vpop.f32.mrf.mxu0
  %v1295 = vadd.f32 0.0, %v1294
  %v1296 = vpop.f32.mrf.mxu0
  %v1297 = vpop.f32.mrf.mxu0
  %1298 = vdwg.mxu0
  %v1299 = vadd.f32 %v1213, %v1252
  %v1300 = vadd.f32 %v1214, %v1254
  %v1301 = vadd.f32 %v1215, %v1293
  %v1302 = vadd.f32 %v1216, %v1295
  %v1303 = vmul.f32 %v1299, 0.5
  %v1304 = vtanh.pop %v1303
  %v1305 = vmul.f32 %v1304, 0.5
  %v1306 = vadd.f32 %v1305, 0.5
  %v1307 = vmul.f32 %v1300, 0.5
  %v1308 = vtanh.pop %v1307
  %v1309 = vmul.f32 %v1308, 0.5
  %v1310 = vadd.f32 %v1309, 0.5
  %v1311 = vtanh.pop %v1301
  %v1312 = vmul.f32 %v1302, 0.5
  %v1313 = vtanh.pop %v1312
  %v1314 = vmul.f32 %v1313, 0.5
  %v1315 = vadd.f32 %v1314, 0.5
  %v1316 = vmul.f32 %v1310, %v1206
  %v1317 = vmul.f32 %v1306, %v1311
  %v1318 = vadd.f32 %v1316, %v1317
  %v1319 = vtanh.pop %v1318
  %v1320 = vmul.f32 %v1315, %v1319
  %v1321 = vpack.c.bf16 %v1320, %v1320
  %s1322 = scalar_lea.vmem %s6, 20
  %1323 = vst [vmem:[%s1322] sm:$0xf] %v1321
  %s1324 = scalar_lea.vmem [#allocation2], 192
  %v1325 = vld [vmem:[%s1324] sm:$0xff]
  %v1326 = vld [vmem:[%s1324 + $0x8] sm:$0xff]
  %v1327 = vld [vmem:[%s1324 + $0x10] sm:$0xff]
  %v1328 = vld [vmem:[%s1324 + $0x18] sm:$0xff]
  %1329 = vmatprep.subr.bf16.mxu0 %v623
  %1330 = vmatpush1.bf16.msra.mxu0 %v622
  %1331 = vmatprep.subr.bf16.mxu0 %v619
  %1332 = vmatpush1.bf16.msra.mxu0 %v618
  %1333 = vmatprep.subr.bf16.mxu0 %v615
  %1334 = vmatpush1.bf16.msra.mxu0 %v614
  %1335 = vmatprep.subr.bf16.mxu0 %v611
  %1336 = vmatpush1.bf16.msra.mxu0 %v610
  %1337 = vmatprep.subr.bf16.mxu0 %v607
  %1338 = vmatpush1.bf16.msra.mxu0 %v606
  %1339 = vmatprep.subr.bf16.mxu0 %v603
  %1340 = vmatpush1.bf16.msra.mxu0 %v602
  %1341 = vmatprep.subr.bf16.mxu0 %v599
  %1342 = vmatpush1.bf16.msra.mxu0 %v598
  %1343 = vmatprep.subr.bf16.mxu0 %v595
  %1344 = vmatpush1.bf16.msra.mxu0 %v594
  %1345 = vmatprep.subr.bf16.mxu0 0
  %1346 = vmatpush2.bf16.msra.mxu0 0
  %1347 = vmatprep.subr.bf16.mxu0 0
  %1348 = vmatpush2.bf16.msra.mxu0 0
  %1349 = vmatprep.subr.bf16.mxu0 0
  %1350 = vmatpush2.bf16.msra.mxu0 0
  %1351 = vmatprep.subr.bf16.mxu0 0
  %1352 = vmatpush2.bf16.msra.mxu0 0
  %1353 = vmatprep.subr.bf16.mxu0 0
  %1354 = vmatpush2.bf16.msra.mxu0 0
  %1355 = vmatprep.subr.bf16.mxu0 0
  %1356 = vmatpush2.bf16.msra.mxu0 0
  %1357 = vmatprep.subr.bf16.mxu0 0
  %1358 = vmatpush2.bf16.msra.mxu0 0
  %1359 = vmatprep.subr.bf16.mxu0 0
  %1360 = vmatpush2.bf16.msra.mxu0 0
  %1361 = vmatprep.mubr.bf16.mxu0 0
  %1362 = vmatmul.mubr.bf16.gmra.mxu0 %v1321
  %v1363 = vpop.f32.mrf.mxu0
  %v1364 = vadd.f32 0.0, %v1363
  %v1365 = vpop.f32.mrf.mxu0
  %v1366 = vadd.f32 0.0, %v1365
  %v1367 = vpop.f32.mrf.mxu0
  %v1368 = vpop.f32.mrf.mxu0
  %1369 = vdwg.mxu0
  %1370 = vmatprep.subr.bf16.mxu0 %v625
  %1371 = vmatpush1.bf16.msra.mxu0 %v624
  %1372 = vmatprep.subr.bf16.mxu0 %v621
  %1373 = vmatpush1.bf16.msra.mxu0 %v620
  %1374 = vmatprep.subr.bf16.mxu0 %v617
  %1375 = vmatpush1.bf16.msra.mxu0 %v616
  %1376 = vmatprep.subr.bf16.mxu0 %v613
  %1377 = vmatpush1.bf16.msra.mxu0 %v612
  %1378 = vmatprep.subr.bf16.mxu0 %v609
  %1379 = vmatpush1.bf16.msra.mxu0 %v608
  %1380 = vmatprep.subr.bf16.mxu0 %v605
  %1381 = vmatpush1.bf16.msra.mxu0 %v604
  %1382 = vmatprep.subr.bf16.mxu0 %v601
  %1383 = vmatpush1.bf16.msra.mxu0 %v600
  %1384 = vmatprep.subr.bf16.mxu0 %v597
  %1385 = vmatpush1.bf16.msra.mxu0 %v596
  %1386 = vmatprep.subr.bf16.mxu0 0
  %1387 = vmatpush2.bf16.msra.mxu0 0
  %1388 = vmatprep.subr.bf16.mxu0 0
  %1389 = vmatpush2.bf16.msra.mxu0 0
  %1390 = vmatprep.subr.bf16.mxu0 0
  %1391 = vmatpush2.bf16.msra.mxu0 0
  %1392 = vmatprep.subr.bf16.mxu0 0
  %1393 = vmatpush2.bf16.msra.mxu0 0
  %1394 = vmatprep.subr.bf16.mxu0 0
  %1395 = vmatpush2.bf16.msra.mxu0 0
  %1396 = vmatprep.subr.bf16.mxu0 0
  %1397 = vmatpush2.bf16.msra.mxu0 0
  %1398 = vmatprep.subr.bf16.mxu0 0
  %1399 = vmatpush2.bf16.msra.mxu0 0
  %1400 = vmatprep.subr.bf16.mxu0 0
  %1401 = vmatpush2.bf16.msra.mxu0 0
  %1402 = vmatprep.mubr.bf16.mxu0 0
  %1403 = vmatmul.mubr.bf16.gmra.mxu0 %v1321
  %v1404 = vpop.f32.mrf.mxu0
  %v1405 = vadd.f32 0.0, %v1404
  %v1406 = vpop.f32.mrf.mxu0
  %v1407 = vadd.f32 0.0, %v1406
  %v1408 = vpop.f32.mrf.mxu0
  %v1409 = vpop.f32.mrf.mxu0
  %1410 = vdwg.mxu0
  %v1411 = vadd.f32 %v1325, %v1364
  %v1412 = vadd.f32 %v1326, %v1366
  %v1413 = vadd.f32 %v1327, %v1405
  %v1414 = vadd.f32 %v1328, %v1407
  %v1415 = vmul.f32 %v1411, 0.5
  %v1416 = vtanh.pop %v1415
  %v1417 = vmul.f32 %v1416, 0.5
  %v1418 = vadd.f32 %v1417, 0.5
  %v1419 = vmul.f32 %v1412, 0.5
  %v1420 = vtanh.pop %v1419
  %v1421 = vmul.f32 %v1420, 0.5
  %v1422 = vadd.f32 %v1421, 0.5
  %v1423 = vtanh.pop %v1413
  %v1424 = vmul.f32 %v1414, 0.5
  %v1425 = vtanh.pop %v1424
  %v1426 = vmul.f32 %v1425, 0.5
  %v1427 = vadd.f32 %v1426, 0.5
  %v1428 = vmul.f32 %v1422, %v1318
  %v1429 = vmul.f32 %v1418, %v1423
  %v1430 = vadd.f32 %v1428, %v1429
  %v1431 = vtanh.pop %v1430
  %v1432 = vmul.f32 %v1427, %v1431
  %v1433 = vpack.c.bf16 %v1432, %v1432
  %s1434 = scalar_lea.vmem %s6, 24
  %1435 = vst [vmem:[%s1434] sm:$0xf] %v1433
  %s1436 = scalar_lea.vmem [#allocation2], 224
  %v1437 = vld [vmem:[%s1436] sm:$0xff]
  %v1438 = vld [vmem:[%s1436 + $0x8] sm:$0xff]
  %v1439 = vld [vmem:[%s1436 + $0x10] sm:$0xff]
  %v1440 = vld [vmem:[%s1436 + $0x18] sm:$0xff]
  %1441 = vmatprep.subr.bf16.mxu0 %v623
  %1442 = vmatpush1.bf16.msra.mxu0 %v622
  %1443 = vmatprep.subr.bf16.mxu0 %v619
  %1444 = vmatpush1.bf16.msra.mxu0 %v618
  %1445 = vmatprep.subr.bf16.mxu0 %v615
  %1446 = vmatpush1.bf16.msra.mxu0 %v614
  %1447 = vmatprep.subr.bf16.mxu0 %v611
  %1448 = vmatpush1.bf16.msra.mxu0 %v610
  %1449 = vmatprep.subr.bf16.mxu0 %v607
  %1450 = vmatpush1.bf16.msra.mxu0 %v606
  %1451 = vmatprep.subr.bf16.mxu0 %v603
  %1452 = vmatpush1.bf16.msra.mxu0 %v602
  %1453 = vmatprep.subr.bf16.mxu0 %v599
  %1454 = vmatpush1.bf16.msra.mxu0 %v598
  %1455 = vmatprep.subr.bf16.mxu0 %v595
  %1456 = vmatpush1.bf16.msra.mxu0 %v594
  %1457 = vmatprep.subr.bf16.mxu0 0
  %1458 = vmatpush2.bf16.msra.mxu0 0
  %1459 = vmatprep.subr.bf16.mxu0 0
  %1460 = vmatpush2.bf16.msra.mxu0 0
  %1461 = vmatprep.subr.bf16.mxu0 0
  %1462 = vmatpush2.bf16.msra.mxu0 0
  %1463 = vmatprep.subr.bf16.mxu0 0
  %1464 = vmatpush2.bf16.msra.mxu0 0
  %1465 = vmatprep.subr.bf16.mxu0 0
  %1466 = vmatpush2.bf16.msra.mxu0 0
  %1467 = vmatprep.subr.bf16.mxu0 0
  %1468 = vmatpush2.bf16.msra.mxu0 0
  %1469 = vmatprep.subr.bf16.mxu0 0
  %1470 = vmatpush2.bf16.msra.mxu0 0
  %1471 = vmatprep.subr.bf16.mxu0 0
  %1472 = vmatpush2.bf16.msra.mxu0 0
  %1473 = vmatprep.mubr.bf16.mxu0 0
  %1474 = vmatmul.mubr.bf16.gmra.mxu0 %v1433
  %v1475 = vpop.f32.mrf.mxu0
  %v1476 = vadd.f32 0.0, %v1475
  %v1477 = vpop.f32.mrf.mxu0
  %v1478 = vadd.f32 0.0, %v1477
  %v1479 = vpop.f32.mrf.mxu0
  %v1480 = vpop.f32.mrf.mxu0
  %1481 = vdwg.mxu0
  %1482 = vmatprep.subr.bf16.mxu0 %v625
  %1483 = vmatpush1.bf16.msra.mxu0 %v624
  %1484 = vmatprep.subr.bf16.mxu0 %v621
  %1485 = vmatpush1.bf16.msra.mxu0 %v620
  %1486 = vmatprep.subr.bf16.mxu0 %v617
  %1487 = vmatpush1.bf16.msra.mxu0 %v616
  %1488 = vmatprep.subr.bf16.mxu0 %v613
  %1489 = vmatpush1.bf16.msra.mxu0 %v612
  %1490 = vmatprep.subr.bf16.mxu0 %v609
  %1491 = vmatpush1.bf16.msra.mxu0 %v608
  %1492 = vmatprep.subr.bf16.mxu0 %v605
  %1493 = vmatpush1.bf16.msra.mxu0 %v604
  %1494 = vmatprep.subr.bf16.mxu0 %v601
  %1495 = vmatpush1.bf16.msra.mxu0 %v600
  %1496 = vmatprep.subr.bf16.mxu0 %v597
  %1497 = vmatpush1.bf16.msra.mxu0 %v596
  %1498 = vmatprep.subr.bf16.mxu0 0
  %1499 = vmatpush2.bf16.msra.mxu0 0
  %1500 = vmatprep.subr.bf16.mxu0 0
  %1501 = vmatpush2.bf16.msra.mxu0 0
  %1502 = vmatprep.subr.bf16.mxu0 0
  %1503 = vmatpush2.bf16.msra.mxu0 0
  %1504 = vmatprep.subr.bf16.mxu0 0
  %1505 = vmatpush2.bf16.msra.mxu0 0
  %1506 = vmatprep.subr.bf16.mxu0 0
  %1507 = vmatpush2.bf16.msra.mxu0 0
  %1508 = vmatprep.subr.bf16.mxu0 0
  %1509 = vmatpush2.bf16.msra.mxu0 0
  %1510 = vmatprep.subr.bf16.mxu0 0
  %1511 = vmatpush2.bf16.msra.mxu0 0
  %1512 = vmatprep.subr.bf16.mxu0 0
  %1513 = vmatpush2.bf16.msra.mxu0 0
  %1514 = vmatprep.mubr.bf16.mxu0 0
  %1515 = vmatmul.mubr.bf16.gmra.mxu0 %v1433
  %v1516 = vpop.f32.mrf.mxu0
  %v1517 = vadd.f32 0.0, %v1516
  %v1518 = vpop.f32.mrf.mxu0
  %v1519 = vadd.f32 0.0, %v1518
  %v1520 = vpop.f32.mrf.mxu0
  %v1521 = vpop.f32.mrf.mxu0
  %1522 = vdwg.mxu0
  %v1523 = vadd.f32 %v1437, %v1476
  %v1524 = vadd.f32 %v1438, %v1478
  %v1525 = vadd.f32 %v1439, %v1517
  %v1526 = vadd.f32 %v1440, %v1519
  %v1527 = vmul.f32 %v1523, 0.5
  %v1528 = vtanh.pop %v1527
  %v1529 = vmul.f32 %v1528, 0.5
  %v1530 = vadd.f32 %v1529, 0.5
  %v1531 = vmul.f32 %v1524, 0.5
  %v1532 = vtanh.pop %v1531
  %v1533 = vmul.f32 %v1532, 0.5
  %v1534 = vadd.f32 %v1533, 0.5
  %v1535 = vtanh.pop %v1525
  %v1536 = vmul.f32 %v1526, 0.5
  %v1537 = vtanh.pop %v1536
  %v1538 = vmul.f32 %v1537, 0.5
  %v1539 = vadd.f32 %v1538, 0.5
  %v1540 = vmul.f32 %v1534, %v1430
  %v1541 = vmul.f32 %v1530, %v1535
  %v1542 = vadd.f32 %v1540, %v1541
  %v1543 = vtanh.pop %v1542
  %v1544 = vmul.f32 %v1539, %v1543
  %v1545 = vpack.c.bf16 %v1544, %v1544
  %s1546 = scalar_lea.vmem %s6, 28
  %1547 = vst [vmem:[%s1546] sm:$0xf] %v1545
  %1548 = vst [vmem:[#allocation3] sm:$0xf] %v1545
  %1549 = vst [vmem:[#allocation4] sm:$0xff] %v1542
  // Predicated region
  $region30: #{music_rnn_forward.4} parent=0 // pred_check
    %p1550 = pneg %p27
  $region31: #{music_rnn_forward.4} parent=0 // pred_check_branch
    %1552 = sbr.rel (%p1550) target = $region33
  $region32: #{music_rnn_forward.4} parent=0 // pred_region
    %v1553 = vunpack.c.l.bf16 %v1545
    %1554 = vst [vmem:[%s7] sm:$0xff] %v1553
    %1555 = vst [vmem:[%s8] sm:$0xff] %v1542
  $region33: #{music_rnn_forward.4} parent=0 // pred_fallthru
    _
  // Predicated region
  $region34: #{music_rnn_forward.4} parent=0 // pred_check
    _
  $region35: #{music_rnn_forward.4} parent=0 // pred_check_branch
    %1557 = sbr.rel (0) target = $region37
  $region36: #{music_rnn_forward.4} parent=0 // pred_region
    _
  $region37: #{music_rnn_forward.4} parent=0 // pred_fallthru
    _
  // Predicated region
  $region38: #{music_rnn_forward.4} parent=0 // pred_check
    _
  $region39: #{music_rnn_forward.4} parent=0 // pred_check_branch
    %1559 = sbr.rel (0) target = $region41
  $region40: #{music_rnn_forward.4} parent=0 // pred_region
    _
  $region41: #{music_rnn_forward.4} parent=0 // pred_fallthru
    _
  // Predicated region
  $region42: #{music_rnn_forward.4} parent=0 // pred_check
    _
  $region43: #{music_rnn_forward.4} parent=0 // pred_check_branch
    %1561 = sbr.rel (0) target = $region45
  $region44: #{music_rnn_forward.4} parent=0 // pred_region
    _
  $region45: #{music_rnn_forward.4} parent=0 // pred_fallthru
    _
  // Predicated region
  $region46: #{music_rnn_forward.4} parent=0 // pred_check
    _
  $region47: #{music_rnn_forward.4} parent=0 // pred_check_branch
    %1563 = sbr.rel (0) target = $region49
  $region48: #{music_rnn_forward.4} parent=0 // pred_region
    _
  $region49: #{music_rnn_forward.4} parent=0 // pred_fallthru
    _
  // Predicated region
  $region50: #{music_rnn_forward.4} parent=0 // pred_check
    _
  $region51: #{music_rnn_forward.4} parent=0 // pred_check_branch
    %1565 = sbr.rel (0) target = $region53
  $region52: #{music_rnn_forward.4} parent=0 // pred_region
    _
  $region53: #{music_rnn_forward.4} parent=0 // pred_fallthru
    _
  // Predicated region
  $region54: #{music_rnn_forward.4} parent=0 // pred_check
    _
  $region55: #{music_rnn_forward.4} parent=0 // pred_check_branch
    %1567 = sbr.rel (0) target = $region57
  $region56: #{music_rnn_forward.4} parent=0 // pred_region
    _
  $region57: #{music_rnn_forward.4} parent=0 // pred_fallthru
    _

</llo_original>
